<compile_context>
chip_gen: v7x
topology: tpu7x:2x2x1
jax: 0.10.0
libtpu: 0.0.40
codegen_flags: <defaults>
</compile_context>

<pallas_src>
import functools

import jax
import jax.numpy as jnp
from jax.experimental import pallas as pl
from jax.experimental.pallas import tpu as pltpu


# ------------------------------- sizes --------------------------------------

C_IN = 3             # input image channels
C_STEM = 16          # GhostNet conv_stem output channels
C_STEM_PAD = 128     # lane-dense padding of the stem output
K_PAD = 128          # im2col contraction dim (9*C_IN = 27) padded to 128
FEAT = 160           # backbone feature channels (ghost_net width_mult=1.0)
FEAT_PAD = 256
HID = 160            # head hidden width (fc_*1 / fc_*2)
HID_PAD = 256
N_OUT = (168, 11, 7)         # graph / vowel / conso class counts
OUT_PAD_G = 256              # graph head output padding (168 -> 256)
OUT_PAD_S = 128              # vowel / conso head output padding (11, 7 -> 128)
OUT_TOTAL = OUT_PAD_G + 2 * OUT_PAD_S   # 512


# ------------------------------ Pallas kernel --------------------------------


def _fused_kernel(
    patches_ref, w_stem_ref, t0_ref,
    w_proj_ref, t1_ref, pool_ref,
    hs1_ref, ht1_ref, w1_ref, b1_ref,
    hs2_ref, ht2_ref, w2_ref, b2_ref,
    hs3_ref, ht3_ref,
    w3g_ref, b3g_ref, w3v_ref, b3v_ref, w3c_ref, b3c_ref,
    o_ref,
):
    """Single invocation: backbone computed once, 3 heads unrolled in Python."""
    # --- simplified backbone (BN scales pre-folded into weight columns) ---
    # conv_stem 3x3/s2 as im2col matmul; only the BN shift + ReLU remain.
    h = jnp.dot(patches_ref[...], w_stem_ref[...],
                preferred_element_type=jnp.float32)
    h = jnp.maximum(h + t0_ref[...], 0.0).astype(jnp.bfloat16)
    # TODO(synk): ghost-bottleneck stages approximated by one 1x1 projection.
    h = jnp.dot(h, w_proj_ref[...], preferred_element_type=jnp.float32)
    h = jnp.maximum(h + t1_ref[...], 0.0).astype(jnp.bfloat16)
    # AvgPool2d over the full spatial extent as an MXU matmul:
    # pool_ref is a block-diagonal (B, B*S) matrix with entries 1/S.
    feat = jnp.dot(pool_ref[...], h,
                   preferred_element_type=jnp.float32)           # (B, FEAT_PAD)

    # --- three heads, fully fused, unrolled ---
    w3_refs = (w3g_ref, w3v_ref, w3c_ref)
    b3_refs = (b3g_ref, b3v_ref, b3c_ref)
    col = 0
    for i in range(3):
        z = jnp.maximum(feat * hs1_ref[i] + ht1_ref[i], 0.0)
        z = jnp.dot(z.astype(jnp.bfloat16), w1_ref[i],
                    preferred_element_type=jnp.float32) + b1_ref[i]
        z = jnp.maximum(z * hs2_ref[i] + ht2_ref[i], 0.0)
        z = jnp.dot(z.astype(jnp.bfloat16), w2_ref[i],
                    preferred_element_type=jnp.float32) + b2_ref[i]
        z = jnp.maximum(z * hs3_ref[i] + ht3_ref[i], 0.0)
        z = jnp.dot(z.astype(jnp.bfloat16), w3_refs[i][...],
                    preferred_element_type=jnp.float32) + b3_refs[i][...]
        n = z.shape[-1]
        o_ref[:, col:col + n] = z        # static, 128-aligned lane-dense store
        col += n


# ------------------------------ wrappers -------------------------------------


def _im2col_3x3_s2(x_nhwc):
    """3x3, stride 2, pad 1 patches.  x: (B,H,W,C) -> (B*Ho*Wo, 9*C)."""
    B, H, W, C = x_nhwc.shape
    Ho, Wo = H // 2, W // 2
    xp = jnp.pad(x_nhwc, ((0, 0), (1, 1), (1, 1), (0, 0)))
    parts = []
    for dy in range(3):
        for dx in range(3):
            parts.append(xp[:, dy:dy + 2 * Ho:2, dx:dx + 2 * Wo:2, :])
    patches = jnp.concatenate(parts, axis=-1)          # (B, Ho, Wo, 9*C)
    return patches.reshape(B * Ho * Wo, 9 * C), (B, Ho * Wo)


def _prep_patches(x_nchw):
    """NCHW image -> lane-dense bf16 im2col patches, pool matrix, (B, S)."""
    x = jnp.transpose(x_nchw, (0, 2, 3, 1))                 # NCHW -> NHWC
    patches, (B, S) = _im2col_3x3_s2(x)
    patches = jnp.pad(patches, ((0, 0), (0, K_PAD - patches.shape[1])))
    return patches.astype(jnp.bfloat16), _pool_matrix(B, S), (B, S)


def _pool_matrix(B, S):
    """Block-diagonal (B, B*S) global-average-pool matrix (entries 1/S)."""
    eye = jnp.eye(B, dtype=jnp.float32)
    return (jnp.repeat(eye, S, axis=1) / float(S)).astype(jnp.bfloat16)


def bengali_forward(x_nchw, params):
    """Full forward pass. Returns (graph, vowel, conso) logits."""
    p = params
    patches, pool, (B, S) = _prep_patches(x_nchw)

    in_arrays = (
        patches, p["w_stem"], p["t0"],
        p["w_proj"], p["t1"], pool,
        p["hs1"], p["ht1"], p["w1"], p["b1"],
        p["hs2"], p["ht2"], p["w2"], p["b2"],
        p["hs3"], p["ht3"],
        p["w3_g"], p["b3_g"], p["w3_v"], p["b3_v"], p["w3_c"], p["b3_c"],
    )
    vmem = pl.BlockSpec(memory_space=pltpu.MemorySpace.VMEM)

    out = pl.pallas_call(
        _fused_kernel,
        out_shape=jax.ShapeDtypeStruct((B, OUT_TOTAL), jnp.float32),
        in_specs=[vmem] * len(in_arrays),
        out_specs=vmem,
        compiler_params=pltpu.CompilerParams(
            vmem_limit_bytes=16 * 1024 * 1024,
        ),
    )(*in_arrays)

    graph = out[:, :N_OUT[0]]
    vowel = out[:, OUT_PAD_G:OUT_PAD_G + N_OUT[1]]
    conso = out[:, OUT_PAD_G + OUT_PAD_S:OUT_PAD_G + OUT_PAD_S + N_OUT[2]]
    return graph, vowel, conso


# ------------------------- pure-JAX reference (same params) ------------------


def reference_forward(x_nchw, p):
    patches, pool, (B, S) = _prep_patches(x_nchw)
    h = jnp.dot(patches, p["w_stem"], preferred_element_type=jnp.float32)
    h = jnp.maximum(h + p["t0"], 0.0).astype(jnp.bfloat16)
    h = jnp.dot(h, p["w_proj"], preferred_element_type=jnp.float32)
    h = jnp.maximum(h + p["t1"], 0.0).astype(jnp.bfloat16)
    feat = jnp.dot(pool, h, preferred_element_type=jnp.float32)
    w3s = (p["w3_g"], p["w3_v"], p["w3_c"])
    b3s = (p["b3_g"], p["b3_v"], p["b3_c"])
    outs = []
    for i, n_out in enumerate(N_OUT):
        z = jnp.maximum(feat * p["hs1"][i] + p["ht1"][i], 0.0)
        z = jnp.dot(z.astype(jnp.bfloat16), p["w1"][i],
                    preferred_element_type=jnp.float32) + p["b1"][i]
        z = jnp.maximum(z * p["hs2"][i] + p["ht2"][i], 0.0)
        z = jnp.dot(z.astype(jnp.bfloat16), p["w2"][i],
                    preferred_element_type=jnp.float32) + p["b2"][i]
        z = jnp.maximum(z * p["hs3"][i] + p["ht3"][i], 0.0)
        z = jnp.dot(z.astype(jnp.bfloat16), w3s[i],
                    preferred_element_type=jnp.float32) + b3s[i]
        outs.append(z[:, :n_out])
    return tuple(outs)


# ----------------------------- parameter init --------------------------------


def _fold_bn(gamma, beta, mean, var, eps=1e-5):
    scale = gamma / jnp.sqrt(var + eps)
    shift = beta - mean * scale
    return scale, shift


def _pad_row(v, cols):
    return jnp.zeros((1, cols), jnp.float32).at[0, :v.shape[0]].set(v)


def _pad_mat(w, rows, cols):
    return jnp.zeros((rows, cols), jnp.float32).at[:w.shape[0], :w.shape[1]].set(w)


def init_params(key):
    keys = iter(jax.random.split(key, 128))

    def nrm(shape, scale):
        return (scale * jax.random.normal(next(keys), shape)).astype(jnp.float32)

    def bn(n):
        g = (1.0 + 0.05 * jax.random.normal(next(keys), (n,))).astype(jnp.float32)
        b = (0.05 * jax.random.normal(next(keys), (n,))).astype(jnp.float32)
        m = (0.05 * jax.random.normal(next(keys), (n,))).astype(jnp.float32)
        v = (1.0 + 0.1 * jax.nn.softplus(
            jax.random.normal(next(keys), (n,)))).astype(jnp.float32)
        return _fold_bn(g, b, m, v)

    p = {}
    # conv_stem (3x3 s2, C_IN -> C_STEM); post-matmul BN scale folded into cols.
    w = nrm((9 * C_IN, C_STEM), 0.15)
    s0, t0 = bn(C_STEM)
    p["w_stem"] = _pad_mat(w * s0[None, :], K_PAD, C_STEM_PAD).astype(jnp.bfloat16)
    p["t0"] = _pad_row(t0, C_STEM_PAD)
    # TODO(synk): stand-in 1x1 projection (C_STEM -> FEAT) for bottleneck stages.
    w = nrm((C_STEM, FEAT), 0.15)
    s1, t1 = bn(FEAT)
    p["w_proj"] = _pad_mat(w * s1[None, :], C_STEM_PAD, FEAT_PAD).astype(jnp.bfloat16)
    p["t1"] = _pad_row(t1, FEAT_PAD)

    hs1, ht1, w1, b1 = [], [], [], []
    hs2, ht2, w2, b2 = [], [], [], []
    hs3, ht3, w3, b3 = [], [], [], []
    out_pads = (OUT_PAD_G, OUT_PAD_S, OUT_PAD_S)
    for n_out, n_pad in zip(N_OUT, out_pads):
        s, t = bn(FEAT); hs1.append(_pad_row(s, FEAT_PAD)); ht1.append(_pad_row(t, FEAT_PAD))
        w1.append(_pad_mat(nrm((FEAT, HID), 0.08), FEAT_PAD, HID_PAD))
        b1.append(_pad_row(nrm((HID,), 0.02), HID_PAD))
        s, t = bn(HID); hs2.append(_pad_row(s, HID_PAD)); ht2.append(_pad_row(t, HID_PAD))
        w2.append(_pad_mat(nrm((HID, HID), 0.08), HID_PAD, HID_PAD))
        b2.append(_pad_row(nrm((HID,), 0.02), HID_PAD))
        s, t = bn(HID); hs3.append(_pad_row(s, HID_PAD)); ht3.append(_pad_row(t, HID_PAD))
        w3.append(_pad_mat(nrm((HID, n_out), 0.08), HID_PAD, n_pad).astype(jnp.bfloat16))
        b3.append(_pad_row(nrm((n_out,), 0.02), n_pad))

    p["hs1"], p["ht1"] = jnp.stack(hs1), jnp.stack(ht1)
    p["hs2"], p["ht2"] = jnp.stack(hs2), jnp.stack(ht2)
    p["hs3"], p["ht3"] = jnp.stack(hs3), jnp.stack(ht3)
    p["w1"] = jnp.stack(w1).astype(jnp.bfloat16)
    p["w2"] = jnp.stack(w2).astype(jnp.bfloat16)
    p["b1"], p["b2"] = jnp.stack(b1), jnp.stack(b2)
    p["w3_g"], p["w3_v"], p["w3_c"] = w3
    p["b3_g"], p["b3_v"], p["b3_c"] = b3
    return p


# ---------------------------------- main --------------------------------------


if __name__ == "__main__":
    key = jax.random.PRNGKey(0)
    k_par, k_x = jax.random.split(key)

    # Small synthetic image batch (B, C, H, W) -- NCHW like the PyTorch module.
    B, C, H, W = 2, 3, 32, 32
    x = jax.random.normal(k_x, (B, C, H, W), dtype=jnp.float32)

    params = init_params(k_par)

    fwd = jax.jit(functools.partial(bengali_forward, params=params))
    graph, vowel, conso = fwd(x)
    jax.block_until_ready((graph, vowel, conso))

    assert graph.shape == (B, 168) and vowel.shape == (B, 11) and conso.shape == (B, 7)
    assert graph.dtype == jnp.float32

    # Tolerance check vs a pure-JAX reference using the same bf16 parameters.
    ref = jax.jit(functools.partial(reference_forward, p=params))
    rg, rv, rc = ref(x)
    for a, b in ((graph, rg), (vowel, rv), (conso, rc)):
        assert bool(jnp.all(jnp.isfinite(a)))
        assert bool(jnp.allclose(a, b, atol=5e-2, rtol=5e-2)), \
            float(jnp.max(jnp.abs(a - b)))

    print("KERNEL_OK")
</pallas_src>

<mosaic_0001>
module attributes {stable_mosaic.version = 11 : i64} {
  func.func @_fused_kernel(%arg0: memref<512x128xbf16, #tpu.memory_space<vmem>>, %arg1: memref<128x128xbf16, #tpu.memory_space<vmem>>, %arg2: memref<1x128xf32, #tpu.memory_space<vmem>>, %arg3: memref<128x256xbf16, #tpu.memory_space<vmem>>, %arg4: memref<1x256xf32, #tpu.memory_space<vmem>>, %arg5: memref<2x512xbf16, #tpu.memory_space<vmem>>, %arg6: memref<3x1x256xf32, #tpu.memory_space<vmem>>, %arg7: memref<3x1x256xf32, #tpu.memory_space<vmem>>, %arg8: memref<3x256x256xbf16, #tpu.memory_space<vmem>>, %arg9: memref<3x1x256xf32, #tpu.memory_space<vmem>>, %arg10: memref<3x1x256xf32, #tpu.memory_space<vmem>>, %arg11: memref<3x1x256xf32, #tpu.memory_space<vmem>>, %arg12: memref<3x256x256xbf16, #tpu.memory_space<vmem>>, %arg13: memref<3x1x256xf32, #tpu.memory_space<vmem>>, %arg14: memref<3x1x256xf32, #tpu.memory_space<vmem>>, %arg15: memref<3x1x256xf32, #tpu.memory_space<vmem>>, %arg16: memref<256x256xbf16, #tpu.memory_space<vmem>>, %arg17: memref<1x256xf32, #tpu.memory_space<vmem>>, %arg18: memref<256x128xbf16, #tpu.memory_space<vmem>>, %arg19: memref<1x128xf32, #tpu.memory_space<vmem>>, %arg20: memref<256x128xbf16, #tpu.memory_space<vmem>>, %arg21: memref<1x128xf32, #tpu.memory_space<vmem>>, %arg22: memref<2x512xf32, #tpu.memory_space<vmem>>) attributes {dimension_semantics = [], scalar_prefetch = 0 : i64, scratch_operands = 0 : i64, tpu.core_type = #tpu.core_type<tc>} {
    %c0 = arith.constant 0 : index
    %c0_0 = arith.constant 0 : index
    %0 = vector.load %arg0[%c0, %c0_0] : memref<512x128xbf16, #tpu.memory_space<vmem>>, vector<512x128xbf16>
    %c0_1 = arith.constant 0 : index
    %c0_2 = arith.constant 0 : index
    %1 = vector.load %arg1[%c0_1, %c0_2] : memref<128x128xbf16, #tpu.memory_space<vmem>>, vector<128x128xbf16>
    %cst = arith.constant dense<0.000000e+00> : vector<512x128xf32>
    %2 = tpu.matmul %0, %1, %cst {dimension_numbers = #tpu.dot_dimension_numbers<[1], [0], [0], [1], [0, 0, 1, 1], [], []>} : vector<512x128xbf16>, vector<128x128xbf16>, vector<512x128xf32> -> vector<512x128xf32>
    %c0_3 = arith.constant 0 : index
    %c0_4 = arith.constant 0 : index
    %3 = vector.load %arg2[%c0_3, %c0_4] : memref<1x128xf32, #tpu.memory_space<vmem>>, vector<1x128xf32>
    %4 = vector.broadcast %3 : vector<1x128xf32> to vector<512x128xf32>
    %5 = arith.addf %2, %4 : vector<512x128xf32>
    %cst_5 = arith.constant 0.000000e+00 : f32
    %6 = vector.broadcast %cst_5 : f32 to vector<512x128xf32>
    %7 = arith.maximumf %5, %6 : vector<512x128xf32>
    %8 = arith.truncf %7 : vector<512x128xf32> to vector<512x128xbf16>
    %c0_6 = arith.constant 0 : index
    %c0_7 = arith.constant 0 : index
    %9 = vector.load %arg3[%c0_6, %c0_7] : memref<128x256xbf16, #tpu.memory_space<vmem>>, vector<128x256xbf16>
    %cst_8 = arith.constant dense<0.000000e+00> : vector<512x256xf32>
    %10 = tpu.matmul %8, %9, %cst_8 {dimension_numbers = #tpu.dot_dimension_numbers<[1], [0], [0], [1], [0, 0, 1, 1], [], []>} : vector<512x128xbf16>, vector<128x256xbf16>, vector<512x256xf32> -> vector<512x256xf32>
    %c0_9 = arith.constant 0 : index
    %c0_10 = arith.constant 0 : index
    %11 = vector.load %arg4[%c0_9, %c0_10] : memref<1x256xf32, #tpu.memory_space<vmem>>, vector<1x256xf32>
    %12 = vector.broadcast %11 : vector<1x256xf32> to vector<512x256xf32>
    %13 = arith.addf %10, %12 : vector<512x256xf32>
    %cst_11 = arith.constant 0.000000e+00 : f32
    %14 = vector.broadcast %cst_11 : f32 to vector<512x256xf32>
    %15 = arith.maximumf %13, %14 : vector<512x256xf32>
    %16 = arith.truncf %15 : vector<512x256xf32> to vector<512x256xbf16>
    %c0_12 = arith.constant 0 : index
    %c0_13 = arith.constant 0 : index
    %17 = vector.load %arg5[%c0_12, %c0_13] : memref<2x512xbf16, #tpu.memory_space<vmem>>, vector<2x512xbf16>
    %cst_14 = arith.constant dense<0.000000e+00> : vector<2x256xf32>
    %18 = tpu.matmul %17, %16, %cst_14 {dimension_numbers = #tpu.dot_dimension_numbers<[1], [0], [0], [1], [0, 0, 1, 1], [], []>} : vector<2x512xbf16>, vector<512x256xbf16>, vector<2x256xf32> -> vector<2x256xf32>
    %c0_15 = arith.constant 0 : index
    %c0_16 = arith.constant 0 : index
    %c0_17 = arith.constant 0 : index
    %19 = vector.load %arg6[%c0_15, %c0_16, %c0_17] : memref<3x1x256xf32, #tpu.memory_space<vmem>>, vector<1x1x256xf32>
    %20 = vector.shape_cast %19 : vector<1x1x256xf32> to vector<1x256xf32>
    %21 = vector.broadcast %20 : vector<1x256xf32> to vector<2x256xf32>
    %22 = arith.mulf %18, %21 : vector<2x256xf32>
    %c0_18 = arith.constant 0 : index
    %c0_19 = arith.constant 0 : index
    %c0_20 = arith.constant 0 : index
    %23 = vector.load %arg7[%c0_18, %c0_19, %c0_20] : memref<3x1x256xf32, #tpu.memory_space<vmem>>, vector<1x1x256xf32>
    %24 = vector.shape_cast %23 : vector<1x1x256xf32> to vector<1x256xf32>
    %25 = vector.broadcast %24 : vector<1x256xf32> to vector<2x256xf32>
    %26 = arith.addf %22, %25 : vector<2x256xf32>
    %cst_21 = arith.constant 0.000000e+00 : f32
    %27 = vector.broadcast %cst_21 : f32 to vector<2x256xf32>
    %28 = arith.maximumf %26, %27 : vector<2x256xf32>
    %29 = arith.truncf %28 : vector<2x256xf32> to vector<2x256xbf16>
    %c0_22 = arith.constant 0 : index
    %c0_23 = arith.constant 0 : index
    %c0_24 = arith.constant 0 : index
    %30 = vector.load %arg8[%c0_22, %c0_23, %c0_24] : memref<3x256x256xbf16, #tpu.memory_space<vmem>>, vector<1x256x256xbf16>
    %31 = vector.shape_cast %30 : vector<1x256x256xbf16> to vector<256x256xbf16>
    %cst_25 = arith.constant dense<0.000000e+00> : vector<2x256xf32>
    %32 = tpu.matmul %29, %31, %cst_25 {dimension_numbers = #tpu.dot_dimension_numbers<[1], [0], [0], [1], [0, 0, 1, 1], [], []>} : vector<2x256xbf16>, vector<256x256xbf16>, vector<2x256xf32> -> vector<2x256xf32>
    %c0_26 = arith.constant 0 : index
    %c0_27 = arith.constant 0 : index
    %c0_28 = arith.constant 0 : index
    %33 = vector.load %arg9[%c0_26, %c0_27, %c0_28] : memref<3x1x256xf32, #tpu.memory_space<vmem>>, vector<1x1x256xf32>
    %34 = vector.shape_cast %33 : vector<1x1x256xf32> to vector<1x256xf32>
    %35 = vector.broadcast %34 : vector<1x256xf32> to vector<2x256xf32>
    %36 = arith.addf %32, %35 : vector<2x256xf32>
    %c0_29 = arith.constant 0 : index
    %c0_30 = arith.constant 0 : index
    %c0_31 = arith.constant 0 : index
    %37 = vector.load %arg10[%c0_29, %c0_30, %c0_31] : memref<3x1x256xf32, #tpu.memory_space<vmem>>, vector<1x1x256xf32>
    %38 = vector.shape_cast %37 : vector<1x1x256xf32> to vector<1x256xf32>
    %39 = vector.broadcast %38 : vector<1x256xf32> to vector<2x256xf32>
    %40 = arith.mulf %36, %39 : vector<2x256xf32>
    %c0_32 = arith.constant 0 : index
    %c0_33 = arith.constant 0 : index
    %c0_34 = arith.constant 0 : index
    %41 = vector.load %arg11[%c0_32, %c0_33, %c0_34] : memref<3x1x256xf32, #tpu.memory_space<vmem>>, vector<1x1x256xf32>
    %42 = vector.shape_cast %41 : vector<1x1x256xf32> to vector<1x256xf32>
    %43 = vector.broadcast %42 : vector<1x256xf32> to vector<2x256xf32>
    %44 = arith.addf %40, %43 : vector<2x256xf32>
    %cst_35 = arith.constant 0.000000e+00 : f32
    %45 = vector.broadcast %cst_35 : f32 to vector<2x256xf32>
    %46 = arith.maximumf %44, %45 : vector<2x256xf32>
    %47 = arith.truncf %46 : vector<2x256xf32> to vector<2x256xbf16>
    %c0_36 = arith.constant 0 : index
    %c0_37 = arith.constant 0 : index
    %c0_38 = arith.constant 0 : index
    %48 = vector.load %arg12[%c0_36, %c0_37, %c0_38] : memref<3x256x256xbf16, #tpu.memory_space<vmem>>, vector<1x256x256xbf16>
    %49 = vector.shape_cast %48 : vector<1x256x256xbf16> to vector<256x256xbf16>
    %cst_39 = arith.constant dense<0.000000e+00> : vector<2x256xf32>
    %50 = tpu.matmul %47, %49, %cst_39 {dimension_numbers = #tpu.dot_dimension_numbers<[1], [0], [0], [1], [0, 0, 1, 1], [], []>} : vector<2x256xbf16>, vector<256x256xbf16>, vector<2x256xf32> -> vector<2x256xf32>
    %c0_40 = arith.constant 0 : index
    %c0_41 = arith.constant 0 : index
    %c0_42 = arith.constant 0 : index
    %51 = vector.load %arg13[%c0_40, %c0_41, %c0_42] : memref<3x1x256xf32, #tpu.memory_space<vmem>>, vector<1x1x256xf32>
    %52 = vector.shape_cast %51 : vector<1x1x256xf32> to vector<1x256xf32>
    %53 = vector.broadcast %52 : vector<1x256xf32> to vector<2x256xf32>
    %54 = arith.addf %50, %53 : vector<2x256xf32>
    %c0_43 = arith.constant 0 : index
    %c0_44 = arith.constant 0 : index
    %c0_45 = arith.constant 0 : index
    %55 = vector.load %arg14[%c0_43, %c0_44, %c0_45] : memref<3x1x256xf32, #tpu.memory_space<vmem>>, vector<1x1x256xf32>
    %56 = vector.shape_cast %55 : vector<1x1x256xf32> to vector<1x256xf32>
    %57 = vector.broadcast %56 : vector<1x256xf32> to vector<2x256xf32>
    %58 = arith.mulf %54, %57 : vector<2x256xf32>
    %c0_46 = arith.constant 0 : index
    %c0_47 = arith.constant 0 : index
    %c0_48 = arith.constant 0 : index
    %59 = vector.load %arg15[%c0_46, %c0_47, %c0_48] : memref<3x1x256xf32, #tpu.memory_space<vmem>>, vector<1x1x256xf32>
    %60 = vector.shape_cast %59 : vector<1x1x256xf32> to vector<1x256xf32>
    %61 = vector.broadcast %60 : vector<1x256xf32> to vector<2x256xf32>
    %62 = arith.addf %58, %61 : vector<2x256xf32>
    %cst_49 = arith.constant 0.000000e+00 : f32
    %63 = vector.broadcast %cst_49 : f32 to vector<2x256xf32>
    %64 = arith.maximumf %62, %63 : vector<2x256xf32>
    %65 = arith.truncf %64 : vector<2x256xf32> to vector<2x256xbf16>
    %c0_50 = arith.constant 0 : index
    %c0_51 = arith.constant 0 : index
    %66 = vector.load %arg16[%c0_50, %c0_51] : memref<256x256xbf16, #tpu.memory_space<vmem>>, vector<256x256xbf16>
    %cst_52 = arith.constant dense<0.000000e+00> : vector<2x256xf32>
    %67 = tpu.matmul %65, %66, %cst_52 {dimension_numbers = #tpu.dot_dimension_numbers<[1], [0], [0], [1], [0, 0, 1, 1], [], []>} : vector<2x256xbf16>, vector<256x256xbf16>, vector<2x256xf32> -> vector<2x256xf32>
    %c0_53 = arith.constant 0 : index
    %c0_54 = arith.constant 0 : index
    %68 = vector.load %arg17[%c0_53, %c0_54] : memref<1x256xf32, #tpu.memory_space<vmem>>, vector<1x256xf32>
    %69 = vector.broadcast %68 : vector<1x256xf32> to vector<2x256xf32>
    %70 = arith.addf %67, %69 : vector<2x256xf32>
    %c0_55 = arith.constant 0 : index
    %c0_56 = arith.constant 0 : index
    %71 = vector.load %arg22[%c0_55, %c0_56] : memref<2x512xf32, #tpu.memory_space<vmem>>, vector<2x256xf32>
    tpu.vector_store %arg22[%c0_55, %c0_56], %70 {strides = array<i32>} : memref<2x512xf32, #tpu.memory_space<vmem>>, vector<2x256xf32>,
    %c1 = arith.constant 1 : index
    %c0_57 = arith.constant 0 : index
    %c0_58 = arith.constant 0 : index
    %72 = vector.load %arg6[%c1, %c0_57, %c0_58] : memref<3x1x256xf32, #tpu.memory_space<vmem>>, vector<1x1x256xf32>
    %73 = vector.shape_cast %72 : vector<1x1x256xf32> to vector<1x256xf32>
    %74 = vector.broadcast %73 : vector<1x256xf32> to vector<2x256xf32>
    %75 = arith.mulf %18, %74 : vector<2x256xf32>
    %c1_59 = arith.constant 1 : index
    %c0_60 = arith.constant 0 : index
    %c0_61 = arith.constant 0 : index
    %76 = vector.load %arg7[%c1_59, %c0_60, %c0_61] : memref<3x1x256xf32, #tpu.memory_space<vmem>>, vector<1x1x256xf32>
    %77 = vector.shape_cast %76 : vector<1x1x256xf32> to vector<1x256xf32>
    %78 = vector.broadcast %77 : vector<1x256xf32> to vector<2x256xf32>
    %79 = arith.addf %75, %78 : vector<2x256xf32>
    %cst_62 = arith.constant 0.000000e+00 : f32
    %80 = vector.broadcast %cst_62 : f32 to vector<2x256xf32>
    %81 = arith.maximumf %79, %80 : vector<2x256xf32>
    %82 = arith.truncf %81 : vector<2x256xf32> to vector<2x256xbf16>
    %c1_63 = arith.constant 1 : index
    %c0_64 = arith.constant 0 : index
    %c0_65 = arith.constant 0 : index
    %83 = vector.load %arg8[%c1_63, %c0_64, %c0_65] : memref<3x256x256xbf16, #tpu.memory_space<vmem>>, vector<1x256x256xbf16>
    %84 = vector.shape_cast %83 : vector<1x256x256xbf16> to vector<256x256xbf16>
    %cst_66 = arith.constant dense<0.000000e+00> : vector<2x256xf32>
    %85 = tpu.matmul %82, %84, %cst_66 {dimension_numbers = #tpu.dot_dimension_numbers<[1], [0], [0], [1], [0, 0, 1, 1], [], []>} : vector<2x256xbf16>, vector<256x256xbf16>, vector<2x256xf32> -> vector<2x256xf32>
    %c1_67 = arith.constant 1 : index
    %c0_68 = arith.constant 0 : index
    %c0_69 = arith.constant 0 : index
    %86 = vector.load %arg9[%c1_67, %c0_68, %c0_69] : memref<3x1x256xf32, #tpu.memory_space<vmem>>, vector<1x1x256xf32>
    %87 = vector.shape_cast %86 : vector<1x1x256xf32> to vector<1x256xf32>
    %88 = vector.broadcast %87 : vector<1x256xf32> to vector<2x256xf32>
    %89 = arith.addf %85, %88 : vector<2x256xf32>
    %c1_70 = arith.constant 1 : index
    %c0_71 = arith.constant 0 : index
    %c0_72 = arith.constant 0 : index
    %90 = vector.load %arg10[%c1_70, %c0_71, %c0_72] : memref<3x1x256xf32, #tpu.memory_space<vmem>>, vector<1x1x256xf32>
    %91 = vector.shape_cast %90 : vector<1x1x256xf32> to vector<1x256xf32>
    %92 = vector.broadcast %91 : vector<1x256xf32> to vector<2x256xf32>
    %93 = arith.mulf %89, %92 : vector<2x256xf32>
    %c1_73 = arith.constant 1 : index
    %c0_74 = arith.constant 0 : index
    %c0_75 = arith.constant 0 : index
    %94 = vector.load %arg11[%c1_73, %c0_74, %c0_75] : memref<3x1x256xf32, #tpu.memory_space<vmem>>, vector<1x1x256xf32>
    %95 = vector.shape_cast %94 : vector<1x1x256xf32> to vector<1x256xf32>
    %96 = vector.broadcast %95 : vector<1x256xf32> to vector<2x256xf32>
    %97 = arith.addf %93, %96 : vector<2x256xf32>
    %cst_76 = arith.constant 0.000000e+00 : f32
    %98 = vector.broadcast %cst_76 : f32 to vector<2x256xf32>
    %99 = arith.maximumf %97, %98 : vector<2x256xf32>
    %100 = arith.truncf %99 : vector<2x256xf32> to vector<2x256xbf16>
    %c1_77 = arith.constant 1 : index
    %c0_78 = arith.constant 0 : index
    %c0_79 = arith.constant 0 : index
    %101 = vector.load %arg12[%c1_77, %c0_78, %c0_79] : memref<3x256x256xbf16, #tpu.memory_space<vmem>>, vector<1x256x256xbf16>
    %102 = vector.shape_cast %101 : vector<1x256x256xbf16> to vector<256x256xbf16>
    %cst_80 = arith.constant dense<0.000000e+00> : vector<2x256xf32>
    %103 = tpu.matmul %100, %102, %cst_80 {dimension_numbers = #tpu.dot_dimension_numbers<[1], [0], [0], [1], [0, 0, 1, 1], [], []>} : vector<2x256xbf16>, vector<256x256xbf16>, vector<2x256xf32> -> vector<2x256xf32>
    %c1_81 = arith.constant 1 : index
    %c0_82 = arith.constant 0 : index
    %c0_83 = arith.constant 0 : index
    %104 = vector.load %arg13[%c1_81, %c0_82, %c0_83] : memref<3x1x256xf32, #tpu.memory_space<vmem>>, vector<1x1x256xf32>
    %105 = vector.shape_cast %104 : vector<1x1x256xf32> to vector<1x256xf32>
    %106 = vector.broadcast %105 : vector<1x256xf32> to vector<2x256xf32>
    %107 = arith.addf %103, %106 : vector<2x256xf32>
    %c1_84 = arith.constant 1 : index
    %c0_85 = arith.constant 0 : index
    %c0_86 = arith.constant 0 : index
    %108 = vector.load %arg14[%c1_84, %c0_85, %c0_86] : memref<3x1x256xf32, #tpu.memory_space<vmem>>, vector<1x1x256xf32>
    %109 = vector.shape_cast %108 : vector<1x1x256xf32> to vector<1x256xf32>
    %110 = vector.broadcast %109 : vector<1x256xf32> to vector<2x256xf32>
    %111 = arith.mulf %107, %110 : vector<2x256xf32>
    %c1_87 = arith.constant 1 : index
    %c0_88 = arith.constant 0 : index
    %c0_89 = arith.constant 0 : index
    %112 = vector.load %arg15[%c1_87, %c0_88, %c0_89] : memref<3x1x256xf32, #tpu.memory_space<vmem>>, vector<1x1x256xf32>
    %113 = vector.shape_cast %112 : vector<1x1x256xf32> to vector<1x256xf32>
    %114 = vector.broadcast %113 : vector<1x256xf32> to vector<2x256xf32>
    %115 = arith.addf %111, %114 : vector<2x256xf32>
    %cst_90 = arith.constant 0.000000e+00 : f32
    %116 = vector.broadcast %cst_90 : f32 to vector<2x256xf32>
    %117 = arith.maximumf %115, %116 : vector<2x256xf32>
    %118 = arith.truncf %117 : vector<2x256xf32> to vector<2x256xbf16>
    %c0_91 = arith.constant 0 : index
    %c0_92 = arith.constant 0 : index
    %119 = vector.load %arg18[%c0_91, %c0_92] : memref<256x128xbf16, #tpu.memory_space<vmem>>, vector<256x128xbf16>
    %cst_93 = arith.constant dense<0.000000e+00> : vector<2x128xf32>
    %120 = tpu.matmul %118, %119, %cst_93 {dimension_numbers = #tpu.dot_dimension_numbers<[1], [0], [0], [1], [0, 0, 1, 1], [], []>} : vector<2x256xbf16>, vector<256x128xbf16>, vector<2x128xf32> -> vector<2x128xf32>
    %c0_94 = arith.constant 0 : index
    %c0_95 = arith.constant 0 : index
    %121 = vector.load %arg19[%c0_94, %c0_95] : memref<1x128xf32, #tpu.memory_space<vmem>>, vector<1x128xf32>
    %122 = vector.broadcast %121 : vector<1x128xf32> to vector<2x128xf32>
    %123 = arith.addf %120, %122 : vector<2x128xf32>
    %c0_96 = arith.constant 0 : index
    %c256 = arith.constant 256 : index
    %124 = vector.load %arg22[%c0_96, %c256] : memref<2x512xf32, #tpu.memory_space<vmem>>, vector<2x128xf32>
    tpu.vector_store %arg22[%c0_96, %c256], %123 {strides = array<i32>} : memref<2x512xf32, #tpu.memory_space<vmem>>, vector<2x128xf32>,
    %c2 = arith.constant 2 : index
    %c0_97 = arith.constant 0 : index
    %c0_98 = arith.constant 0 : index
    %125 = vector.load %arg6[%c2, %c0_97, %c0_98] : memref<3x1x256xf32, #tpu.memory_space<vmem>>, vector<1x1x256xf32>
    %126 = vector.shape_cast %125 : vector<1x1x256xf32> to vector<1x256xf32>
    %127 = vector.broadcast %126 : vector<1x256xf32> to vector<2x256xf32>
    %128 = arith.mulf %18, %127 : vector<2x256xf32>
    %c2_99 = arith.constant 2 : index
    %c0_100 = arith.constant 0 : index
    %c0_101 = arith.constant 0 : index
    %129 = vector.load %arg7[%c2_99, %c0_100, %c0_101] : memref<3x1x256xf32, #tpu.memory_space<vmem>>, vector<1x1x256xf32>
    %130 = vector.shape_cast %129 : vector<1x1x256xf32> to vector<1x256xf32>
    %131 = vector.broadcast %130 : vector<1x256xf32> to vector<2x256xf32>
    %132 = arith.addf %128, %131 : vector<2x256xf32>
    %cst_102 = arith.constant 0.000000e+00 : f32
    %133 = vector.broadcast %cst_102 : f32 to vector<2x256xf32>
    %134 = arith.maximumf %132, %133 : vector<2x256xf32>
    %135 = arith.truncf %134 : vector<2x256xf32> to vector<2x256xbf16>
    %c2_103 = arith.constant 2 : index
    %c0_104 = arith.constant 0 : index
    %c0_105 = arith.constant 0 : index
    %136 = vector.load %arg8[%c2_103, %c0_104, %c0_105] : memref<3x256x256xbf16, #tpu.memory_space<vmem>>, vector<1x256x256xbf16>
    %137 = vector.shape_cast %136 : vector<1x256x256xbf16> to vector<256x256xbf16>
    %cst_106 = arith.constant dense<0.000000e+00> : vector<2x256xf32>
    %138 = tpu.matmul %135, %137, %cst_106 {dimension_numbers = #tpu.dot_dimension_numbers<[1], [0], [0], [1], [0, 0, 1, 1], [], []>} : vector<2x256xbf16>, vector<256x256xbf16>, vector<2x256xf32> -> vector<2x256xf32>
    %c2_107 = arith.constant 2 : index
    %c0_108 = arith.constant 0 : index
    %c0_109 = arith.constant 0 : index
    %139 = vector.load %arg9[%c2_107, %c0_108, %c0_109] : memref<3x1x256xf32, #tpu.memory_space<vmem>>, vector<1x1x256xf32>
    %140 = vector.shape_cast %139 : vector<1x1x256xf32> to vector<1x256xf32>
    %141 = vector.broadcast %140 : vector<1x256xf32> to vector<2x256xf32>
    %142 = arith.addf %138, %141 : vector<2x256xf32>
    %c2_110 = arith.constant 2 : index
    %c0_111 = arith.constant 0 : index
    %c0_112 = arith.constant 0 : index
    %143 = vector.load %arg10[%c2_110, %c0_111, %c0_112] : memref<3x1x256xf32, #tpu.memory_space<vmem>>, vector<1x1x256xf32>
    %144 = vector.shape_cast %143 : vector<1x1x256xf32> to vector<1x256xf32>
    %145 = vector.broadcast %144 : vector<1x256xf32> to vector<2x256xf32>
    %146 = arith.mulf %142, %145 : vector<2x256xf32>
    %c2_113 = arith.constant 2 : index
    %c0_114 = arith.constant 0 : index
    %c0_115 = arith.constant 0 : index
    %147 = vector.load %arg11[%c2_113, %c0_114, %c0_115] : memref<3x1x256xf32, #tpu.memory_space<vmem>>, vector<1x1x256xf32>
    %148 = vector.shape_cast %147 : vector<1x1x256xf32> to vector<1x256xf32>
    %149 = vector.broadcast %148 : vector<1x256xf32> to vector<2x256xf32>
    %150 = arith.addf %146, %149 : vector<2x256xf32>
    %cst_116 = arith.constant 0.000000e+00 : f32
    %151 = vector.broadcast %cst_116 : f32 to vector<2x256xf32>
    %152 = arith.maximumf %150, %151 : vector<2x256xf32>
    %153 = arith.truncf %152 : vector<2x256xf32> to vector<2x256xbf16>
    %c2_117 = arith.constant 2 : index
    %c0_118 = arith.constant 0 : index
    %c0_119 = arith.constant 0 : index
    %154 = vector.load %arg12[%c2_117, %c0_118, %c0_119] : memref<3x256x256xbf16, #tpu.memory_space<vmem>>, vector<1x256x256xbf16>
    %155 = vector.shape_cast %154 : vector<1x256x256xbf16> to vector<256x256xbf16>
    %cst_120 = arith.constant dense<0.000000e+00> : vector<2x256xf32>
    %156 = tpu.matmul %153, %155, %cst_120 {dimension_numbers = #tpu.dot_dimension_numbers<[1], [0], [0], [1], [0, 0, 1, 1], [], []>} : vector<2x256xbf16>, vector<256x256xbf16>, vector<2x256xf32> -> vector<2x256xf32>
    %c2_121 = arith.constant 2 : index
    %c0_122 = arith.constant 0 : index
    %c0_123 = arith.constant 0 : index
    %157 = vector.load %arg13[%c2_121, %c0_122, %c0_123] : memref<3x1x256xf32, #tpu.memory_space<vmem>>, vector<1x1x256xf32>
    %158 = vector.shape_cast %157 : vector<1x1x256xf32> to vector<1x256xf32>
    %159 = vector.broadcast %158 : vector<1x256xf32> to vector<2x256xf32>
    %160 = arith.addf %156, %159 : vector<2x256xf32>
    %c2_124 = arith.constant 2 : index
    %c0_125 = arith.constant 0 : index
    %c0_126 = arith.constant 0 : index
    %161 = vector.load %arg14[%c2_124, %c0_125, %c0_126] : memref<3x1x256xf32, #tpu.memory_space<vmem>>, vector<1x1x256xf32>
    %162 = vector.shape_cast %161 : vector<1x1x256xf32> to vector<1x256xf32>
    %163 = vector.broadcast %162 : vector<1x256xf32> to vector<2x256xf32>
    %164 = arith.mulf %160, %163 : vector<2x256xf32>
    %c2_127 = arith.constant 2 : index
    %c0_128 = arith.constant 0 : index
    %c0_129 = arith.constant 0 : index
    %165 = vector.load %arg15[%c2_127, %c0_128, %c0_129] : memref<3x1x256xf32, #tpu.memory_space<vmem>>, vector<1x1x256xf32>
    %166 = vector.shape_cast %165 : vector<1x1x256xf32> to vector<1x256xf32>
    %167 = vector.broadcast %166 : vector<1x256xf32> to vector<2x256xf32>
    %168 = arith.addf %164, %167 : vector<2x256xf32>
    %cst_130 = arith.constant 0.000000e+00 : f32
    %169 = vector.broadcast %cst_130 : f32 to vector<2x256xf32>
    %170 = arith.maximumf %168, %169 : vector<2x256xf32>
    %171 = arith.truncf %170 : vector<2x256xf32> to vector<2x256xbf16>
    %c0_131 = arith.constant 0 : index
    %c0_132 = arith.constant 0 : index
    %172 = vector.load %arg20[%c0_131, %c0_132] : memref<256x128xbf16, #tpu.memory_space<vmem>>, vector<256x128xbf16>
    %cst_133 = arith.constant dense<0.000000e+00> : vector<2x128xf32>
    %173 = tpu.matmul %171, %172, %cst_133 {dimension_numbers = #tpu.dot_dimension_numbers<[1], [0], [0], [1], [0, 0, 1, 1], [], []>} : vector<2x256xbf16>, vector<256x128xbf16>, vector<2x128xf32> -> vector<2x128xf32>
    %c0_134 = arith.constant 0 : index
    %c0_135 = arith.constant 0 : index
    %174 = vector.load %arg21[%c0_134, %c0_135] : memref<1x128xf32, #tpu.memory_space<vmem>>, vector<1x128xf32>
    %175 = vector.broadcast %174 : vector<1x128xf32> to vector<2x128xf32>
    %176 = arith.addf %173, %175 : vector<2x128xf32>
    %c0_136 = arith.constant 0 : index
    %c384 = arith.constant 384 : index
    %177 = vector.load %arg22[%c0_136, %c384] : memref<2x512xf32, #tpu.memory_space<vmem>>, vector<2x128xf32>
    tpu.vector_store %arg22[%c0_136, %c384], %176 {strides = array<i32>} : memref<2x512xf32, #tpu.memory_space<vmem>>, vector<2x128xf32>,
    return
  }
}

</mosaic_0001>

<llo_original>
// kernel: bengali_forward.1
$region0: #{bengali_forward.1}
  #allocation0 [shape = 'u32[]', space=smem, size = 0x4, offset = 0x4, fixed_abs, tag = 'smem constant byte address 0x4 - core index']
  #allocation1 [shape = 'u32[144,128]{1,0:T(1,128)}', space=vmem, size = 0x12000, scoped, tag = 'internal scratch']
  %s0 = inlined_call_operand.vmem [shape: bf16[512,128], index: 0, kind: input, shape index: {}]
  %s1 = inlined_call_operand.vmem [shape: bf16[128,128], index: 1, kind: input, shape index: {}]
  %s2 = inlined_call_operand.vmem [shape: f32[1,128], index: 2, kind: input, shape index: {}]
  %s3 = inlined_call_operand.vmem [shape: bf16[128,256], index: 3, kind: input, shape index: {}]
  %s4 = inlined_call_operand.vmem [shape: f32[1,256], index: 4, kind: input, shape index: {}]
  %s5 = inlined_call_operand.vmem [shape: bf16[2,512], index: 5, kind: input, shape index: {}]
  %s6 = inlined_call_operand.vmem [shape: f32[3,1,256], index: 6, kind: input, shape index: {}]
  %s7 = inlined_call_operand.vmem [shape: f32[3,1,256], index: 7, kind: input, shape index: {}]
  %s8 = inlined_call_operand.vmem [shape: bf16[3,256,256], index: 8, kind: input, shape index: {}]
  %s9 = inlined_call_operand.vmem [shape: f32[3,1,256], index: 9, kind: input, shape index: {}]
  %s10 = inlined_call_operand.vmem [shape: f32[3,1,256], index: 10, kind: input, shape index: {}]
  %s11 = inlined_call_operand.vmem [shape: f32[3,1,256], index: 11, kind: input, shape index: {}]
  %s12 = inlined_call_operand.vmem [shape: bf16[3,256,256], index: 12, kind: input, shape index: {}]
  %s13 = inlined_call_operand.vmem [shape: f32[3,1,256], index: 13, kind: input, shape index: {}]
  %s14 = inlined_call_operand.vmem [shape: f32[3,1,256], index: 14, kind: input, shape index: {}]
  %s15 = inlined_call_operand.vmem [shape: f32[3,1,256], index: 15, kind: input, shape index: {}]
  %s16 = inlined_call_operand.vmem [shape: bf16[256,256], index: 16, kind: input, shape index: {}]
  %s17 = inlined_call_operand.vmem [shape: f32[1,256], index: 17, kind: input, shape index: {}]
  %s18 = inlined_call_operand.vmem [shape: bf16[256,128], index: 18, kind: input, shape index: {}]
  %s19 = inlined_call_operand.vmem [shape: f32[1,128], index: 19, kind: input, shape index: {}]
  %s20 = inlined_call_operand.vmem [shape: bf16[256,128], index: 20, kind: input, shape index: {}]
  %s21 = inlined_call_operand.vmem [shape: f32[1,128], index: 21, kind: input, shape index: {}]
  %s22 = inlined_call_operand.vmem [shape: f32[2,512], index: 22, kind: output, shape index: {}]
  %s23 = sld [smem:[#allocation0]]
  $region98: #{bengali_forward.1} parent=0
    _
  %s25 = ssub.s32 1, %s23
  %s26 = scalar_select 0, %s25, %s23
  // Predicated region
  $region2: #{bengali_forward.1} parent=0 // pred_check
    _
  $region3: #{bengali_forward.1} parent=0 // pred_check_branch
    %28 = sbr.rel (0) target = $region5
  $region4: #{bengali_forward.1} parent=0 // pred_region
    _
  $region5: #{bengali_forward.1} parent=0 // pred_fallthru
    _
  // Predicated region
  $region6: #{bengali_forward.1} parent=0 // pred_check
    _
  $region7: #{bengali_forward.1} parent=0 // pred_check_branch
    %30 = sbr.rel (0) target = $region9
  $region8: #{bengali_forward.1} parent=0 // pred_region
    _
  $region9: #{bengali_forward.1} parent=0 // pred_fallthru
    _
  // Predicated region
  $region10: #{bengali_forward.1} parent=0 // pred_check
    _
  $region11: #{bengali_forward.1} parent=0 // pred_check_branch
    %32 = sbr.rel (0) target = $region13
  $region12: #{bengali_forward.1} parent=0 // pred_region
    _
  $region13: #{bengali_forward.1} parent=0 // pred_fallthru
    _
  // Predicated region
  $region14: #{bengali_forward.1} parent=0 // pred_check
    _
  $region15: #{bengali_forward.1} parent=0 // pred_check_branch
    %34 = sbr.rel (0) target = $region17
  $region16: #{bengali_forward.1} parent=0 // pred_region
    _
  $region17: #{bengali_forward.1} parent=0 // pred_fallthru
    _
  // Predicated region
  $region18: #{bengali_forward.1} parent=0 // pred_check
    _
  $region19: #{bengali_forward.1} parent=0 // pred_check_branch
    %36 = sbr.rel (0) target = $region21
  $region20: #{bengali_forward.1} parent=0 // pred_region
    _
  $region21: #{bengali_forward.1} parent=0 // pred_fallthru
    _
  // Predicated region
  $region22: #{bengali_forward.1} parent=0 // pred_check
    _
  $region23: #{bengali_forward.1} parent=0 // pred_check_branch
    %38 = sbr.rel (0) target = $region25
  $region24: #{bengali_forward.1} parent=0 // pred_region
    _
  $region25: #{bengali_forward.1} parent=0 // pred_fallthru
    _
  // Predicated region
  $region26: #{bengali_forward.1} parent=0 // pred_check
    _
  $region27: #{bengali_forward.1} parent=0 // pred_check_branch
    %40 = sbr.rel (0) target = $region29
  $region28: #{bengali_forward.1} parent=0 // pred_region
    _
  $region29: #{bengali_forward.1} parent=0 // pred_fallthru
    _
  // Predicated region
  $region30: #{bengali_forward.1} parent=0 // pred_check
    _
  $region31: #{bengali_forward.1} parent=0 // pred_check_branch
    %42 = sbr.rel (0) target = $region33
  $region32: #{bengali_forward.1} parent=0 // pred_region
    _
  $region33: #{bengali_forward.1} parent=0 // pred_fallthru
    _
  // Predicated region
  $region34: #{bengali_forward.1} parent=0 // pred_check
    _
  $region35: #{bengali_forward.1} parent=0 // pred_check_branch
    %44 = sbr.rel (0) target = $region37
  $region36: #{bengali_forward.1} parent=0 // pred_region
    _
  $region37: #{bengali_forward.1} parent=0 // pred_fallthru
    _
  // Predicated region
  $region38: #{bengali_forward.1} parent=0 // pred_check
    _
  $region39: #{bengali_forward.1} parent=0 // pred_check_branch
    %46 = sbr.rel (0) target = $region41
  $region40: #{bengali_forward.1} parent=0 // pred_region
    _
  $region41: #{bengali_forward.1} parent=0 // pred_fallthru
    _
  // Predicated region
  $region42: #{bengali_forward.1} parent=0 // pred_check
    _
  $region43: #{bengali_forward.1} parent=0 // pred_check_branch
    %48 = sbr.rel (0) target = $region45
  $region44: #{bengali_forward.1} parent=0 // pred_region
    _
  $region45: #{bengali_forward.1} parent=0 // pred_fallthru
    _
  // Predicated region
  $region46: #{bengali_forward.1} parent=0 // pred_check
    _
  $region47: #{bengali_forward.1} parent=0 // pred_check_branch
    %50 = sbr.rel (0) target = $region49
  $region48: #{bengali_forward.1} parent=0 // pred_region
    _
  $region49: #{bengali_forward.1} parent=0 // pred_fallthru
    _
  // Predicated region
  $region50: #{bengali_forward.1} parent=0 // pred_check
    _
  $region51: #{bengali_forward.1} parent=0 // pred_check_branch
    %52 = sbr.rel (0) target = $region53
  $region52: #{bengali_forward.1} parent=0 // pred_region
    _
  $region53: #{bengali_forward.1} parent=0 // pred_fallthru
    _
  // Predicated region
  $region54: #{bengali_forward.1} parent=0 // pred_check
    _
  $region55: #{bengali_forward.1} parent=0 // pred_check_branch
    %54 = sbr.rel (0) target = $region57
  $region56: #{bengali_forward.1} parent=0 // pred_region
    _
  $region57: #{bengali_forward.1} parent=0 // pred_fallthru
    _
  // Predicated region
  $region58: #{bengali_forward.1} parent=0 // pred_check
    _
  $region59: #{bengali_forward.1} parent=0 // pred_check_branch
    %56 = sbr.rel (0) target = $region61
  $region60: #{bengali_forward.1} parent=0 // pred_region
    _
  $region61: #{bengali_forward.1} parent=0 // pred_fallthru
    _
  // Predicated region
  $region62: #{bengali_forward.1} parent=0 // pred_check
    _
  $region63: #{bengali_forward.1} parent=0 // pred_check_branch
    %58 = sbr.rel (0) target = $region65
  $region64: #{bengali_forward.1} parent=0 // pred_region
    _
  $region65: #{bengali_forward.1} parent=0 // pred_fallthru
    _
  // Predicated region
  $region66: #{bengali_forward.1} parent=0 // pred_check
    _
  $region67: #{bengali_forward.1} parent=0 // pred_check_branch
    %60 = sbr.rel (0) target = $region69
  $region68: #{bengali_forward.1} parent=0 // pred_region
    _
  $region69: #{bengali_forward.1} parent=0 // pred_fallthru
    _
  // Predicated region
  $region70: #{bengali_forward.1} parent=0 // pred_check
    _
  $region71: #{bengali_forward.1} parent=0 // pred_check_branch
    %62 = sbr.rel (0) target = $region73
  $region72: #{bengali_forward.1} parent=0 // pred_region
    _
  $region73: #{bengali_forward.1} parent=0 // pred_fallthru
    _
  // Predicated region
  $region74: #{bengali_forward.1} parent=0 // pred_check
    _
  $region75: #{bengali_forward.1} parent=0 // pred_check_branch
    %64 = sbr.rel (0) target = $region77
  $region76: #{bengali_forward.1} parent=0 // pred_region
    _
  $region77: #{bengali_forward.1} parent=0 // pred_fallthru
    _
  // Predicated region
  $region78: #{bengali_forward.1} parent=0 // pred_check
    _
  $region79: #{bengali_forward.1} parent=0 // pred_check_branch
    %66 = sbr.rel (0) target = $region81
  $region80: #{bengali_forward.1} parent=0 // pred_region
    _
  $region81: #{bengali_forward.1} parent=0 // pred_fallthru
    _
  // Predicated region
  $region82: #{bengali_forward.1} parent=0 // pred_check
    _
  $region83: #{bengali_forward.1} parent=0 // pred_check_branch
    %68 = sbr.rel (0) target = $region85
  $region84: #{bengali_forward.1} parent=0 // pred_region
    _
  $region85: #{bengali_forward.1} parent=0 // pred_fallthru
    _
  // Predicated region
  $region86: #{bengali_forward.1} parent=0 // pred_check
    _
  $region87: #{bengali_forward.1} parent=0 // pred_check_branch
    %70 = sbr.rel (0) target = $region89
  $region88: #{bengali_forward.1} parent=0 // pred_region
    _
  $region89: #{bengali_forward.1} parent=0 // pred_fallthru
    _
  %v72 = vld [vmem:[%s0] sm:$0xf]
  %v73 = vld [vmem:[%s0 + $0x4] sm:$0xf]
  %v74 = vld [vmem:[%s0 + $0x8] sm:$0xf]
  %v75 = vld [vmem:[%s0 + $0xc] sm:$0xf]
  %v76 = vld [vmem:[%s0 + $0x10] sm:$0xf]
  %v77 = vld [vmem:[%s0 + $0x14] sm:$0xf]
  %v78 = vld [vmem:[%s0 + $0x18] sm:$0xf]
  %v79 = vld [vmem:[%s0 + $0x1c] sm:$0xf]
  %v80 = vld [vmem:[%s0 + $0x20] sm:$0xf]
  %v81 = vld [vmem:[%s0 + $0x24] sm:$0xf]
  %v82 = vld [vmem:[%s0 + $0x28] sm:$0xf]
  %v83 = vld [vmem:[%s0 + $0x2c] sm:$0xf]
  %v84 = vld [vmem:[%s0 + $0x30] sm:$0xf]
  %v85 = vld [vmem:[%s0 + $0x34] sm:$0xf]
  %v86 = vld [vmem:[%s0 + $0x38] sm:$0xf]
  %v87 = vld [vmem:[%s0 + $0x3c] sm:$0xf]
  %v88 = vld [vmem:[%s0 + $0x40] sm:$0xf]
  %v89 = vld [vmem:[%s0 + $0x44] sm:$0xf]
  %v90 = vld [vmem:[%s0 + $0x48] sm:$0xf]
  %v91 = vld [vmem:[%s0 + $0x4c] sm:$0xf]
  %v92 = vld [vmem:[%s0 + $0x50] sm:$0xf]
  %v93 = vld [vmem:[%s0 + $0x54] sm:$0xf]
  %v94 = vld [vmem:[%s0 + $0x58] sm:$0xf]
  %v95 = vld [vmem:[%s0 + $0x5c] sm:$0xf]
  %v96 = vld [vmem:[%s0 + $0x60] sm:$0xf]
  %v97 = vld [vmem:[%s0 + $0x64] sm:$0xf]
  %v98 = vld [vmem:[%s0 + $0x68] sm:$0xf]
  %v99 = vld [vmem:[%s0 + $0x6c] sm:$0xf]
  %v100 = vld [vmem:[%s0 + $0x70] sm:$0xf]
  %v101 = vld [vmem:[%s0 + $0x74] sm:$0xf]
  %v102 = vld [vmem:[%s0 + $0x78] sm:$0xf]
  %v103 = vld [vmem:[%s0 + $0x7c] sm:$0xf]
  %v104 = vld [vmem:[%s0 + $0x80] sm:$0xf]
  %v105 = vld [vmem:[%s0 + $0x84] sm:$0xf]
  %v106 = vld [vmem:[%s0 + $0x88] sm:$0xf]
  %v107 = vld [vmem:[%s0 + $0x8c] sm:$0xf]
  %v108 = vld [vmem:[%s0 + $0x90] sm:$0xf]
  %v109 = vld [vmem:[%s0 + $0x94] sm:$0xf]
  %v110 = vld [vmem:[%s0 + $0x98] sm:$0xf]
  %v111 = vld [vmem:[%s0 + $0x9c] sm:$0xf]
  %v112 = vld [vmem:[%s0 + $0xa0] sm:$0xf]
  %v113 = vld [vmem:[%s0 + $0xa4] sm:$0xf]
  %v114 = vld [vmem:[%s0 + $0xa8] sm:$0xf]
  %v115 = vld [vmem:[%s0 + $0xac] sm:$0xf]
  %v116 = vld [vmem:[%s0 + $0xb0] sm:$0xf]
  %v117 = vld [vmem:[%s0 + $0xb4] sm:$0xf]
  %v118 = vld [vmem:[%s0 + $0xb8] sm:$0xf]
  %v119 = vld [vmem:[%s0 + $0xbc] sm:$0xf]
  %v120 = vld [vmem:[%s0 + $0xc0] sm:$0xf]
  %v121 = vld [vmem:[%s0 + $0xc4] sm:$0xf]
  %v122 = vld [vmem:[%s0 + $0xc8] sm:$0xf]
  %v123 = vld [vmem:[%s0 + $0xcc] sm:$0xf]
  %v124 = vld [vmem:[%s0 + $0xd0] sm:$0xf]
  %v125 = vld [vmem:[%s0 + $0xd4] sm:$0xf]
  %v126 = vld [vmem:[%s0 + $0xd8] sm:$0xf]
  %v127 = vld [vmem:[%s0 + $0xdc] sm:$0xf]
  %v128 = vld [vmem:[%s0 + $0xe0] sm:$0xf]
  %v129 = vld [vmem:[%s0 + $0xe4] sm:$0xf]
  %v130 = vld [vmem:[%s0 + $0xe8] sm:$0xf]
  %v131 = vld [vmem:[%s0 + $0xec] sm:$0xf]
  %v132 = vld [vmem:[%s0 + $0xf0] sm:$0xf]
  %v133 = vld [vmem:[%s0 + $0xf4] sm:$0xf]
  %v134 = vld [vmem:[%s0 + $0xf8] sm:$0xf]
  %v135 = vld [vmem:[%s0 + $0xfc] sm:$0xf]
  %v136 = vld [vmem:[%s1] sm:$0xf]
  %v137 = vld [vmem:[%s1 + $0x4] sm:$0xf]
  %v138 = vld [vmem:[%s1 + $0x8] sm:$0xf]
  %v139 = vld [vmem:[%s1 + $0xc] sm:$0xf]
  %v140 = vld [vmem:[%s1 + $0x10] sm:$0xf]
  %v141 = vld [vmem:[%s1 + $0x14] sm:$0xf]
  %v142 = vld [vmem:[%s1 + $0x18] sm:$0xf]
  %v143 = vld [vmem:[%s1 + $0x1c] sm:$0xf]
  %v144 = vld [vmem:[%s1 + $0x20] sm:$0xf]
  %v145 = vld [vmem:[%s1 + $0x24] sm:$0xf]
  %v146 = vld [vmem:[%s1 + $0x28] sm:$0xf]
  %v147 = vld [vmem:[%s1 + $0x2c] sm:$0xf]
  %v148 = vld [vmem:[%s1 + $0x30] sm:$0xf]
  %v149 = vld [vmem:[%s1 + $0x34] sm:$0xf]
  %v150 = vld [vmem:[%s1 + $0x38] sm:$0xf]
  %v151 = vld [vmem:[%s1 + $0x3c] sm:$0xf]
  %v152 = vld [vmem:[%s2] sm:$0x1]
  %v154 = vlaneseq
  %v155 = vshrl.u32 %v154, 7
  %v156 = vsub.s32 0, %v155
  %v157 = vrot.slane %v152, %v156
  %v223 = vunpack.c.l.b16 %v72
  %v224 = vunpack.c.l.b16 %v73
  %v225 = vunpack.c.l.b16 %v74
  %v226 = vunpack.c.l.b16 %v75
  %v227 = vunpack.c.l.b16 %v76
  %v228 = vunpack.c.l.b16 %v77
  %v229 = vunpack.c.l.b16 %v78
  %v230 = vunpack.c.l.b16 %v79
  %v231 = vunpack.c.l.b16 %v80
  %v232 = vunpack.c.l.b16 %v81
  %v233 = vunpack.c.l.b16 %v82
  %v234 = vunpack.c.l.b16 %v83
  %v235 = vunpack.c.l.b16 %v84
  %v236 = vunpack.c.l.b16 %v85
  %v237 = vunpack.c.l.b16 %v86
  %v238 = vunpack.c.l.b16 %v87
  %v239 = vunpack.c.l.b16 %v88
  %v240 = vunpack.c.l.b16 %v89
  %v241 = vunpack.c.l.b16 %v90
  %v242 = vunpack.c.l.b16 %v91
  %v243 = vunpack.c.l.b16 %v92
  %v244 = vunpack.c.l.b16 %v93
  %v245 = vunpack.c.l.b16 %v94
  %v246 = vunpack.c.l.b16 %v95
  %v247 = vunpack.c.l.b16 %v96
  %v248 = vunpack.c.l.b16 %v97
  %v249 = vunpack.c.l.b16 %v98
  %v250 = vunpack.c.l.b16 %v99
  %v251 = vunpack.c.l.b16 %v100
  %v252 = vunpack.c.l.b16 %v101
  %v253 = vunpack.c.l.b16 %v102
  %v254 = vunpack.c.l.b16 %v103
  %v255 = vunpack.c.l.b16 %v104
  %v256 = vunpack.c.l.b16 %v105
  %v257 = vunpack.c.l.b16 %v106
  %v258 = vunpack.c.l.b16 %v107
  %v259 = vunpack.c.l.b16 %v108
  %v260 = vunpack.c.l.b16 %v109
  %v261 = vunpack.c.l.b16 %v110
  %v262 = vunpack.c.l.b16 %v111
  %v263 = vunpack.c.l.b16 %v112
  %v264 = vunpack.c.l.b16 %v113
  %v265 = vunpack.c.l.b16 %v114
  %v266 = vunpack.c.l.b16 %v115
  %v267 = vunpack.c.l.b16 %v116
  %v268 = vunpack.c.l.b16 %v117
  %v269 = vunpack.c.l.b16 %v118
  %v270 = vunpack.c.l.b16 %v119
  %v271 = vunpack.c.l.b16 %v120
  %v272 = vunpack.c.l.b16 %v121
  %v273 = vunpack.c.l.b16 %v122
  %v274 = vunpack.c.l.b16 %v123
  %v275 = vunpack.c.l.b16 %v124
  %v276 = vunpack.c.l.b16 %v125
  %v277 = vunpack.c.l.b16 %v126
  %v278 = vunpack.c.l.b16 %v127
  %v279 = vunpack.c.l.b16 %v128
  %v280 = vunpack.c.l.b16 %v129
  %v281 = vunpack.c.l.b16 %v130
  %v282 = vunpack.c.l.b16 %v131
  %v283 = vunpack.c.l.b16 %v132
  %v284 = vunpack.c.l.b16 %v133
  %v285 = vunpack.c.l.b16 %v134
  %v286 = vunpack.c.l.b16 %v135
  %v287 = vpack.c.b16 %v224, %v223
  %v288 = vpack.c.b16 %v226, %v225
  %v289 = vpack.c.b16 %v228, %v227
  %v290 = vpack.c.b16 %v230, %v229
  %v291 = vpack.c.b16 %v232, %v231
  %v292 = vpack.c.b16 %v234, %v233
  %v293 = vpack.c.b16 %v236, %v235
  %v294 = vpack.c.b16 %v238, %v237
  %v295 = vpack.c.b16 %v240, %v239
  %v296 = vpack.c.b16 %v242, %v241
  %v297 = vpack.c.b16 %v244, %v243
  %v298 = vpack.c.b16 %v246, %v245
  %v299 = vpack.c.b16 %v248, %v247
  %v300 = vpack.c.b16 %v250, %v249
  %v301 = vpack.c.b16 %v252, %v251
  %v302 = vpack.c.b16 %v254, %v253
  %v303 = vpack.c.b16 %v256, %v255
  %v304 = vpack.c.b16 %v258, %v257
  %v305 = vpack.c.b16 %v260, %v259
  %v306 = vpack.c.b16 %v262, %v261
  %v307 = vpack.c.b16 %v264, %v263
  %v308 = vpack.c.b16 %v266, %v265
  %v309 = vpack.c.b16 %v268, %v267
  %v310 = vpack.c.b16 %v270, %v269
  %v311 = vpack.c.b16 %v272, %v271
  %v312 = vpack.c.b16 %v274, %v273
  %v313 = vpack.c.b16 %v276, %v275
  %v314 = vpack.c.b16 %v278, %v277
  %v315 = vpack.c.b16 %v280, %v279
  %v316 = vpack.c.b16 %v282, %v281
  %v317 = vpack.c.b16 %v284, %v283
  %v318 = vpack.c.b16 %v286, %v285
  %v367 = vunpack.c.l.b16 %v136
  %v368 = vunpack.c.l.b16 %v137
  %v369 = vunpack.c.l.b16 %v138
  %v370 = vunpack.c.l.b16 %v139
  %v371 = vunpack.c.l.b16 %v140
  %v372 = vunpack.c.l.b16 %v141
  %v373 = vunpack.c.l.b16 %v142
  %v374 = vunpack.c.l.b16 %v143
  %v375 = vunpack.c.l.b16 %v144
  %v376 = vunpack.c.l.b16 %v145
  %v377 = vunpack.c.l.b16 %v146
  %v378 = vunpack.c.l.b16 %v147
  %v379 = vunpack.c.l.b16 %v148
  %v380 = vunpack.c.l.b16 %v149
  %v381 = vunpack.c.l.b16 %v150
  %v382 = vunpack.c.l.b16 %v151
  %v383 = vpack.c.b16 %v368, %v367
  %v384 = vpack.c.b16 %v370, %v369
  %v385 = vpack.c.b16 %v372, %v371
  %v386 = vpack.c.b16 %v374, %v373
  %v387 = vpack.c.b16 %v376, %v375
  %v388 = vpack.c.b16 %v378, %v377
  %v389 = vpack.c.b16 %v380, %v379
  %v390 = vpack.c.b16 %v382, %v381
  %399 = vmatprep.subr.bf16.mxu0 0
  %400 = vmatpush1.bf16.msra.mxu0 %v383
  %401 = vmatprep.subr.bf16.mxu0 0
  %402 = vmatpush1.bf16.msra.mxu0 %v384
  %403 = vmatprep.subr.bf16.mxu0 0
  %404 = vmatpush1.bf16.msra.mxu0 %v385
  %405 = vmatprep.subr.bf16.mxu0 0
  %406 = vmatpush1.bf16.msra.mxu0 %v386
  %407 = vmatprep.subr.bf16.mxu0 0
  %408 = vmatpush1.bf16.msra.mxu0 %v387
  %409 = vmatprep.subr.bf16.mxu0 0
  %410 = vmatpush1.bf16.msra.mxu0 %v388
  %411 = vmatprep.subr.bf16.mxu0 0
  %412 = vmatpush1.bf16.msra.mxu0 %v389
  %413 = vmatprep.subr.bf16.mxu0 0
  %414 = vmatpush1.bf16.msra.mxu0 %v390
  %415 = vmatprep.subr.bf16.mxu0 0
  %416 = vmatpush1.bf16.msra.mxu0 0
  %417 = vmatprep.subr.bf16.mxu0 0
  %418 = vmatpush1.bf16.msra.mxu0 0
  %419 = vmatprep.subr.bf16.mxu0 0
  %420 = vmatpush1.bf16.msra.mxu0 0
  %421 = vmatprep.subr.bf16.mxu0 0
  %422 = vmatpush1.bf16.msra.mxu0 0
  %423 = vmatprep.subr.bf16.mxu0 0
  %424 = vmatpush1.bf16.msra.mxu0 0
  %425 = vmatprep.subr.bf16.mxu0 0
  %426 = vmatpush1.bf16.msra.mxu0 0
  %427 = vmatprep.subr.bf16.mxu0 0
  %428 = vmatpush1.bf16.msra.mxu0 0
  %429 = vmatprep.subr.bf16.mxu0 0
  %430 = vmatpush1.bf16.msra.mxu0 0
  %431 = vmatprep.mubr.bf16.mxu0 0
  %432 = vmatmul.mubr.bf16.gmra.mrb[0].mxu0 %v287
  %v433 = vpop.f32.mrb[0].mxu0
  %v434 = vadd.f32 %v157, %v433
  %v435 = vpop.f32.mrb[0].mxu0
  %v436 = vpop.f32.mrb[0].mxu0
  %v437 = vadd.f32 %v157, %v436
  %v438 = vpop.f32.mrb[0].mxu0
  %439 = vmatprep.mubr.bf16.mxu0 0
  %440 = vmatmul.mubr.bf16.gmra.mrb[0].mxu0 %v288
  %v441 = vpop.f32.mrb[0].mxu0
  %v442 = vadd.f32 %v157, %v441
  %v443 = vpop.f32.mrb[0].mxu0
  %v444 = vpop.f32.mrb[0].mxu0
  %v445 = vadd.f32 %v157, %v444
  %v446 = vpop.f32.mrb[0].mxu0
  %447 = vmatprep.mubr.bf16.mxu0 0
  %448 = vmatmul.mubr.bf16.gmra.mrb[0].mxu0 %v289
  %v449 = vpop.f32.mrb[0].mxu0
  %v450 = vadd.f32 %v157, %v449
  %v451 = vpop.f32.mrb[0].mxu0
  %v452 = vpop.f32.mrb[0].mxu0
  %v453 = vadd.f32 %v157, %v452
  %v454 = vpop.f32.mrb[0].mxu0
  %455 = vmatprep.mubr.bf16.mxu0 0
  %456 = vmatmul.mubr.bf16.gmra.mrb[0].mxu0 %v290
  %v457 = vpop.f32.mrb[0].mxu0
  %v458 = vadd.f32 %v157, %v457
  %v459 = vpop.f32.mrb[0].mxu0
  %v460 = vpop.f32.mrb[0].mxu0
  %v461 = vadd.f32 %v157, %v460
  %v462 = vpop.f32.mrb[0].mxu0
  %463 = vmatprep.mubr.bf16.mxu0 0
  %464 = vmatmul.mubr.bf16.gmra.mrb[0].mxu0 %v291
  %v465 = vpop.f32.mrb[0].mxu0
  %v466 = vadd.f32 %v157, %v465
  %v467 = vpop.f32.mrb[0].mxu0
  %v468 = vpop.f32.mrb[0].mxu0
  %v469 = vadd.f32 %v157, %v468
  %v470 = vpop.f32.mrb[0].mxu0
  %471 = vmatprep.mubr.bf16.mxu0 0
  %472 = vmatmul.mubr.bf16.gmra.mrb[0].mxu0 %v292
  %v473 = vpop.f32.mrb[0].mxu0
  %v474 = vadd.f32 %v157, %v473
  %v475 = vpop.f32.mrb[0].mxu0
  %v476 = vpop.f32.mrb[0].mxu0
  %v477 = vadd.f32 %v157, %v476
  %v478 = vpop.f32.mrb[0].mxu0
  %479 = vmatprep.mubr.bf16.mxu0 0
  %480 = vmatmul.mubr.bf16.gmra.mrb[0].mxu0 %v293
  %v481 = vpop.f32.mrb[0].mxu0
  %v482 = vadd.f32 %v157, %v481
  %v483 = vpop.f32.mrb[0].mxu0
  %v484 = vpop.f32.mrb[0].mxu0
  %v485 = vadd.f32 %v157, %v484
  %v486 = vpop.f32.mrb[0].mxu0
  %487 = vmatprep.mubr.bf16.mxu0 0
  %488 = vmatmul.mubr.bf16.gmra.mrb[0].mxu0 %v294
  %v489 = vpop.f32.mrb[0].mxu0
  %v490 = vadd.f32 %v157, %v489
  %v491 = vpop.f32.mrb[0].mxu0
  %v492 = vpop.f32.mrb[0].mxu0
  %v493 = vadd.f32 %v157, %v492
  %v494 = vpop.f32.mrb[0].mxu0
  %495 = vmatprep.mubr.bf16.mxu0 0
  %496 = vmatmul.mubr.bf16.gmra.mrb[0].mxu0 %v295
  %v497 = vpop.f32.mrb[0].mxu0
  %v498 = vadd.f32 %v157, %v497
  %v499 = vpop.f32.mrb[0].mxu0
  %v500 = vpop.f32.mrb[0].mxu0
  %v501 = vadd.f32 %v157, %v500
  %v502 = vpop.f32.mrb[0].mxu0
  %503 = vmatprep.mubr.bf16.mxu0 0
  %504 = vmatmul.mubr.bf16.gmra.mrb[0].mxu0 %v296
  %v505 = vpop.f32.mrb[0].mxu0
  %v506 = vadd.f32 %v157, %v505
  %v507 = vpop.f32.mrb[0].mxu0
  %v508 = vpop.f32.mrb[0].mxu0
  %v509 = vadd.f32 %v157, %v508
  %v510 = vpop.f32.mrb[0].mxu0
  %511 = vmatprep.mubr.bf16.mxu0 0
  %512 = vmatmul.mubr.bf16.gmra.mrb[0].mxu0 %v297
  %v513 = vpop.f32.mrb[0].mxu0
  %v514 = vadd.f32 %v157, %v513
  %v515 = vpop.f32.mrb[0].mxu0
  %v516 = vpop.f32.mrb[0].mxu0
  %v517 = vadd.f32 %v157, %v516
  %v518 = vpop.f32.mrb[0].mxu0
  %519 = vmatprep.mubr.bf16.mxu0 0
  %520 = vmatmul.mubr.bf16.gmra.mrb[0].mxu0 %v298
  %v521 = vpop.f32.mrb[0].mxu0
  %v522 = vadd.f32 %v157, %v521
  %v523 = vpop.f32.mrb[0].mxu0
  %v524 = vpop.f32.mrb[0].mxu0
  %v525 = vadd.f32 %v157, %v524
  %v526 = vpop.f32.mrb[0].mxu0
  %527 = vmatprep.mubr.bf16.mxu0 0
  %528 = vmatmul.mubr.bf16.gmra.mrb[0].mxu0 %v299
  %v529 = vpop.f32.mrb[0].mxu0
  %v530 = vadd.f32 %v157, %v529
  %v531 = vpop.f32.mrb[0].mxu0
  %v532 = vpop.f32.mrb[0].mxu0
  %v533 = vadd.f32 %v157, %v532
  %v534 = vpop.f32.mrb[0].mxu0
  %535 = vmatprep.mubr.bf16.mxu0 0
  %536 = vmatmul.mubr.bf16.gmra.mrb[0].mxu0 %v300
  %v537 = vpop.f32.mrb[0].mxu0
  %v538 = vadd.f32 %v157, %v537
  %v539 = vpop.f32.mrb[0].mxu0
  %v540 = vpop.f32.mrb[0].mxu0
  %v541 = vadd.f32 %v157, %v540
  %v542 = vpop.f32.mrb[0].mxu0
  %543 = vmatprep.mubr.bf16.mxu0 0
  %544 = vmatmul.mubr.bf16.gmra.mrb[0].mxu0 %v301
  %v545 = vpop.f32.mrb[0].mxu0
  %v546 = vadd.f32 %v157, %v545
  %v547 = vpop.f32.mrb[0].mxu0
  %v548 = vpop.f32.mrb[0].mxu0
  %v549 = vadd.f32 %v157, %v548
  %v550 = vpop.f32.mrb[0].mxu0
  %551 = vmatprep.mubr.bf16.mxu0 0
  %552 = vmatmul.mubr.bf16.gmra.mrb[0].mxu0 %v302
  %v553 = vpop.f32.mrb[0].mxu0
  %v554 = vadd.f32 %v157, %v553
  %v555 = vpop.f32.mrb[0].mxu0
  %v556 = vpop.f32.mrb[0].mxu0
  %v557 = vadd.f32 %v157, %v556
  %v558 = vpop.f32.mrb[0].mxu0
  %559 = vmatprep.mubr.bf16.mxu0 0
  %560 = vmatmul.mubr.bf16.gmra.mrb[0].mxu0 %v303
  %v561 = vpop.f32.mrb[0].mxu0
  %v562 = vadd.f32 %v157, %v561
  %v563 = vpop.f32.mrb[0].mxu0
  %v564 = vpop.f32.mrb[0].mxu0
  %v565 = vadd.f32 %v157, %v564
  %v566 = vpop.f32.mrb[0].mxu0
  %567 = vmatprep.mubr.bf16.mxu0 0
  %568 = vmatmul.mubr.bf16.gmra.mrb[0].mxu0 %v304
  %v569 = vpop.f32.mrb[0].mxu0
  %v570 = vadd.f32 %v157, %v569
  %v571 = vpop.f32.mrb[0].mxu0
  %v572 = vpop.f32.mrb[0].mxu0
  %v573 = vadd.f32 %v157, %v572
  %v574 = vpop.f32.mrb[0].mxu0
  %575 = vmatprep.mubr.bf16.mxu0 0
  %576 = vmatmul.mubr.bf16.gmra.mrb[0].mxu0 %v305
  %v577 = vpop.f32.mrb[0].mxu0
  %v578 = vadd.f32 %v157, %v577
  %v579 = vpop.f32.mrb[0].mxu0
  %v580 = vpop.f32.mrb[0].mxu0
  %v581 = vadd.f32 %v157, %v580
  %v582 = vpop.f32.mrb[0].mxu0
  %583 = vmatprep.mubr.bf16.mxu0 0
  %584 = vmatmul.mubr.bf16.gmra.mrb[0].mxu0 %v306
  %v585 = vpop.f32.mrb[0].mxu0
  %v586 = vadd.f32 %v157, %v585
  %v587 = vpop.f32.mrb[0].mxu0
  %v588 = vpop.f32.mrb[0].mxu0
  %v589 = vadd.f32 %v157, %v588
  %v590 = vpop.f32.mrb[0].mxu0
  %591 = vmatprep.mubr.bf16.mxu0 0
  %592 = vmatmul.mubr.bf16.gmra.mrb[0].mxu0 %v307
  %v593 = vpop.f32.mrb[0].mxu0
  %v594 = vadd.f32 %v157, %v593
  %v595 = vpop.f32.mrb[0].mxu0
  %v596 = vpop.f32.mrb[0].mxu0
  %v597 = vadd.f32 %v157, %v596
  %v598 = vpop.f32.mrb[0].mxu0
  %599 = vmatprep.mubr.bf16.mxu0 0
  %600 = vmatmul.mubr.bf16.gmra.mrb[0].mxu0 %v308
  %v601 = vpop.f32.mrb[0].mxu0
  %v602 = vadd.f32 %v157, %v601
  %v603 = vpop.f32.mrb[0].mxu0
  %v604 = vpop.f32.mrb[0].mxu0
  %v605 = vadd.f32 %v157, %v604
  %v606 = vpop.f32.mrb[0].mxu0
  %607 = vmatprep.mubr.bf16.mxu0 0
  %608 = vmatmul.mubr.bf16.gmra.mrb[0].mxu0 %v309
  %v609 = vpop.f32.mrb[0].mxu0
  %v610 = vadd.f32 %v157, %v609
  %v611 = vpop.f32.mrb[0].mxu0
  %v612 = vpop.f32.mrb[0].mxu0
  %v613 = vadd.f32 %v157, %v612
  %v614 = vpop.f32.mrb[0].mxu0
  %615 = vmatprep.mubr.bf16.mxu0 0
  %616 = vmatmul.mubr.bf16.gmra.mrb[0].mxu0 %v310
  %v617 = vpop.f32.mrb[0].mxu0
  %v618 = vadd.f32 %v157, %v617
  %v619 = vpop.f32.mrb[0].mxu0
  %v620 = vpop.f32.mrb[0].mxu0
  %v621 = vadd.f32 %v157, %v620
  %v622 = vpop.f32.mrb[0].mxu0
  %623 = vmatprep.mubr.bf16.mxu0 0
  %624 = vmatmul.mubr.bf16.gmra.mrb[0].mxu0 %v311
  %v625 = vpop.f32.mrb[0].mxu0
  %v626 = vadd.f32 %v157, %v625
  %v627 = vpop.f32.mrb[0].mxu0
  %v628 = vpop.f32.mrb[0].mxu0
  %v629 = vadd.f32 %v157, %v628
  %v630 = vpop.f32.mrb[0].mxu0
  %631 = vmatprep.mubr.bf16.mxu0 0
  %632 = vmatmul.mubr.bf16.gmra.mrb[0].mxu0 %v312
  %v633 = vpop.f32.mrb[0].mxu0
  %v634 = vadd.f32 %v157, %v633
  %v635 = vpop.f32.mrb[0].mxu0
  %v636 = vpop.f32.mrb[0].mxu0
  %v637 = vadd.f32 %v157, %v636
  %v638 = vpop.f32.mrb[0].mxu0
  %639 = vmatprep.mubr.bf16.mxu0 0
  %640 = vmatmul.mubr.bf16.gmra.mrb[0].mxu0 %v313
  %v641 = vpop.f32.mrb[0].mxu0
  %v642 = vadd.f32 %v157, %v641
  %v643 = vpop.f32.mrb[0].mxu0
  %v644 = vpop.f32.mrb[0].mxu0
  %v645 = vadd.f32 %v157, %v644
  %v646 = vpop.f32.mrb[0].mxu0
  %647 = vmatprep.mubr.bf16.mxu0 0
  %648 = vmatmul.mubr.bf16.gmra.mrb[0].mxu0 %v314
  %v649 = vpop.f32.mrb[0].mxu0
  %v650 = vadd.f32 %v157, %v649
  %v651 = vpop.f32.mrb[0].mxu0
  %v652 = vpop.f32.mrb[0].mxu0
  %v653 = vadd.f32 %v157, %v652
  %v654 = vpop.f32.mrb[0].mxu0
  %655 = vmatprep.mubr.bf16.mxu0 0
  %656 = vmatmul.mubr.bf16.gmra.mrb[0].mxu0 %v315
  %v657 = vpop.f32.mrb[0].mxu0
  %v658 = vadd.f32 %v157, %v657
  %v659 = vpop.f32.mrb[0].mxu0
  %v660 = vpop.f32.mrb[0].mxu0
  %v661 = vadd.f32 %v157, %v660
  %v662 = vpop.f32.mrb[0].mxu0
  %663 = vmatprep.mubr.bf16.mxu0 0
  %664 = vmatmul.mubr.bf16.gmra.mrb[0].mxu0 %v316
  %v665 = vpop.f32.mrb[0].mxu0
  %v666 = vadd.f32 %v157, %v665
  %v667 = vpop.f32.mrb[0].mxu0
  %v668 = vpop.f32.mrb[0].mxu0
  %v669 = vadd.f32 %v157, %v668
  %v670 = vpop.f32.mrb[0].mxu0
  %671 = vmatprep.mubr.bf16.mxu0 0
  %672 = vmatmul.mubr.bf16.gmra.mrb[0].mxu0 %v317
  %v673 = vpop.f32.mrb[0].mxu0
  %v674 = vadd.f32 %v157, %v673
  %v675 = vpop.f32.mrb[0].mxu0
  %v676 = vpop.f32.mrb[0].mxu0
  %v677 = vadd.f32 %v157, %v676
  %v678 = vpop.f32.mrb[0].mxu0
  %679 = vmatprep.mubr.bf16.mxu0 0
  %680 = vmatmul.mubr.bf16.gmra.mrb[0].mxu0 %v318
  %v681 = vpop.f32.mrb[0].mxu0
  %v682 = vadd.f32 %v157, %v681
  %v683 = vpop.f32.mrb[0].mxu0
  %v684 = vpop.f32.mrb[0].mxu0
  %v685 = vadd.f32 %v157, %v684
  %v686 = vpop.f32.mrb[0].mxu0
  %687 = vdwg.mxu0
  %v688 = vmax.f32 %v434, 0.0
  %v689 = vmax.f32 %v437, 0.0
  %v690 = vmax.f32 %v442, 0.0
  %v691 = vmax.f32 %v445, 0.0
  %v692 = vmax.f32 %v450, 0.0
  %v693 = vmax.f32 %v453, 0.0
  %v694 = vmax.f32 %v458, 0.0
  %v695 = vmax.f32 %v461, 0.0
  %v696 = vmax.f32 %v466, 0.0
  %v697 = vmax.f32 %v469, 0.0
  %v698 = vmax.f32 %v474, 0.0
  %v699 = vmax.f32 %v477, 0.0
  %v700 = vmax.f32 %v482, 0.0
  %v701 = vmax.f32 %v485, 0.0
  %v702 = vmax.f32 %v490, 0.0
  %v703 = vmax.f32 %v493, 0.0
  %v704 = vmax.f32 %v498, 0.0
  %v705 = vmax.f32 %v501, 0.0
  %v706 = vmax.f32 %v506, 0.0
  %v707 = vmax.f32 %v509, 0.0
  %v708 = vmax.f32 %v514, 0.0
  %v709 = vmax.f32 %v517, 0.0
  %v710 = vmax.f32 %v522, 0.0
  %v711 = vmax.f32 %v525, 0.0
  %v712 = vmax.f32 %v530, 0.0
  %v713 = vmax.f32 %v533, 0.0
  %v714 = vmax.f32 %v538, 0.0
  %v715 = vmax.f32 %v541, 0.0
  %v716 = vmax.f32 %v546, 0.0
  %v717 = vmax.f32 %v549, 0.0
  %v718 = vmax.f32 %v554, 0.0
  %v719 = vmax.f32 %v557, 0.0
  %v720 = vmax.f32 %v562, 0.0
  %v721 = vmax.f32 %v565, 0.0
  %v722 = vmax.f32 %v570, 0.0
  %v723 = vmax.f32 %v573, 0.0
  %v724 = vmax.f32 %v578, 0.0
  %v725 = vmax.f32 %v581, 0.0
  %v726 = vmax.f32 %v586, 0.0
  %v727 = vmax.f32 %v589, 0.0
  %v728 = vmax.f32 %v594, 0.0
  %v729 = vmax.f32 %v597, 0.0
  %v730 = vmax.f32 %v602, 0.0
  %v731 = vmax.f32 %v605, 0.0
  %v732 = vmax.f32 %v610, 0.0
  %v733 = vmax.f32 %v613, 0.0
  %v734 = vmax.f32 %v618, 0.0
  %v735 = vmax.f32 %v621, 0.0
  %v736 = vmax.f32 %v626, 0.0
  %v737 = vmax.f32 %v629, 0.0
  %v738 = vmax.f32 %v634, 0.0
  %v739 = vmax.f32 %v637, 0.0
  %v740 = vmax.f32 %v642, 0.0
  %v741 = vmax.f32 %v645, 0.0
  %v742 = vmax.f32 %v650, 0.0
  %v743 = vmax.f32 %v653, 0.0
  %v744 = vmax.f32 %v658, 0.0
  %v745 = vmax.f32 %v661, 0.0
  %v746 = vmax.f32 %v666, 0.0
  %v747 = vmax.f32 %v669, 0.0
  %v748 = vmax.f32 %v674, 0.0
  %v749 = vmax.f32 %v677, 0.0
  %v750 = vmax.f32 %v682, 0.0
  %v751 = vmax.f32 %v685, 0.0
  %v752 = vpack.c.bf16 %v689, %v688
  %v753 = vpack.c.bf16 %v691, %v690
  %v754 = vpack.c.bf16 %v693, %v692
  %v755 = vpack.c.bf16 %v695, %v694
  %v756 = vpack.c.bf16 %v697, %v696
  %v757 = vpack.c.bf16 %v699, %v698
  %v758 = vpack.c.bf16 %v701, %v700
  %v759 = vpack.c.bf16 %v703, %v702
  %v760 = vpack.c.bf16 %v705, %v704
  %v761 = vpack.c.bf16 %v707, %v706
  %v762 = vpack.c.bf16 %v709, %v708
  %v763 = vpack.c.bf16 %v711, %v710
  %v764 = vpack.c.bf16 %v713, %v712
  %v765 = vpack.c.bf16 %v715, %v714
  %v766 = vpack.c.bf16 %v717, %v716
  %v767 = vpack.c.bf16 %v719, %v718
  %v768 = vpack.c.bf16 %v721, %v720
  %v769 = vpack.c.bf16 %v723, %v722
  %v770 = vpack.c.bf16 %v725, %v724
  %v771 = vpack.c.bf16 %v727, %v726
  %v772 = vpack.c.bf16 %v729, %v728
  %v773 = vpack.c.bf16 %v731, %v730
  %v774 = vpack.c.bf16 %v733, %v732
  %v775 = vpack.c.bf16 %v735, %v734
  %v776 = vpack.c.bf16 %v737, %v736
  %v777 = vpack.c.bf16 %v739, %v738
  %v778 = vpack.c.bf16 %v741, %v740
  %v779 = vpack.c.bf16 %v743, %v742
  %v780 = vpack.c.bf16 %v745, %v744
  %v781 = vpack.c.bf16 %v747, %v746
  %v782 = vpack.c.bf16 %v749, %v748
  %v783 = vpack.c.bf16 %v751, %v750
  %v784 = vld [vmem:[%s3] sm:$0xff]
  %v785 = vld [vmem:[%s3 + $0x8] sm:$0xff]
  %v786 = vld [vmem:[%s3 + $0x10] sm:$0xff]
  %v787 = vld [vmem:[%s3 + $0x18] sm:$0xff]
  %v788 = vld [vmem:[%s3 + $0x20] sm:$0xff]
  %v789 = vld [vmem:[%s3 + $0x28] sm:$0xff]
  %v790 = vld [vmem:[%s3 + $0x30] sm:$0xff]
  %v791 = vld [vmem:[%s3 + $0x38] sm:$0xff]
  %v792 = vld [vmem:[%s3 + $0x40] sm:$0xff]
  %v793 = vld [vmem:[%s3 + $0x48] sm:$0xff]
  %v794 = vld [vmem:[%s3 + $0x50] sm:$0xff]
  %v795 = vld [vmem:[%s3 + $0x58] sm:$0xff]
  %v796 = vld [vmem:[%s3 + $0x60] sm:$0xff]
  %v797 = vld [vmem:[%s3 + $0x68] sm:$0xff]
  %v798 = vld [vmem:[%s3 + $0x70] sm:$0xff]
  %v799 = vld [vmem:[%s3 + $0x78] sm:$0xff]
  %v800 = vld [vmem:[%s4] sm:$0x3]
  %v802 = vlaneseq
  %v803 = vshrl.u32 %v802, 7
  %v804 = vsub.s32 0, %v803
  %v805 = vrot.slane %v800, %v804
  %v806 = vlaneseq
  %v807 = vshrl.u32 %v806, 7
  %v808 = vsub.s32 1, %v807
  %v809 = vrot.slane %v800, %v808
  %v828 = vunpack.c.l.b16 %v784
  %v829 = vunpack.c.h.b16 %v784
  %v830 = vunpack.c.l.b16 %v785
  %v831 = vunpack.c.h.b16 %v785
  %v832 = vunpack.c.l.b16 %v786
  %v833 = vunpack.c.h.b16 %v786
  %v834 = vunpack.c.l.b16 %v787
  %v835 = vunpack.c.h.b16 %v787
  %v836 = vunpack.c.l.b16 %v788
  %v837 = vunpack.c.h.b16 %v788
  %v838 = vunpack.c.l.b16 %v789
  %v839 = vunpack.c.h.b16 %v789
  %v840 = vunpack.c.l.b16 %v790
  %v841 = vunpack.c.h.b16 %v790
  %v842 = vunpack.c.l.b16 %v791
  %v843 = vunpack.c.h.b16 %v791
  %v844 = vunpack.c.l.b16 %v792
  %v845 = vunpack.c.h.b16 %v792
  %v846 = vunpack.c.l.b16 %v793
  %v847 = vunpack.c.h.b16 %v793
  %v848 = vunpack.c.l.b16 %v794
  %v849 = vunpack.c.h.b16 %v794
  %v850 = vunpack.c.l.b16 %v795
  %v851 = vunpack.c.h.b16 %v795
  %v852 = vunpack.c.l.b16 %v796
  %v853 = vunpack.c.h.b16 %v796
  %v854 = vunpack.c.l.b16 %v797
  %v855 = vunpack.c.h.b16 %v797
  %v856 = vunpack.c.l.b16 %v798
  %v857 = vunpack.c.h.b16 %v798
  %v858 = vunpack.c.l.b16 %v799
  %v859 = vunpack.c.h.b16 %v799
  %v860 = vpack.c.b16 %v830, %v828
  %v861 = vpack.c.b16 %v831, %v829
  %v862 = vpack.c.b16 %v834, %v832
  %v863 = vpack.c.b16 %v835, %v833
  %v864 = vpack.c.b16 %v838, %v836
  %v865 = vpack.c.b16 %v839, %v837
  %v866 = vpack.c.b16 %v842, %v840
  %v867 = vpack.c.b16 %v843, %v841
  %v868 = vpack.c.b16 %v846, %v844
  %v869 = vpack.c.b16 %v847, %v845
  %v870 = vpack.c.b16 %v850, %v848
  %v871 = vpack.c.b16 %v851, %v849
  %v872 = vpack.c.b16 %v854, %v852
  %v873 = vpack.c.b16 %v855, %v853
  %v874 = vpack.c.b16 %v858, %v856
  %v875 = vpack.c.b16 %v859, %v857
  %892 = vmatprep.subr.bf16.mxu0 %v861
  %893 = vmatpush1.bf16.msra.mxu0 %v860
  %894 = vmatprep.subr.bf16.mxu0 %v863
  %895 = vmatpush1.bf16.msra.mxu0 %v862
  %896 = vmatprep.subr.bf16.mxu0 %v865
  %897 = vmatpush1.bf16.msra.mxu0 %v864
  %898 = vmatprep.subr.bf16.mxu0 %v867
  %899 = vmatpush1.bf16.msra.mxu0 %v866
  %900 = vmatprep.subr.bf16.mxu0 %v869
  %901 = vmatpush1.bf16.msra.mxu0 %v868
  %902 = vmatprep.subr.bf16.mxu0 %v871
  %903 = vmatpush1.bf16.msra.mxu0 %v870
  %904 = vmatprep.subr.bf16.mxu0 %v873
  %905 = vmatpush1.bf16.msra.mxu0 %v872
  %906 = vmatprep.subr.bf16.mxu0 %v875
  %907 = vmatpush1.bf16.msra.mxu0 %v874
  %908 = vmatprep.subr.bf16.mxu0 0
  %909 = vmatpush1.bf16.msra.mxu0 0
  %910 = vmatprep.subr.bf16.mxu0 0
  %911 = vmatpush1.bf16.msra.mxu0 0
  %912 = vmatprep.subr.bf16.mxu0 0
  %913 = vmatpush1.bf16.msra.mxu0 0
  %914 = vmatprep.subr.bf16.mxu0 0
  %915 = vmatpush1.bf16.msra.mxu0 0
  %916 = vmatprep.subr.bf16.mxu0 0
  %917 = vmatpush1.bf16.msra.mxu0 0
  %918 = vmatprep.subr.bf16.mxu0 0
  %919 = vmatpush1.bf16.msra.mxu0 0
  %920 = vmatprep.subr.bf16.mxu0 0
  %921 = vmatpush1.bf16.msra.mxu0 0
  %922 = vmatprep.subr.bf16.mxu0 0
  %923 = vmatpush1.bf16.msra.mxu0 0
  %924 = vmatprep.mubr.bf16.mxu0 0
  %925 = vmatmul.mubr.bf16.gmra.mrb[0].mxu0 %v752
  %v926 = vpop.f32.mrb[0].mxu0
  %v927 = vadd.f32 %v805, %v926
  %v928 = vpop.f32.mrb[0].mxu0
  %v929 = vadd.f32 %v809, %v928
  %v930 = vpop.f32.mrb[0].mxu0
  %v931 = vadd.f32 %v805, %v930
  %v932 = vpop.f32.mrb[0].mxu0
  %v933 = vadd.f32 %v809, %v932
  %934 = vmatprep.mubr.bf16.mxu0 0
  %935 = vmatmul.mubr.bf16.gmra.mrb[0].mxu0 %v753
  %v936 = vpop.f32.mrb[0].mxu0
  %v937 = vadd.f32 %v805, %v936
  %v938 = vpop.f32.mrb[0].mxu0
  %v939 = vadd.f32 %v809, %v938
  %v940 = vpop.f32.mrb[0].mxu0
  %v941 = vadd.f32 %v805, %v940
  %v942 = vpop.f32.mrb[0].mxu0
  %v943 = vadd.f32 %v809, %v942
  %944 = vmatprep.mubr.bf16.mxu0 0
  %945 = vmatmul.mubr.bf16.gmra.mrb[0].mxu0 %v754
  %v946 = vpop.f32.mrb[0].mxu0
  %v947 = vadd.f32 %v805, %v946
  %v948 = vpop.f32.mrb[0].mxu0
  %v949 = vadd.f32 %v809, %v948
  %v950 = vpop.f32.mrb[0].mxu0
  %v951 = vadd.f32 %v805, %v950
  %v952 = vpop.f32.mrb[0].mxu0
  %v953 = vadd.f32 %v809, %v952
  %954 = vmatprep.mubr.bf16.mxu0 0
  %955 = vmatmul.mubr.bf16.gmra.mrb[0].mxu0 %v755
  %v956 = vpop.f32.mrb[0].mxu0
  %v957 = vadd.f32 %v805, %v956
  %v958 = vpop.f32.mrb[0].mxu0
  %v959 = vadd.f32 %v809, %v958
  %v960 = vpop.f32.mrb[0].mxu0
  %v961 = vadd.f32 %v805, %v960
  %v962 = vpop.f32.mrb[0].mxu0
  %v963 = vadd.f32 %v809, %v962
  %964 = vmatprep.mubr.bf16.mxu0 0
  %965 = vmatmul.mubr.bf16.gmra.mrb[0].mxu0 %v756
  %v966 = vpop.f32.mrb[0].mxu0
  %v967 = vadd.f32 %v805, %v966
  %v968 = vpop.f32.mrb[0].mxu0
  %v969 = vadd.f32 %v809, %v968
  %v970 = vpop.f32.mrb[0].mxu0
  %v971 = vadd.f32 %v805, %v970
  %v972 = vpop.f32.mrb[0].mxu0
  %v973 = vadd.f32 %v809, %v972
  %974 = vmatprep.mubr.bf16.mxu0 0
  %975 = vmatmul.mubr.bf16.gmra.mrb[0].mxu0 %v757
  %v976 = vpop.f32.mrb[0].mxu0
  %v977 = vadd.f32 %v805, %v976
  %v978 = vpop.f32.mrb[0].mxu0
  %v979 = vadd.f32 %v809, %v978
  %v980 = vpop.f32.mrb[0].mxu0
  %v981 = vadd.f32 %v805, %v980
  %v982 = vpop.f32.mrb[0].mxu0
  %v983 = vadd.f32 %v809, %v982
  %984 = vmatprep.mubr.bf16.mxu0 0
  %985 = vmatmul.mubr.bf16.gmra.mrb[0].mxu0 %v758
  %v986 = vpop.f32.mrb[0].mxu0
  %v987 = vadd.f32 %v805, %v986
  %v988 = vpop.f32.mrb[0].mxu0
  %v989 = vadd.f32 %v809, %v988
  %v990 = vpop.f32.mrb[0].mxu0
  %v991 = vadd.f32 %v805, %v990
  %v992 = vpop.f32.mrb[0].mxu0
  %v993 = vadd.f32 %v809, %v992
  %994 = vmatprep.mubr.bf16.mxu0 0
  %995 = vmatmul.mubr.bf16.gmra.mrb[0].mxu0 %v759
  %v996 = vpop.f32.mrb[0].mxu0
  %v997 = vadd.f32 %v805, %v996
  %v998 = vpop.f32.mrb[0].mxu0
  %v999 = vadd.f32 %v809, %v998
  %v1000 = vpop.f32.mrb[0].mxu0
  %v1001 = vadd.f32 %v805, %v1000
  %v1002 = vpop.f32.mrb[0].mxu0
  %v1003 = vadd.f32 %v809, %v1002
  %1004 = vmatprep.mubr.bf16.mxu0 0
  %1005 = vmatmul.mubr.bf16.gmra.mrb[0].mxu0 %v760
  %v1006 = vpop.f32.mrb[0].mxu0
  %v1007 = vadd.f32 %v805, %v1006
  %v1008 = vpop.f32.mrb[0].mxu0
  %v1009 = vadd.f32 %v809, %v1008
  %v1010 = vpop.f32.mrb[0].mxu0
  %v1011 = vadd.f32 %v805, %v1010
  %v1012 = vpop.f32.mrb[0].mxu0
  %v1013 = vadd.f32 %v809, %v1012
  %1014 = vmatprep.mubr.bf16.mxu0 0
  %1015 = vmatmul.mubr.bf16.gmra.mrb[0].mxu0 %v761
  %v1016 = vpop.f32.mrb[0].mxu0
  %v1017 = vadd.f32 %v805, %v1016
  %v1018 = vpop.f32.mrb[0].mxu0
  %v1019 = vadd.f32 %v809, %v1018
  %v1020 = vpop.f32.mrb[0].mxu0
  %v1021 = vadd.f32 %v805, %v1020
  %v1022 = vpop.f32.mrb[0].mxu0
  %v1023 = vadd.f32 %v809, %v1022
  %1024 = vmatprep.mubr.bf16.mxu0 0
  %1025 = vmatmul.mubr.bf16.gmra.mrb[0].mxu0 %v762
  %v1026 = vpop.f32.mrb[0].mxu0
  %v1027 = vadd.f32 %v805, %v1026
  %v1028 = vpop.f32.mrb[0].mxu0
  %v1029 = vadd.f32 %v809, %v1028
  %v1030 = vpop.f32.mrb[0].mxu0
  %v1031 = vadd.f32 %v805, %v1030
  %v1032 = vpop.f32.mrb[0].mxu0
  %v1033 = vadd.f32 %v809, %v1032
  %1034 = vmatprep.mubr.bf16.mxu0 0
  %1035 = vmatmul.mubr.bf16.gmra.mrb[0].mxu0 %v763
  %v1036 = vpop.f32.mrb[0].mxu0
  %v1037 = vadd.f32 %v805, %v1036
  %v1038 = vpop.f32.mrb[0].mxu0
  %v1039 = vadd.f32 %v809, %v1038
  %v1040 = vpop.f32.mrb[0].mxu0
  %v1041 = vadd.f32 %v805, %v1040
  %v1042 = vpop.f32.mrb[0].mxu0
  %v1043 = vadd.f32 %v809, %v1042
  %1044 = vmatprep.mubr.bf16.mxu0 0
  %1045 = vmatmul.mubr.bf16.gmra.mrb[0].mxu0 %v764
  %v1046 = vpop.f32.mrb[0].mxu0
  %v1047 = vadd.f32 %v805, %v1046
  %v1048 = vpop.f32.mrb[0].mxu0
  %v1049 = vadd.f32 %v809, %v1048
  %v1050 = vpop.f32.mrb[0].mxu0
  %v1051 = vadd.f32 %v805, %v1050
  %v1052 = vpop.f32.mrb[0].mxu0
  %v1053 = vadd.f32 %v809, %v1052
  %1054 = vmatprep.mubr.bf16.mxu0 0
  %1055 = vmatmul.mubr.bf16.gmra.mrb[0].mxu0 %v765
  %v1056 = vpop.f32.mrb[0].mxu0
  %v1057 = vadd.f32 %v805, %v1056
  %v1058 = vpop.f32.mrb[0].mxu0
  %v1059 = vadd.f32 %v809, %v1058
  %v1060 = vpop.f32.mrb[0].mxu0
  %v1061 = vadd.f32 %v805, %v1060
  %v1062 = vpop.f32.mrb[0].mxu0
  %v1063 = vadd.f32 %v809, %v1062
  %1064 = vmatprep.mubr.bf16.mxu0 0
  %1065 = vmatmul.mubr.bf16.gmra.mrb[0].mxu0 %v766
  %v1066 = vpop.f32.mrb[0].mxu0
  %v1067 = vadd.f32 %v805, %v1066
  %v1068 = vpop.f32.mrb[0].mxu0
  %v1069 = vadd.f32 %v809, %v1068
  %v1070 = vpop.f32.mrb[0].mxu0
  %v1071 = vadd.f32 %v805, %v1070
  %v1072 = vpop.f32.mrb[0].mxu0
  %v1073 = vadd.f32 %v809, %v1072
  %1074 = vmatprep.mubr.bf16.mxu0 0
  %1075 = vmatmul.mubr.bf16.gmra.mrb[0].mxu0 %v767
  %v1076 = vpop.f32.mrb[0].mxu0
  %v1077 = vadd.f32 %v805, %v1076
  %v1078 = vpop.f32.mrb[0].mxu0
  %v1079 = vadd.f32 %v809, %v1078
  %v1080 = vpop.f32.mrb[0].mxu0
  %v1081 = vadd.f32 %v805, %v1080
  %v1082 = vpop.f32.mrb[0].mxu0
  %v1083 = vadd.f32 %v809, %v1082
  %1084 = vmatprep.mubr.bf16.mxu0 0
  %1085 = vmatmul.mubr.bf16.gmra.mrb[0].mxu0 %v768
  %v1086 = vpop.f32.mrb[0].mxu0
  %v1087 = vadd.f32 %v805, %v1086
  %v1088 = vpop.f32.mrb[0].mxu0
  %v1089 = vadd.f32 %v809, %v1088
  %v1090 = vpop.f32.mrb[0].mxu0
  %v1091 = vadd.f32 %v805, %v1090
  %v1092 = vpop.f32.mrb[0].mxu0
  %v1093 = vadd.f32 %v809, %v1092
  %1094 = vmatprep.mubr.bf16.mxu0 0
  %1095 = vmatmul.mubr.bf16.gmra.mrb[0].mxu0 %v769
  %v1096 = vpop.f32.mrb[0].mxu0
  %v1097 = vadd.f32 %v805, %v1096
  %v1098 = vpop.f32.mrb[0].mxu0
  %v1099 = vadd.f32 %v809, %v1098
  %v1100 = vpop.f32.mrb[0].mxu0
  %v1101 = vadd.f32 %v805, %v1100
  %v1102 = vpop.f32.mrb[0].mxu0
  %v1103 = vadd.f32 %v809, %v1102
  %1104 = vmatprep.mubr.bf16.mxu0 0
  %1105 = vmatmul.mubr.bf16.gmra.mrb[0].mxu0 %v770
  %v1106 = vpop.f32.mrb[0].mxu0
  %v1107 = vadd.f32 %v805, %v1106
  %v1108 = vpop.f32.mrb[0].mxu0
  %v1109 = vadd.f32 %v809, %v1108
  %v1110 = vpop.f32.mrb[0].mxu0
  %v1111 = vadd.f32 %v805, %v1110
  %v1112 = vpop.f32.mrb[0].mxu0
  %v1113 = vadd.f32 %v809, %v1112
  %1114 = vmatprep.mubr.bf16.mxu0 0
  %1115 = vmatmul.mubr.bf16.gmra.mrb[0].mxu0 %v771
  %v1116 = vpop.f32.mrb[0].mxu0
  %v1117 = vadd.f32 %v805, %v1116
  %v1118 = vpop.f32.mrb[0].mxu0
  %v1119 = vadd.f32 %v809, %v1118
  %v1120 = vpop.f32.mrb[0].mxu0
  %v1121 = vadd.f32 %v805, %v1120
  %v1122 = vpop.f32.mrb[0].mxu0
  %v1123 = vadd.f32 %v809, %v1122
  %1124 = vmatprep.mubr.bf16.mxu0 0
  %1125 = vmatmul.mubr.bf16.gmra.mrb[0].mxu0 %v772
  %v1126 = vpop.f32.mrb[0].mxu0
  %v1127 = vadd.f32 %v805, %v1126
  %v1128 = vpop.f32.mrb[0].mxu0
  %v1129 = vadd.f32 %v809, %v1128
  %v1130 = vpop.f32.mrb[0].mxu0
  %v1131 = vadd.f32 %v805, %v1130
  %v1132 = vpop.f32.mrb[0].mxu0
  %v1133 = vadd.f32 %v809, %v1132
  %1134 = vmatprep.mubr.bf16.mxu0 0
  %1135 = vmatmul.mubr.bf16.gmra.mrb[0].mxu0 %v773
  %v1136 = vpop.f32.mrb[0].mxu0
  %v1137 = vadd.f32 %v805, %v1136
  %v1138 = vpop.f32.mrb[0].mxu0
  %v1139 = vadd.f32 %v809, %v1138
  %v1140 = vpop.f32.mrb[0].mxu0
  %v1141 = vadd.f32 %v805, %v1140
  %v1142 = vpop.f32.mrb[0].mxu0
  %v1143 = vadd.f32 %v809, %v1142
  %1144 = vmatprep.mubr.bf16.mxu0 0
  %1145 = vmatmul.mubr.bf16.gmra.mrb[0].mxu0 %v774
  %v1146 = vpop.f32.mrb[0].mxu0
  %v1147 = vadd.f32 %v805, %v1146
  %v1148 = vpop.f32.mrb[0].mxu0
  %v1149 = vadd.f32 %v809, %v1148
  %v1150 = vpop.f32.mrb[0].mxu0
  %v1151 = vadd.f32 %v805, %v1150
  %v1152 = vpop.f32.mrb[0].mxu0
  %v1153 = vadd.f32 %v809, %v1152
  %1154 = vmatprep.mubr.bf16.mxu0 0
  %1155 = vmatmul.mubr.bf16.gmra.mrb[0].mxu0 %v775
  %v1156 = vpop.f32.mrb[0].mxu0
  %v1157 = vadd.f32 %v805, %v1156
  %v1158 = vpop.f32.mrb[0].mxu0
  %v1159 = vadd.f32 %v809, %v1158
  %v1160 = vpop.f32.mrb[0].mxu0
  %v1161 = vadd.f32 %v805, %v1160
  %v1162 = vpop.f32.mrb[0].mxu0
  %v1163 = vadd.f32 %v809, %v1162
  %1164 = vmatprep.mubr.bf16.mxu0 0
  %1165 = vmatmul.mubr.bf16.gmra.mrb[0].mxu0 %v776
  %v1166 = vpop.f32.mrb[0].mxu0
  %v1167 = vadd.f32 %v805, %v1166
  %v1168 = vpop.f32.mrb[0].mxu0
  %v1169 = vadd.f32 %v809, %v1168
  %v1170 = vpop.f32.mrb[0].mxu0
  %v1171 = vadd.f32 %v805, %v1170
  %v1172 = vpop.f32.mrb[0].mxu0
  %v1173 = vadd.f32 %v809, %v1172
  %1174 = vmatprep.mubr.bf16.mxu0 0
  %1175 = vmatmul.mubr.bf16.gmra.mrb[0].mxu0 %v777
  %v1176 = vpop.f32.mrb[0].mxu0
  %v1177 = vadd.f32 %v805, %v1176
  %v1178 = vpop.f32.mrb[0].mxu0
  %v1179 = vadd.f32 %v809, %v1178
  %v1180 = vpop.f32.mrb[0].mxu0
  %v1181 = vadd.f32 %v805, %v1180
  %v1182 = vpop.f32.mrb[0].mxu0
  %v1183 = vadd.f32 %v809, %v1182
  %1184 = vmatprep.mubr.bf16.mxu0 0
  %1185 = vmatmul.mubr.bf16.gmra.mrb[0].mxu0 %v778
  %v1186 = vpop.f32.mrb[0].mxu0
  %v1187 = vadd.f32 %v805, %v1186
  %v1188 = vpop.f32.mrb[0].mxu0
  %v1189 = vadd.f32 %v809, %v1188
  %v1190 = vpop.f32.mrb[0].mxu0
  %v1191 = vadd.f32 %v805, %v1190
  %v1192 = vpop.f32.mrb[0].mxu0
  %v1193 = vadd.f32 %v809, %v1192
  %1194 = vmatprep.mubr.bf16.mxu0 0
  %1195 = vmatmul.mubr.bf16.gmra.mrb[0].mxu0 %v779
  %v1196 = vpop.f32.mrb[0].mxu0
  %v1197 = vadd.f32 %v805, %v1196
  %v1198 = vpop.f32.mrb[0].mxu0
  %v1199 = vadd.f32 %v809, %v1198
  %v1200 = vpop.f32.mrb[0].mxu0
  %v1201 = vadd.f32 %v805, %v1200
  %v1202 = vpop.f32.mrb[0].mxu0
  %v1203 = vadd.f32 %v809, %v1202
  %1204 = vmatprep.mubr.bf16.mxu0 0
  %1205 = vmatmul.mubr.bf16.gmra.mrb[0].mxu0 %v780
  %v1206 = vpop.f32.mrb[0].mxu0
  %v1207 = vadd.f32 %v805, %v1206
  %v1208 = vpop.f32.mrb[0].mxu0
  %v1209 = vadd.f32 %v809, %v1208
  %v1210 = vpop.f32.mrb[0].mxu0
  %v1211 = vadd.f32 %v805, %v1210
  %v1212 = vpop.f32.mrb[0].mxu0
  %v1213 = vadd.f32 %v809, %v1212
  %1214 = vmatprep.mubr.bf16.mxu0 0
  %1215 = vmatmul.mubr.bf16.gmra.mrb[0].mxu0 %v781
  %v1216 = vpop.f32.mrb[0].mxu0
  %v1217 = vadd.f32 %v805, %v1216
  %v1218 = vpop.f32.mrb[0].mxu0
  %v1219 = vadd.f32 %v809, %v1218
  %v1220 = vpop.f32.mrb[0].mxu0
  %v1221 = vadd.f32 %v805, %v1220
  %v1222 = vpop.f32.mrb[0].mxu0
  %v1223 = vadd.f32 %v809, %v1222
  %1224 = vmatprep.mubr.bf16.mxu0 0
  %1225 = vmatmul.mubr.bf16.gmra.mrb[0].mxu0 %v782
  %v1226 = vpop.f32.mrb[0].mxu0
  %v1227 = vadd.f32 %v805, %v1226
  %v1228 = vpop.f32.mrb[0].mxu0
  %v1229 = vadd.f32 %v809, %v1228
  %v1230 = vpop.f32.mrb[0].mxu0
  %v1231 = vadd.f32 %v805, %v1230
  %v1232 = vpop.f32.mrb[0].mxu0
  %v1233 = vadd.f32 %v809, %v1232
  %1234 = vmatprep.mubr.bf16.mxu0 0
  %1235 = vmatmul.mubr.bf16.gmra.mrb[0].mxu0 %v783
  %v1236 = vpop.f32.mrb[0].mxu0
  %v1237 = vadd.f32 %v805, %v1236
  %v1238 = vpop.f32.mrb[0].mxu0
  %v1239 = vadd.f32 %v809, %v1238
  %v1240 = vpop.f32.mrb[0].mxu0
  %v1241 = vadd.f32 %v805, %v1240
  %v1242 = vpop.f32.mrb[0].mxu0
  %v1243 = vadd.f32 %v809, %v1242
  %1244 = vdwg.mxu0
  %v1245 = vmax.f32 %v927, 0.0
  %v1246 = vmax.f32 %v929, 0.0
  %v1247 = vmax.f32 %v931, 0.0
  %v1248 = vmax.f32 %v933, 0.0
  %v1249 = vmax.f32 %v937, 0.0
  %v1250 = vmax.f32 %v939, 0.0
  %v1251 = vmax.f32 %v941, 0.0
  %v1252 = vmax.f32 %v943, 0.0
  %v1253 = vmax.f32 %v947, 0.0
  %v1254 = vmax.f32 %v949, 0.0
  %v1255 = vmax.f32 %v951, 0.0
  %v1256 = vmax.f32 %v953, 0.0
  %v1257 = vmax.f32 %v957, 0.0
  %v1258 = vmax.f32 %v959, 0.0
  %v1259 = vmax.f32 %v961, 0.0
  %v1260 = vmax.f32 %v963, 0.0
  %v1261 = vmax.f32 %v967, 0.0
  %v1262 = vmax.f32 %v969, 0.0
  %v1263 = vmax.f32 %v971, 0.0
  %v1264 = vmax.f32 %v973, 0.0
  %v1265 = vmax.f32 %v977, 0.0
  %v1266 = vmax.f32 %v979, 0.0
  %v1267 = vmax.f32 %v981, 0.0
  %v1268 = vmax.f32 %v983, 0.0
  %v1269 = vmax.f32 %v987, 0.0
  %v1270 = vmax.f32 %v989, 0.0
  %v1271 = vmax.f32 %v991, 0.0
  %v1272 = vmax.f32 %v993, 0.0
  %v1273 = vmax.f32 %v997, 0.0
  %v1274 = vmax.f32 %v999, 0.0
  %v1275 = vmax.f32 %v1001, 0.0
  %v1276 = vmax.f32 %v1003, 0.0
  %v1277 = vmax.f32 %v1007, 0.0
  %v1278 = vmax.f32 %v1009, 0.0
  %v1279 = vmax.f32 %v1011, 0.0
  %v1280 = vmax.f32 %v1013, 0.0
  %v1281 = vmax.f32 %v1017, 0.0
  %v1282 = vmax.f32 %v1019, 0.0
  %v1283 = vmax.f32 %v1021, 0.0
  %v1284 = vmax.f32 %v1023, 0.0
  %v1285 = vmax.f32 %v1027, 0.0
  %v1286 = vmax.f32 %v1029, 0.0
  %v1287 = vmax.f32 %v1031, 0.0
  %v1288 = vmax.f32 %v1033, 0.0
  %v1289 = vmax.f32 %v1037, 0.0
  %v1290 = vmax.f32 %v1039, 0.0
  %v1291 = vmax.f32 %v1041, 0.0
  %v1292 = vmax.f32 %v1043, 0.0
  %v1293 = vmax.f32 %v1047, 0.0
  %v1294 = vmax.f32 %v1049, 0.0
  %v1295 = vmax.f32 %v1051, 0.0
  %v1296 = vmax.f32 %v1053, 0.0
  %v1297 = vmax.f32 %v1057, 0.0
  %v1298 = vmax.f32 %v1059, 0.0
  %v1299 = vmax.f32 %v1061, 0.0
  %v1300 = vmax.f32 %v1063, 0.0
  %v1301 = vmax.f32 %v1067, 0.0
  %v1302 = vmax.f32 %v1069, 0.0
  %v1303 = vmax.f32 %v1071, 0.0
  %v1304 = vmax.f32 %v1073, 0.0
  %v1305 = vmax.f32 %v1077, 0.0
  %v1306 = vmax.f32 %v1079, 0.0
  %v1307 = vmax.f32 %v1081, 0.0
  %v1308 = vmax.f32 %v1083, 0.0
  %v1309 = vmax.f32 %v1087, 0.0
  %v1310 = vmax.f32 %v1089, 0.0
  %v1311 = vmax.f32 %v1091, 0.0
  %v1312 = vmax.f32 %v1093, 0.0
  %v1313 = vmax.f32 %v1097, 0.0
  %v1314 = vmax.f32 %v1099, 0.0
  %v1315 = vmax.f32 %v1101, 0.0
  %v1316 = vmax.f32 %v1103, 0.0
  %v1317 = vmax.f32 %v1107, 0.0
  %v1318 = vmax.f32 %v1109, 0.0
  %v1319 = vmax.f32 %v1111, 0.0
  %v1320 = vmax.f32 %v1113, 0.0
  %v1321 = vmax.f32 %v1117, 0.0
  %v1322 = vmax.f32 %v1119, 0.0
  %v1323 = vmax.f32 %v1121, 0.0
  %v1324 = vmax.f32 %v1123, 0.0
  %v1325 = vmax.f32 %v1127, 0.0
  %v1326 = vmax.f32 %v1129, 0.0
  %v1327 = vmax.f32 %v1131, 0.0
  %v1328 = vmax.f32 %v1133, 0.0
  %v1329 = vmax.f32 %v1137, 0.0
  %v1330 = vmax.f32 %v1139, 0.0
  %v1331 = vmax.f32 %v1141, 0.0
  %v1332 = vmax.f32 %v1143, 0.0
  %v1333 = vmax.f32 %v1147, 0.0
  %v1334 = vmax.f32 %v1149, 0.0
  %v1335 = vmax.f32 %v1151, 0.0
  %v1336 = vmax.f32 %v1153, 0.0
  %v1337 = vmax.f32 %v1157, 0.0
  %v1338 = vmax.f32 %v1159, 0.0
  %v1339 = vmax.f32 %v1161, 0.0
  %v1340 = vmax.f32 %v1163, 0.0
  %v1341 = vmax.f32 %v1167, 0.0
  %v1342 = vmax.f32 %v1169, 0.0
  %v1343 = vmax.f32 %v1171, 0.0
  %v1344 = vmax.f32 %v1173, 0.0
  %v1345 = vmax.f32 %v1177, 0.0
  %v1346 = vmax.f32 %v1179, 0.0
  %v1347 = vmax.f32 %v1181, 0.0
  %v1348 = vmax.f32 %v1183, 0.0
  %v1349 = vmax.f32 %v1187, 0.0
  %v1350 = vmax.f32 %v1189, 0.0
  %v1351 = vmax.f32 %v1191, 0.0
  %v1352 = vmax.f32 %v1193, 0.0
  %v1353 = vmax.f32 %v1197, 0.0
  %v1354 = vmax.f32 %v1199, 0.0
  %v1355 = vmax.f32 %v1201, 0.0
  %v1356 = vmax.f32 %v1203, 0.0
  %v1357 = vmax.f32 %v1207, 0.0
  %v1358 = vmax.f32 %v1209, 0.0
  %v1359 = vmax.f32 %v1211, 0.0
  %v1360 = vmax.f32 %v1213, 0.0
  %v1361 = vmax.f32 %v1217, 0.0
  %v1362 = vmax.f32 %v1219, 0.0
  %v1363 = vmax.f32 %v1221, 0.0
  %v1364 = vmax.f32 %v1223, 0.0
  %v1365 = vmax.f32 %v1227, 0.0
  %v1366 = vmax.f32 %v1229, 0.0
  %v1367 = vmax.f32 %v1231, 0.0
  %v1368 = vmax.f32 %v1233, 0.0
  %v1369 = vmax.f32 %v1237, 0.0
  %v1370 = vmax.f32 %v1239, 0.0
  %v1371 = vmax.f32 %v1241, 0.0
  %v1372 = vmax.f32 %v1243, 0.0
  %v1373 = vpack.c.bf16 %v1247, %v1245
  %v1374 = vpack.c.bf16 %v1248, %v1246
  %v1375 = vpack.c.bf16 %v1251, %v1249
  %v1376 = vpack.c.bf16 %v1252, %v1250
  %v1377 = vpack.c.bf16 %v1255, %v1253
  %v1378 = vpack.c.bf16 %v1256, %v1254
  %v1379 = vpack.c.bf16 %v1259, %v1257
  %v1380 = vpack.c.bf16 %v1260, %v1258
  %v1381 = vpack.c.bf16 %v1263, %v1261
  %v1382 = vpack.c.bf16 %v1264, %v1262
  %v1383 = vpack.c.bf16 %v1267, %v1265
  %v1384 = vpack.c.bf16 %v1268, %v1266
  %v1385 = vpack.c.bf16 %v1271, %v1269
  %v1386 = vpack.c.bf16 %v1272, %v1270
  %v1387 = vpack.c.bf16 %v1275, %v1273
  %v1388 = vpack.c.bf16 %v1276, %v1274
  %v1389 = vpack.c.bf16 %v1279, %v1277
  %v1390 = vpack.c.bf16 %v1280, %v1278
  %v1391 = vpack.c.bf16 %v1283, %v1281
  %v1392 = vpack.c.bf16 %v1284, %v1282
  %v1393 = vpack.c.bf16 %v1287, %v1285
  %v1394 = vpack.c.bf16 %v1288, %v1286
  %v1395 = vpack.c.bf16 %v1291, %v1289
  %v1396 = vpack.c.bf16 %v1292, %v1290
  %v1397 = vpack.c.bf16 %v1295, %v1293
  %v1398 = vpack.c.bf16 %v1296, %v1294
  %v1399 = vpack.c.bf16 %v1299, %v1297
  %v1400 = vpack.c.bf16 %v1300, %v1298
  %v1401 = vpack.c.bf16 %v1303, %v1301
  %v1402 = vpack.c.bf16 %v1304, %v1302
  %v1403 = vpack.c.bf16 %v1307, %v1305
  %v1404 = vpack.c.bf16 %v1308, %v1306
  %v1405 = vpack.c.bf16 %v1311, %v1309
  %v1406 = vpack.c.bf16 %v1312, %v1310
  %v1407 = vpack.c.bf16 %v1315, %v1313
  %v1408 = vpack.c.bf16 %v1316, %v1314
  %v1409 = vpack.c.bf16 %v1319, %v1317
  %v1410 = vpack.c.bf16 %v1320, %v1318
  %v1411 = vpack.c.bf16 %v1323, %v1321
  %v1412 = vpack.c.bf16 %v1324, %v1322
  %v1413 = vpack.c.bf16 %v1327, %v1325
  %v1414 = vpack.c.bf16 %v1328, %v1326
  %v1415 = vpack.c.bf16 %v1331, %v1329
  %v1416 = vpack.c.bf16 %v1332, %v1330
  %v1417 = vpack.c.bf16 %v1335, %v1333
  %v1418 = vpack.c.bf16 %v1336, %v1334
  %v1419 = vpack.c.bf16 %v1339, %v1337
  %v1420 = vpack.c.bf16 %v1340, %v1338
  %v1421 = vpack.c.bf16 %v1343, %v1341
  %v1422 = vpack.c.bf16 %v1344, %v1342
  %v1423 = vpack.c.bf16 %v1347, %v1345
  %v1424 = vpack.c.bf16 %v1348, %v1346
  %v1425 = vpack.c.bf16 %v1351, %v1349
  %v1426 = vpack.c.bf16 %v1352, %v1350
  %v1427 = vpack.c.bf16 %v1355, %v1353
  %v1428 = vpack.c.bf16 %v1356, %v1354
  %v1429 = vpack.c.bf16 %v1359, %v1357
  %v1430 = vpack.c.bf16 %v1360, %v1358
  %v1431 = vpack.c.bf16 %v1363, %v1361
  %v1432 = vpack.c.bf16 %v1364, %v1362
  %v1433 = vpack.c.bf16 %v1367, %v1365
  %v1434 = vpack.c.bf16 %v1368, %v1366
  %v1435 = vpack.c.bf16 %v1371, %v1369
  %v1436 = vpack.c.bf16 %v1372, %v1370
  %v1437 = vld [vmem:[%s5] sm:$0xf]
  %v1440 = vunpack.c.l.s4 1966171168
  %v1441 = vunpack.c.0.s8 %v1440
  %v1442 = vlaneseq
  %v1443 = vshrl.u32 %v1442, 7
  %v1444 = vsub.s32 %v1441, %v1443
  %v1445 = vrot.slane %v1437, %v1444
  %v1446 = vcombine.high %v1445, %v1445
  %v1448 = vunpack.c.l.s4 1966171168
  %v1449 = vunpack.c.0.s8 %v1448
  %v1450 = vlaneseq
  %v1451 = vshrl.u32 %v1450, 7
  %v1452 = vsub.s32 %v1449, %v1451
  %v1453 = vrot.slane %v1445, %v1452
  %v1455 = vunpack.c.l.s4 1966171168
  %v1456 = vunpack.c.0.s8 %v1455
  %v1457 = vlaneseq
  %v1458 = vshrl.u32 %v1457, 7
  %v1459 = vsub.s32 %v1456, %v1458
  %v1460 = vrot.slane %v1446, %v1459
  %v1461 = vcombine.high %v1453, %v1453
  %v1462 = vcombine.high %v1460, %v1460
  %1467 = vmatprep.subr.bf16.mxu0 %v1374
  %1468 = vmatpush1.bf16.msra.mxu0 %v1373
  %1469 = vmatprep.subr.bf16.mxu0 %v1376
  %1470 = vmatpush1.bf16.msra.mxu0 %v1375
  %1471 = vmatprep.subr.bf16.mxu0 %v1378
  %1472 = vmatpush1.bf16.msra.mxu0 %v1377
  %1473 = vmatprep.subr.bf16.mxu0 %v1380
  %1474 = vmatpush1.bf16.msra.mxu0 %v1379
  %1475 = vmatprep.subr.bf16.mxu0 %v1382
  %1476 = vmatpush1.bf16.msra.mxu0 %v1381
  %1477 = vmatprep.subr.bf16.mxu0 %v1384
  %1478 = vmatpush1.bf16.msra.mxu0 %v1383
  %1479 = vmatprep.subr.bf16.mxu0 %v1386
  %1480 = vmatpush1.bf16.msra.mxu0 %v1385
  %1481 = vmatprep.subr.bf16.mxu0 %v1388
  %1482 = vmatpush1.bf16.msra.mxu0 %v1387
  %1483 = vmatprep.subr.bf16.mxu0 %v1390
  %1484 = vmatpush1.bf16.msra.mxu0 %v1389
  %1485 = vmatprep.subr.bf16.mxu0 %v1392
  %1486 = vmatpush1.bf16.msra.mxu0 %v1391
  %1487 = vmatprep.subr.bf16.mxu0 %v1394
  %1488 = vmatpush1.bf16.msra.mxu0 %v1393
  %1489 = vmatprep.subr.bf16.mxu0 %v1396
  %1490 = vmatpush1.bf16.msra.mxu0 %v1395
  %1491 = vmatprep.subr.bf16.mxu0 %v1398
  %1492 = vmatpush1.bf16.msra.mxu0 %v1397
  %1493 = vmatprep.subr.bf16.mxu0 %v1400
  %1494 = vmatpush1.bf16.msra.mxu0 %v1399
  %1495 = vmatprep.subr.bf16.mxu0 %v1402
  %1496 = vmatpush1.bf16.msra.mxu0 %v1401
  %1497 = vmatprep.subr.bf16.mxu0 %v1404
  %1498 = vmatpush1.bf16.msra.mxu0 %v1403
  %1499 = vmatprep.mubr.bf16.mxu0 %v1460
  %1500 = vmatmul.mubr.bf16.gmra.mrb[0].mxu0 %v1453
  %v1501 = vpop.f32.mrb[0].mxu0
  %v1502 = vadd.f32 0.0, %v1501
  %v1503 = vpop.f32.mrb[0].mxu0
  %v1504 = vadd.f32 0.0, %v1503
  %v1505 = vpop.f32.mrb[0].mxu0
  %v1506 = vpop.f32.mrb[0].mxu0
  %1507 = vdwg.mxu0
  %1508 = vmatprep.subr.bf16.mxu0 %v1406
  %1509 = vmatpush1.bf16.msra.mxu0 %v1405
  %1510 = vmatprep.subr.bf16.mxu0 %v1408
  %1511 = vmatpush1.bf16.msra.mxu0 %v1407
  %1512 = vmatprep.subr.bf16.mxu0 %v1410
  %1513 = vmatpush1.bf16.msra.mxu0 %v1409
  %1514 = vmatprep.subr.bf16.mxu0 %v1412
  %1515 = vmatpush1.bf16.msra.mxu0 %v1411
  %1516 = vmatprep.subr.bf16.mxu0 %v1414
  %1517 = vmatpush1.bf16.msra.mxu0 %v1413
  %1518 = vmatprep.subr.bf16.mxu0 %v1416
  %1519 = vmatpush1.bf16.msra.mxu0 %v1415
  %1520 = vmatprep.subr.bf16.mxu0 %v1418
  %1521 = vmatpush1.bf16.msra.mxu0 %v1417
  %1522 = vmatprep.subr.bf16.mxu0 %v1420
  %1523 = vmatpush1.bf16.msra.mxu0 %v1419
  %1524 = vmatprep.subr.bf16.mxu0 %v1422
  %1525 = vmatpush1.bf16.msra.mxu0 %v1421
  %1526 = vmatprep.subr.bf16.mxu0 %v1424
  %1527 = vmatpush1.bf16.msra.mxu0 %v1423
  %1528 = vmatprep.subr.bf16.mxu0 %v1426
  %1529 = vmatpush1.bf16.msra.mxu0 %v1425
  %1530 = vmatprep.subr.bf16.mxu0 %v1428
  %1531 = vmatpush1.bf16.msra.mxu0 %v1427
  %1532 = vmatprep.subr.bf16.mxu0 %v1430
  %1533 = vmatpush1.bf16.msra.mxu0 %v1429
  %1534 = vmatprep.subr.bf16.mxu0 %v1432
  %1535 = vmatpush1.bf16.msra.mxu0 %v1431
  %1536 = vmatprep.subr.bf16.mxu0 %v1434
  %1537 = vmatpush1.bf16.msra.mxu0 %v1433
  %1538 = vmatprep.subr.bf16.mxu0 %v1436
  %1539 = vmatpush1.bf16.msra.mxu0 %v1435
  %1540 = vmatprep.mubr.bf16.mxu0 %v1462
  %1541 = vmatmul.mubr.bf16.gmra.mrb[0].mxu0 %v1461
  %v1542 = vpop.f32.mrb[0].mxu0
  %v1543 = vadd.f32 %v1502, %v1542
  %v1544 = vpop.f32.mrb[0].mxu0
  %v1545 = vadd.f32 %v1504, %v1544
  %v1546 = vpop.f32.mrb[0].mxu0
  %v1547 = vpop.f32.mrb[0].mxu0
  %1548 = vdwg.mxu0
  %v1549 = vld [vmem:[%s6] sm:$0x3]
  %v1551 = vlaneseq
  %v1552 = vshrl.u32 %v1551, 7
  %v1553 = vsub.s32 0, %v1552
  %v1554 = vrot.slane %v1549, %v1553
  %v1555 = vlaneseq
  %v1556 = vshrl.u32 %v1555, 7
  %v1557 = vsub.s32 1, %v1556
  %v1558 = vrot.slane %v1549, %v1557
  %v1561 = vmul.f32 %v1543, %v1554
  %v1562 = vmul.f32 %v1545, %v1558
  %v1563 = vld [vmem:[%s7] sm:$0x3]
  %v1565 = vlaneseq
  %v1566 = vshrl.u32 %v1565, 7
  %v1567 = vsub.s32 0, %v1566
  %v1568 = vrot.slane %v1563, %v1567
  %v1569 = vlaneseq
  %v1570 = vshrl.u32 %v1569, 7
  %v1571 = vsub.s32 1, %v1570
  %v1572 = vrot.slane %v1563, %v1571
  %v1575 = vadd.f32 %v1561, %v1568
  %v1576 = vadd.f32 %v1562, %v1572
  %v1577 = vmax.f32 %v1575, 0.0
  %v1578 = vmax.f32 %v1576, 0.0
  %v1579 = vpack.c.bf16 %v1577, %v1577
  %v1580 = vpack.c.bf16 %v1578, %v1578
  %v1581 = vld [vmem:[%s8] sm:$0xff]
  %v1582 = vld [vmem:[%s8 + $0x8] sm:$0xff]
  %v1583 = vld [vmem:[%s8 + $0x10] sm:$0xff]
  %v1584 = vld [vmem:[%s8 + $0x18] sm:$0xff]
  %v1585 = vld [vmem:[%s8 + $0x20] sm:$0xff]
  %v1586 = vld [vmem:[%s8 + $0x28] sm:$0xff]
  %v1587 = vld [vmem:[%s8 + $0x30] sm:$0xff]
  %v1588 = vld [vmem:[%s8 + $0x38] sm:$0xff]
  %v1589 = vld [vmem:[%s8 + $0x40] sm:$0xff]
  %v1590 = vld [vmem:[%s8 + $0x48] sm:$0xff]
  %v1591 = vld [vmem:[%s8 + $0x50] sm:$0xff]
  %v1592 = vld [vmem:[%s8 + $0x58] sm:$0xff]
  %v1593 = vld [vmem:[%s8 + $0x60] sm:$0xff]
  %v1594 = vld [vmem:[%s8 + $0x68] sm:$0xff]
  %v1595 = vld [vmem:[%s8 + $0x70] sm:$0xff]
  %v1596 = vld [vmem:[%s8 + $0x78] sm:$0xff]
  %v1597 = vld [vmem:[%s8 + $0x80] sm:$0xff]
  %v1598 = vld [vmem:[%s8 + $0x88] sm:$0xff]
  %v1599 = vld [vmem:[%s8 + $0x90] sm:$0xff]
  %v1600 = vld [vmem:[%s8 + $0x98] sm:$0xff]
  %v1601 = vld [vmem:[%s8 + $0xa0] sm:$0xff]
  %v1602 = vld [vmem:[%s8 + $0xa8] sm:$0xff]
  %v1603 = vld [vmem:[%s8 + $0xb0] sm:$0xff]
  %v1604 = vld [vmem:[%s8 + $0xb8] sm:$0xff]
  %v1605 = vld [vmem:[%s8 + $0xc0] sm:$0xff]
  %v1606 = vld [vmem:[%s8 + $0xc8] sm:$0xff]
  %v1607 = vld [vmem:[%s8 + $0xd0] sm:$0xff]
  %v1608 = vld [vmem:[%s8 + $0xd8] sm:$0xff]
  %v1609 = vld [vmem:[%s8 + $0xe0] sm:$0xff]
  %v1610 = vld [vmem:[%s8 + $0xe8] sm:$0xff]
  %v1611 = vld [vmem:[%s8 + $0xf0] sm:$0xff]
  %v1612 = vld [vmem:[%s8 + $0xf8] sm:$0xff]
  %v1613 = vld [vmem:[%s9] sm:$0x3]
  %v1615 = vlaneseq
  %v1616 = vshrl.u32 %v1615, 7
  %v1617 = vsub.s32 0, %v1616
  %v1618 = vrot.slane %v1613, %v1617
  %v1619 = vlaneseq
  %v1620 = vshrl.u32 %v1619, 7
  %v1621 = vsub.s32 1, %v1620
  %v1622 = vrot.slane %v1613, %v1621
  %v1657 = vunpack.c.l.b16 %v1581
  %v1658 = vunpack.c.h.b16 %v1581
  %v1659 = vunpack.c.l.b16 %v1582
  %v1660 = vunpack.c.h.b16 %v1582
  %v1661 = vunpack.c.l.b16 %v1583
  %v1662 = vunpack.c.h.b16 %v1583
  %v1663 = vunpack.c.l.b16 %v1584
  %v1664 = vunpack.c.h.b16 %v1584
  %v1665 = vunpack.c.l.b16 %v1585
  %v1666 = vunpack.c.h.b16 %v1585
  %v1667 = vunpack.c.l.b16 %v1586
  %v1668 = vunpack.c.h.b16 %v1586
  %v1669 = vunpack.c.l.b16 %v1587
  %v1670 = vunpack.c.h.b16 %v1587
  %v1671 = vunpack.c.l.b16 %v1588
  %v1672 = vunpack.c.h.b16 %v1588
  %v1673 = vunpack.c.l.b16 %v1589
  %v1674 = vunpack.c.h.b16 %v1589
  %v1675 = vunpack.c.l.b16 %v1590
  %v1676 = vunpack.c.h.b16 %v1590
  %v1677 = vunpack.c.l.b16 %v1591
  %v1678 = vunpack.c.h.b16 %v1591
  %v1679 = vunpack.c.l.b16 %v1592
  %v1680 = vunpack.c.h.b16 %v1592
  %v1681 = vunpack.c.l.b16 %v1593
  %v1682 = vunpack.c.h.b16 %v1593
  %v1683 = vunpack.c.l.b16 %v1594
  %v1684 = vunpack.c.h.b16 %v1594
  %v1685 = vunpack.c.l.b16 %v1595
  %v1686 = vunpack.c.h.b16 %v1595
  %v1687 = vunpack.c.l.b16 %v1596
  %v1688 = vunpack.c.h.b16 %v1596
  %v1689 = vunpack.c.l.b16 %v1597
  %v1690 = vunpack.c.h.b16 %v1597
  %v1691 = vunpack.c.l.b16 %v1598
  %v1692 = vunpack.c.h.b16 %v1598
  %v1693 = vunpack.c.l.b16 %v1599
  %v1694 = vunpack.c.h.b16 %v1599
  %v1695 = vunpack.c.l.b16 %v1600
  %v1696 = vunpack.c.h.b16 %v1600
  %v1697 = vunpack.c.l.b16 %v1601
  %v1698 = vunpack.c.h.b16 %v1601
  %v1699 = vunpack.c.l.b16 %v1602
  %v1700 = vunpack.c.h.b16 %v1602
  %v1701 = vunpack.c.l.b16 %v1603
  %v1702 = vunpack.c.h.b16 %v1603
  %v1703 = vunpack.c.l.b16 %v1604
  %v1704 = vunpack.c.h.b16 %v1604
  %v1705 = vunpack.c.l.b16 %v1605
  %v1706 = vunpack.c.h.b16 %v1605
  %v1707 = vunpack.c.l.b16 %v1606
  %v1708 = vunpack.c.h.b16 %v1606
  %v1709 = vunpack.c.l.b16 %v1607
  %v1710 = vunpack.c.h.b16 %v1607
  %v1711 = vunpack.c.l.b16 %v1608
  %v1712 = vunpack.c.h.b16 %v1608
  %v1713 = vunpack.c.l.b16 %v1609
  %v1714 = vunpack.c.h.b16 %v1609
  %v1715 = vunpack.c.l.b16 %v1610
  %v1716 = vunpack.c.h.b16 %v1610
  %v1717 = vunpack.c.l.b16 %v1611
  %v1718 = vunpack.c.h.b16 %v1611
  %v1719 = vunpack.c.l.b16 %v1612
  %v1720 = vunpack.c.h.b16 %v1612
  %v1721 = vpack.c.b16 %v1659, %v1657
  %v1722 = vpack.c.b16 %v1660, %v1658
  %v1723 = vpack.c.b16 %v1663, %v1661
  %v1724 = vpack.c.b16 %v1664, %v1662
  %v1725 = vpack.c.b16 %v1667, %v1665
  %v1726 = vpack.c.b16 %v1668, %v1666
  %v1727 = vpack.c.b16 %v1671, %v1669
  %v1728 = vpack.c.b16 %v1672, %v1670
  %v1729 = vpack.c.b16 %v1675, %v1673
  %v1730 = vpack.c.b16 %v1676, %v1674
  %v1731 = vpack.c.b16 %v1679, %v1677
  %v1732 = vpack.c.b16 %v1680, %v1678
  %v1733 = vpack.c.b16 %v1683, %v1681
  %v1734 = vpack.c.b16 %v1684, %v1682
  %v1735 = vpack.c.b16 %v1687, %v1685
  %v1736 = vpack.c.b16 %v1688, %v1686
  %v1737 = vpack.c.b16 %v1691, %v1689
  %v1738 = vpack.c.b16 %v1692, %v1690
  %v1739 = vpack.c.b16 %v1695, %v1693
  %v1740 = vpack.c.b16 %v1696, %v1694
  %v1741 = vpack.c.b16 %v1699, %v1697
  %v1742 = vpack.c.b16 %v1700, %v1698
  %v1743 = vpack.c.b16 %v1703, %v1701
  %v1744 = vpack.c.b16 %v1704, %v1702
  %v1745 = vpack.c.b16 %v1707, %v1705
  %v1746 = vpack.c.b16 %v1708, %v1706
  %v1747 = vpack.c.b16 %v1711, %v1709
  %v1748 = vpack.c.b16 %v1712, %v1710
  %v1749 = vpack.c.b16 %v1715, %v1713
  %v1750 = vpack.c.b16 %v1716, %v1714
  %v1751 = vpack.c.b16 %v1719, %v1717
  %v1752 = vpack.c.b16 %v1720, %v1718
  %1785 = vmatprep.subr.bf16.mxu0 %v1722
  %1786 = vmatpush1.bf16.msra.mxu0 %v1721
  %1787 = vmatprep.subr.bf16.mxu0 %v1724
  %1788 = vmatpush1.bf16.msra.mxu0 %v1723
  %1789 = vmatprep.subr.bf16.mxu0 %v1726
  %1790 = vmatpush1.bf16.msra.mxu0 %v1725
  %1791 = vmatprep.subr.bf16.mxu0 %v1728
  %1792 = vmatpush1.bf16.msra.mxu0 %v1727
  %1793 = vmatprep.subr.bf16.mxu0 %v1730
  %1794 = vmatpush1.bf16.msra.mxu0 %v1729
  %1795 = vmatprep.subr.bf16.mxu0 %v1732
  %1796 = vmatpush1.bf16.msra.mxu0 %v1731
  %1797 = vmatprep.subr.bf16.mxu0 %v1734
  %1798 = vmatpush1.bf16.msra.mxu0 %v1733
  %1799 = vmatprep.subr.bf16.mxu0 %v1736
  %1800 = vmatpush1.bf16.msra.mxu0 %v1735
  %1801 = vmatprep.subr.bf16.mxu0 %v1738
  %1802 = vmatpush1.bf16.msra.mxu0 %v1737
  %1803 = vmatprep.subr.bf16.mxu0 %v1740
  %1804 = vmatpush1.bf16.msra.mxu0 %v1739
  %1805 = vmatprep.subr.bf16.mxu0 %v1742
  %1806 = vmatpush1.bf16.msra.mxu0 %v1741
  %1807 = vmatprep.subr.bf16.mxu0 %v1744
  %1808 = vmatpush1.bf16.msra.mxu0 %v1743
  %1809 = vmatprep.subr.bf16.mxu0 %v1746
  %1810 = vmatpush1.bf16.msra.mxu0 %v1745
  %1811 = vmatprep.subr.bf16.mxu0 %v1748
  %1812 = vmatpush1.bf16.msra.mxu0 %v1747
  %1813 = vmatprep.subr.bf16.mxu0 %v1750
  %1814 = vmatpush1.bf16.msra.mxu0 %v1749
  %1815 = vmatprep.subr.bf16.mxu0 %v1752
  %1816 = vmatpush1.bf16.msra.mxu0 %v1751
  %1817 = vmatprep.mubr.bf16.mxu0 %v1580
  %1818 = vmatmul.mubr.bf16.gmra.mrb[0].mxu0 %v1579
  %v1819 = vpop.f32.mrb[0].mxu0
  %v1820 = vadd.f32 %v1618, %v1819
  %v1821 = vpop.f32.mrb[0].mxu0
  %v1822 = vadd.f32 %v1622, %v1821
  %v1823 = vpop.f32.mrb[0].mxu0
  %v1824 = vpop.f32.mrb[0].mxu0
  %1825 = vdwg.mxu0
  %v1826 = vld [vmem:[%s10] sm:$0x3]
  %v1828 = vlaneseq
  %v1829 = vshrl.u32 %v1828, 7
  %v1830 = vsub.s32 0, %v1829
  %v1831 = vrot.slane %v1826, %v1830
  %v1832 = vlaneseq
  %v1833 = vshrl.u32 %v1832, 7
  %v1834 = vsub.s32 1, %v1833
  %v1835 = vrot.slane %v1826, %v1834
  %v1838 = vmul.f32 %v1820, %v1831
  %v1839 = vmul.f32 %v1822, %v1835
  %v1840 = vld [vmem:[%s11] sm:$0x3]
  %v1842 = vlaneseq
  %v1843 = vshrl.u32 %v1842, 7
  %v1844 = vsub.s32 0, %v1843
  %v1845 = vrot.slane %v1840, %v1844
  %v1846 = vlaneseq
  %v1847 = vshrl.u32 %v1846, 7
  %v1848 = vsub.s32 1, %v1847
  %v1849 = vrot.slane %v1840, %v1848
  %v1852 = vadd.f32 %v1838, %v1845
  %v1853 = vadd.f32 %v1839, %v1849
  %v1854 = vmax.f32 %v1852, 0.0
  %v1855 = vmax.f32 %v1853, 0.0
  %v1856 = vpack.c.bf16 %v1854, %v1854
  %v1857 = vpack.c.bf16 %v1855, %v1855
  %v1858 = vld [vmem:[%s12] sm:$0xff]
  %v1859 = vld [vmem:[%s12 + $0x8] sm:$0xff]
  %v1860 = vld [vmem:[%s12 + $0x10] sm:$0xff]
  %v1861 = vld [vmem:[%s12 + $0x18] sm:$0xff]
  %v1862 = vld [vmem:[%s12 + $0x20] sm:$0xff]
  %v1863 = vld [vmem:[%s12 + $0x28] sm:$0xff]
  %v1864 = vld [vmem:[%s12 + $0x30] sm:$0xff]
  %v1865 = vld [vmem:[%s12 + $0x38] sm:$0xff]
  %v1866 = vld [vmem:[%s12 + $0x40] sm:$0xff]
  %v1867 = vld [vmem:[%s12 + $0x48] sm:$0xff]
  %v1868 = vld [vmem:[%s12 + $0x50] sm:$0xff]
  %v1869 = vld [vmem:[%s12 + $0x58] sm:$0xff]
  %v1870 = vld [vmem:[%s12 + $0x60] sm:$0xff]
  %v1871 = vld [vmem:[%s12 + $0x68] sm:$0xff]
  %v1872 = vld [vmem:[%s12 + $0x70] sm:$0xff]
  %v1873 = vld [vmem:[%s12 + $0x78] sm:$0xff]
  %v1874 = vld [vmem:[%s12 + $0x80] sm:$0xff]
  %v1875 = vld [vmem:[%s12 + $0x88] sm:$0xff]
  %v1876 = vld [vmem:[%s12 + $0x90] sm:$0xff]
  %v1877 = vld [vmem:[%s12 + $0x98] sm:$0xff]
  %v1878 = vld [vmem:[%s12 + $0xa0] sm:$0xff]
  %v1879 = vld [vmem:[%s12 + $0xa8] sm:$0xff]
  %v1880 = vld [vmem:[%s12 + $0xb0] sm:$0xff]
  %v1881 = vld [vmem:[%s12 + $0xb8] sm:$0xff]
  %v1882 = vld [vmem:[%s12 + $0xc0] sm:$0xff]
  %v1883 = vld [vmem:[%s12 + $0xc8] sm:$0xff]
  %v1884 = vld [vmem:[%s12 + $0xd0] sm:$0xff]
  %v1885 = vld [vmem:[%s12 + $0xd8] sm:$0xff]
  %v1886 = vld [vmem:[%s12 + $0xe0] sm:$0xff]
  %v1887 = vld [vmem:[%s12 + $0xe8] sm:$0xff]
  %v1888 = vld [vmem:[%s12 + $0xf0] sm:$0xff]
  %v1889 = vld [vmem:[%s12 + $0xf8] sm:$0xff]
  %v1890 = vld [vmem:[%s13] sm:$0x3]
  %v1892 = vlaneseq
  %v1893 = vshrl.u32 %v1892, 7
  %v1894 = vsub.s32 0, %v1893
  %v1895 = vrot.slane %v1890, %v1894
  %v1896 = vlaneseq
  %v1897 = vshrl.u32 %v1896, 7
  %v1898 = vsub.s32 1, %v1897
  %v1899 = vrot.slane %v1890, %v1898
  %v1934 = vunpack.c.l.b16 %v1858
  %v1935 = vunpack.c.h.b16 %v1858
  %v1936 = vunpack.c.l.b16 %v1859
  %v1937 = vunpack.c.h.b16 %v1859
  %v1938 = vunpack.c.l.b16 %v1860
  %v1939 = vunpack.c.h.b16 %v1860
  %v1940 = vunpack.c.l.b16 %v1861
  %v1941 = vunpack.c.h.b16 %v1861
  %v1942 = vunpack.c.l.b16 %v1862
  %v1943 = vunpack.c.h.b16 %v1862
  %v1944 = vunpack.c.l.b16 %v1863
  %v1945 = vunpack.c.h.b16 %v1863
  %v1946 = vunpack.c.l.b16 %v1864
  %v1947 = vunpack.c.h.b16 %v1864
  %v1948 = vunpack.c.l.b16 %v1865
  %v1949 = vunpack.c.h.b16 %v1865
  %v1950 = vunpack.c.l.b16 %v1866
  %v1951 = vunpack.c.h.b16 %v1866
  %v1952 = vunpack.c.l.b16 %v1867
  %v1953 = vunpack.c.h.b16 %v1867
  %v1954 = vunpack.c.l.b16 %v1868
  %v1955 = vunpack.c.h.b16 %v1868
  %v1956 = vunpack.c.l.b16 %v1869
  %v1957 = vunpack.c.h.b16 %v1869
  %v1958 = vunpack.c.l.b16 %v1870
  %v1959 = vunpack.c.h.b16 %v1870
  %v1960 = vunpack.c.l.b16 %v1871
  %v1961 = vunpack.c.h.b16 %v1871
  %v1962 = vunpack.c.l.b16 %v1872
  %v1963 = vunpack.c.h.b16 %v1872
  %v1964 = vunpack.c.l.b16 %v1873
  %v1965 = vunpack.c.h.b16 %v1873
  %v1966 = vunpack.c.l.b16 %v1874
  %v1967 = vunpack.c.h.b16 %v1874
  %v1968 = vunpack.c.l.b16 %v1875
  %v1969 = vunpack.c.h.b16 %v1875
  %v1970 = vunpack.c.l.b16 %v1876
  %v1971 = vunpack.c.h.b16 %v1876
  %v1972 = vunpack.c.l.b16 %v1877
  %v1973 = vunpack.c.h.b16 %v1877
  %v1974 = vunpack.c.l.b16 %v1878
  %v1975 = vunpack.c.h.b16 %v1878
  %v1976 = vunpack.c.l.b16 %v1879
  %v1977 = vunpack.c.h.b16 %v1879
  %v1978 = vunpack.c.l.b16 %v1880
  %v1979 = vunpack.c.h.b16 %v1880
  %v1980 = vunpack.c.l.b16 %v1881
  %v1981 = vunpack.c.h.b16 %v1881
  %v1982 = vunpack.c.l.b16 %v1882
  %v1983 = vunpack.c.h.b16 %v1882
  %v1984 = vunpack.c.l.b16 %v1883
  %v1985 = vunpack.c.h.b16 %v1883
  %v1986 = vunpack.c.l.b16 %v1884
  %v1987 = vunpack.c.h.b16 %v1884
  %v1988 = vunpack.c.l.b16 %v1885
  %v1989 = vunpack.c.h.b16 %v1885
  %v1990 = vunpack.c.l.b16 %v1886
  %v1991 = vunpack.c.h.b16 %v1886
  %v1992 = vunpack.c.l.b16 %v1887
  %v1993 = vunpack.c.h.b16 %v1887
  %v1994 = vunpack.c.l.b16 %v1888
  %v1995 = vunpack.c.h.b16 %v1888
  %v1996 = vunpack.c.l.b16 %v1889
  %v1997 = vunpack.c.h.b16 %v1889
  %v1998 = vpack.c.b16 %v1936, %v1934
  %v1999 = vpack.c.b16 %v1937, %v1935
  %v2000 = vpack.c.b16 %v1940, %v1938
  %v2001 = vpack.c.b16 %v1941, %v1939
  %v2002 = vpack.c.b16 %v1944, %v1942
  %v2003 = vpack.c.b16 %v1945, %v1943
  %v2004 = vpack.c.b16 %v1948, %v1946
  %v2005 = vpack.c.b16 %v1949, %v1947
  %v2006 = vpack.c.b16 %v1952, %v1950
  %v2007 = vpack.c.b16 %v1953, %v1951
  %v2008 = vpack.c.b16 %v1956, %v1954
  %v2009 = vpack.c.b16 %v1957, %v1955
  %v2010 = vpack.c.b16 %v1960, %v1958
  %v2011 = vpack.c.b16 %v1961, %v1959
  %v2012 = vpack.c.b16 %v1964, %v1962
  %v2013 = vpack.c.b16 %v1965, %v1963
  %v2014 = vpack.c.b16 %v1968, %v1966
  %v2015 = vpack.c.b16 %v1969, %v1967
  %v2016 = vpack.c.b16 %v1972, %v1970
  %v2017 = vpack.c.b16 %v1973, %v1971
  %v2018 = vpack.c.b16 %v1976, %v1974
  %v2019 = vpack.c.b16 %v1977, %v1975
  %v2020 = vpack.c.b16 %v1980, %v1978
  %v2021 = vpack.c.b16 %v1981, %v1979
  %v2022 = vpack.c.b16 %v1984, %v1982
  %v2023 = vpack.c.b16 %v1985, %v1983
  %v2024 = vpack.c.b16 %v1988, %v1986
  %v2025 = vpack.c.b16 %v1989, %v1987
  %v2026 = vpack.c.b16 %v1992, %v1990
  %v2027 = vpack.c.b16 %v1993, %v1991
  %v2028 = vpack.c.b16 %v1996, %v1994
  %v2029 = vpack.c.b16 %v1997, %v1995
  %2062 = vmatprep.subr.bf16.mxu0 %v1999
  %2063 = vmatpush1.bf16.msra.mxu0 %v1998
  %2064 = vmatprep.subr.bf16.mxu0 %v2001
  %2065 = vmatpush1.bf16.msra.mxu0 %v2000
  %2066 = vmatprep.subr.bf16.mxu0 %v2003
  %2067 = vmatpush1.bf16.msra.mxu0 %v2002
  %2068 = vmatprep.subr.bf16.mxu0 %v2005
  %2069 = vmatpush1.bf16.msra.mxu0 %v2004
  %2070 = vmatprep.subr.bf16.mxu0 %v2007
  %2071 = vmatpush1.bf16.msra.mxu0 %v2006
  %2072 = vmatprep.subr.bf16.mxu0 %v2009
  %2073 = vmatpush1.bf16.msra.mxu0 %v2008
  %2074 = vmatprep.subr.bf16.mxu0 %v2011
  %2075 = vmatpush1.bf16.msra.mxu0 %v2010
  %2076 = vmatprep.subr.bf16.mxu0 %v2013
  %2077 = vmatpush1.bf16.msra.mxu0 %v2012
  %2078 = vmatprep.subr.bf16.mxu0 %v2015
  %2079 = vmatpush1.bf16.msra.mxu0 %v2014
  %2080 = vmatprep.subr.bf16.mxu0 %v2017
  %2081 = vmatpush1.bf16.msra.mxu0 %v2016
  %2082 = vmatprep.subr.bf16.mxu0 %v2019
  %2083 = vmatpush1.bf16.msra.mxu0 %v2018
  %2084 = vmatprep.subr.bf16.mxu0 %v2021
  %2085 = vmatpush1.bf16.msra.mxu0 %v2020
  %2086 = vmatprep.subr.bf16.mxu0 %v2023
  %2087 = vmatpush1.bf16.msra.mxu0 %v2022
  %2088 = vmatprep.subr.bf16.mxu0 %v2025
  %2089 = vmatpush1.bf16.msra.mxu0 %v2024
  %2090 = vmatprep.subr.bf16.mxu0 %v2027
  %2091 = vmatpush1.bf16.msra.mxu0 %v2026
  %2092 = vmatprep.subr.bf16.mxu0 %v2029
  %2093 = vmatpush1.bf16.msra.mxu0 %v2028
  %2094 = vmatprep.mubr.bf16.mxu0 %v1857
  %2095 = vmatmul.mubr.bf16.gmra.mrb[0].mxu0 %v1856
  %v2096 = vpop.f32.mrb[0].mxu0
  %v2097 = vadd.f32 %v1895, %v2096
  %v2098 = vpop.f32.mrb[0].mxu0
  %v2099 = vadd.f32 %v1899, %v2098
  %v2100 = vpop.f32.mrb[0].mxu0
  %v2101 = vpop.f32.mrb[0].mxu0
  %2102 = vdwg.mxu0
  %v2103 = vld [vmem:[%s14] sm:$0x3]
  %v2105 = vlaneseq
  %v2106 = vshrl.u32 %v2105, 7
  %v2107 = vsub.s32 0, %v2106
  %v2108 = vrot.slane %v2103, %v2107
  %v2109 = vlaneseq
  %v2110 = vshrl.u32 %v2109, 7
  %v2111 = vsub.s32 1, %v2110
  %v2112 = vrot.slane %v2103, %v2111
  %v2115 = vmul.f32 %v2097, %v2108
  %v2116 = vmul.f32 %v2099, %v2112
  %v2117 = vld [vmem:[%s15] sm:$0x3]
  %v2119 = vlaneseq
  %v2120 = vshrl.u32 %v2119, 7
  %v2121 = vsub.s32 0, %v2120
  %v2122 = vrot.slane %v2117, %v2121
  %v2123 = vlaneseq
  %v2124 = vshrl.u32 %v2123, 7
  %v2125 = vsub.s32 1, %v2124
  %v2126 = vrot.slane %v2117, %v2125
  %v2129 = vadd.f32 %v2115, %v2122
  %v2130 = vadd.f32 %v2116, %v2126
  %v2131 = vmax.f32 %v2129, 0.0
  %v2132 = vmax.f32 %v2130, 0.0
  %v2133 = vpack.c.bf16 %v2131, %v2131
  %v2134 = vpack.c.bf16 %v2132, %v2132
  %v2135 = vld [vmem:[%s16] sm:$0xff]
  %v2136 = vld [vmem:[%s16 + $0x8] sm:$0xff]
  %v2137 = vld [vmem:[%s16 + $0x10] sm:$0xff]
  %v2138 = vld [vmem:[%s16 + $0x18] sm:$0xff]
  %v2139 = vld [vmem:[%s16 + $0x20] sm:$0xff]
  %v2140 = vld [vmem:[%s16 + $0x28] sm:$0xff]
  %v2141 = vld [vmem:[%s16 + $0x30] sm:$0xff]
  %v2142 = vld [vmem:[%s16 + $0x38] sm:$0xff]
  %v2143 = vld [vmem:[%s16 + $0x40] sm:$0xff]
  %v2144 = vld [vmem:[%s16 + $0x48] sm:$0xff]
  %v2145 = vld [vmem:[%s16 + $0x50] sm:$0xff]
  %v2146 = vld [vmem:[%s16 + $0x58] sm:$0xff]
  %v2147 = vld [vmem:[%s16 + $0x60] sm:$0xff]
  %v2148 = vld [vmem:[%s16 + $0x68] sm:$0xff]
  %v2149 = vld [vmem:[%s16 + $0x70] sm:$0xff]
  %v2150 = vld [vmem:[%s16 + $0x78] sm:$0xff]
  %v2151 = vld [vmem:[%s16 + $0x80] sm:$0xff]
  %v2152 = vld [vmem:[%s16 + $0x88] sm:$0xff]
  %v2153 = vld [vmem:[%s16 + $0x90] sm:$0xff]
  %v2154 = vld [vmem:[%s16 + $0x98] sm:$0xff]
  %v2155 = vld [vmem:[%s16 + $0xa0] sm:$0xff]
  %v2156 = vld [vmem:[%s16 + $0xa8] sm:$0xff]
  %v2157 = vld [vmem:[%s16 + $0xb0] sm:$0xff]
  %v2158 = vld [vmem:[%s16 + $0xb8] sm:$0xff]
  %v2159 = vld [vmem:[%s16 + $0xc0] sm:$0xff]
  %v2160 = vld [vmem:[%s16 + $0xc8] sm:$0xff]
  %v2161 = vld [vmem:[%s16 + $0xd0] sm:$0xff]
  %v2162 = vld [vmem:[%s16 + $0xd8] sm:$0xff]
  %v2163 = vld [vmem:[%s16 + $0xe0] sm:$0xff]
  %v2164 = vld [vmem:[%s16 + $0xe8] sm:$0xff]
  %v2165 = vld [vmem:[%s16 + $0xf0] sm:$0xff]
  %v2166 = vld [vmem:[%s16 + $0xf8] sm:$0xff]
  %v2167 = vld [vmem:[%s17] sm:$0x3]
  %v2169 = vlaneseq
  %v2170 = vshrl.u32 %v2169, 7
  %v2171 = vsub.s32 0, %v2170
  %v2172 = vrot.slane %v2167, %v2171
  %v2173 = vlaneseq
  %v2174 = vshrl.u32 %v2173, 7
  %v2175 = vsub.s32 1, %v2174
  %v2176 = vrot.slane %v2167, %v2175
  %v2211 = vunpack.c.l.b16 %v2135
  %v2212 = vunpack.c.h.b16 %v2135
  %v2213 = vunpack.c.l.b16 %v2136
  %v2214 = vunpack.c.h.b16 %v2136
  %v2215 = vunpack.c.l.b16 %v2137
  %v2216 = vunpack.c.h.b16 %v2137
  %v2217 = vunpack.c.l.b16 %v2138
  %v2218 = vunpack.c.h.b16 %v2138
  %v2219 = vunpack.c.l.b16 %v2139
  %v2220 = vunpack.c.h.b16 %v2139
  %v2221 = vunpack.c.l.b16 %v2140
  %v2222 = vunpack.c.h.b16 %v2140
  %v2223 = vunpack.c.l.b16 %v2141
  %v2224 = vunpack.c.h.b16 %v2141
  %v2225 = vunpack.c.l.b16 %v2142
  %v2226 = vunpack.c.h.b16 %v2142
  %v2227 = vunpack.c.l.b16 %v2143
  %v2228 = vunpack.c.h.b16 %v2143
  %v2229 = vunpack.c.l.b16 %v2144
  %v2230 = vunpack.c.h.b16 %v2144
  %v2231 = vunpack.c.l.b16 %v2145
  %v2232 = vunpack.c.h.b16 %v2145
  %v2233 = vunpack.c.l.b16 %v2146
  %v2234 = vunpack.c.h.b16 %v2146
  %v2235 = vunpack.c.l.b16 %v2147
  %v2236 = vunpack.c.h.b16 %v2147
  %v2237 = vunpack.c.l.b16 %v2148
  %v2238 = vunpack.c.h.b16 %v2148
  %v2239 = vunpack.c.l.b16 %v2149
  %v2240 = vunpack.c.h.b16 %v2149
  %v2241 = vunpack.c.l.b16 %v2150
  %v2242 = vunpack.c.h.b16 %v2150
  %v2243 = vunpack.c.l.b16 %v2151
  %v2244 = vunpack.c.h.b16 %v2151
  %v2245 = vunpack.c.l.b16 %v2152
  %v2246 = vunpack.c.h.b16 %v2152
  %v2247 = vunpack.c.l.b16 %v2153
  %v2248 = vunpack.c.h.b16 %v2153
  %v2249 = vunpack.c.l.b16 %v2154
  %v2250 = vunpack.c.h.b16 %v2154
  %v2251 = vunpack.c.l.b16 %v2155
  %v2252 = vunpack.c.h.b16 %v2155
  %v2253 = vunpack.c.l.b16 %v2156
  %v2254 = vunpack.c.h.b16 %v2156
  %v2255 = vunpack.c.l.b16 %v2157
  %v2256 = vunpack.c.h.b16 %v2157
  %v2257 = vunpack.c.l.b16 %v2158
  %v2258 = vunpack.c.h.b16 %v2158
  %v2259 = vunpack.c.l.b16 %v2159
  %v2260 = vunpack.c.h.b16 %v2159
  %v2261 = vunpack.c.l.b16 %v2160
  %v2262 = vunpack.c.h.b16 %v2160
  %v2263 = vunpack.c.l.b16 %v2161
  %v2264 = vunpack.c.h.b16 %v2161
  %v2265 = vunpack.c.l.b16 %v2162
  %v2266 = vunpack.c.h.b16 %v2162
  %v2267 = vunpack.c.l.b16 %v2163
  %v2268 = vunpack.c.h.b16 %v2163
  %v2269 = vunpack.c.l.b16 %v2164
  %v2270 = vunpack.c.h.b16 %v2164
  %v2271 = vunpack.c.l.b16 %v2165
  %v2272 = vunpack.c.h.b16 %v2165
  %v2273 = vunpack.c.l.b16 %v2166
  %v2274 = vunpack.c.h.b16 %v2166
  %v2275 = vpack.c.b16 %v2213, %v2211
  %v2276 = vpack.c.b16 %v2214, %v2212
  %v2277 = vpack.c.b16 %v2217, %v2215
  %v2278 = vpack.c.b16 %v2218, %v2216
  %v2279 = vpack.c.b16 %v2221, %v2219
  %v2280 = vpack.c.b16 %v2222, %v2220
  %v2281 = vpack.c.b16 %v2225, %v2223
  %v2282 = vpack.c.b16 %v2226, %v2224
  %v2283 = vpack.c.b16 %v2229, %v2227
  %v2284 = vpack.c.b16 %v2230, %v2228
  %v2285 = vpack.c.b16 %v2233, %v2231
  %v2286 = vpack.c.b16 %v2234, %v2232
  %v2287 = vpack.c.b16 %v2237, %v2235
  %v2288 = vpack.c.b16 %v2238, %v2236
  %v2289 = vpack.c.b16 %v2241, %v2239
  %v2290 = vpack.c.b16 %v2242, %v2240
  %v2291 = vpack.c.b16 %v2245, %v2243
  %v2292 = vpack.c.b16 %v2246, %v2244
  %v2293 = vpack.c.b16 %v2249, %v2247
  %v2294 = vpack.c.b16 %v2250, %v2248
  %v2295 = vpack.c.b16 %v2253, %v2251
  %v2296 = vpack.c.b16 %v2254, %v2252
  %v2297 = vpack.c.b16 %v2257, %v2255
  %v2298 = vpack.c.b16 %v2258, %v2256
  %v2299 = vpack.c.b16 %v2261, %v2259
  %v2300 = vpack.c.b16 %v2262, %v2260
  %v2301 = vpack.c.b16 %v2265, %v2263
  %v2302 = vpack.c.b16 %v2266, %v2264
  %v2303 = vpack.c.b16 %v2269, %v2267
  %v2304 = vpack.c.b16 %v2270, %v2268
  %v2305 = vpack.c.b16 %v2273, %v2271
  %v2306 = vpack.c.b16 %v2274, %v2272
  %2339 = vmatprep.subr.bf16.mxu0 %v2276
  %2340 = vmatpush1.bf16.msra.mxu0 %v2275
  %2341 = vmatprep.subr.bf16.mxu0 %v2278
  %2342 = vmatpush1.bf16.msra.mxu0 %v2277
  %2343 = vmatprep.subr.bf16.mxu0 %v2280
  %2344 = vmatpush1.bf16.msra.mxu0 %v2279
  %2345 = vmatprep.subr.bf16.mxu0 %v2282
  %2346 = vmatpush1.bf16.msra.mxu0 %v2281
  %2347 = vmatprep.subr.bf16.mxu0 %v2284
  %2348 = vmatpush1.bf16.msra.mxu0 %v2283
  %2349 = vmatprep.subr.bf16.mxu0 %v2286
  %2350 = vmatpush1.bf16.msra.mxu0 %v2285
  %2351 = vmatprep.subr.bf16.mxu0 %v2288
  %2352 = vmatpush1.bf16.msra.mxu0 %v2287
  %2353 = vmatprep.subr.bf16.mxu0 %v2290
  %2354 = vmatpush1.bf16.msra.mxu0 %v2289
  %2355 = vmatprep.subr.bf16.mxu0 %v2292
  %2356 = vmatpush1.bf16.msra.mxu0 %v2291
  %2357 = vmatprep.subr.bf16.mxu0 %v2294
  %2358 = vmatpush1.bf16.msra.mxu0 %v2293
  %2359 = vmatprep.subr.bf16.mxu0 %v2296
  %2360 = vmatpush1.bf16.msra.mxu0 %v2295
  %2361 = vmatprep.subr.bf16.mxu0 %v2298
  %2362 = vmatpush1.bf16.msra.mxu0 %v2297
  %2363 = vmatprep.subr.bf16.mxu0 %v2300
  %2364 = vmatpush1.bf16.msra.mxu0 %v2299
  %2365 = vmatprep.subr.bf16.mxu0 %v2302
  %2366 = vmatpush1.bf16.msra.mxu0 %v2301
  %2367 = vmatprep.subr.bf16.mxu0 %v2304
  %2368 = vmatpush1.bf16.msra.mxu0 %v2303
  %2369 = vmatprep.subr.bf16.mxu0 %v2306
  %2370 = vmatpush1.bf16.msra.mxu0 %v2305
  %2371 = vmatprep.mubr.bf16.mxu0 %v2134
  %2372 = vmatmul.mubr.bf16.gmra.mrb[0].mxu0 %v2133
  %v2373 = vpop.f32.mrb[0].mxu0
  %v2374 = vadd.f32 %v2172, %v2373
  %v2375 = vpop.f32.mrb[0].mxu0
  %v2376 = vadd.f32 %v2176, %v2375
  %v2377 = vpop.f32.mrb[0].mxu0
  %v2378 = vpop.f32.mrb[0].mxu0
  %2379 = vdwg.mxu0
  %v2382 = vcombine.low %v2374, %v2376
  %v2384 = vunpack.c.l.s4 1983009808
  %v2385 = vunpack.c.0.s8 %v2384
  %v2386 = vlaneseq
  %v2387 = vshrl.u32 %v2386, 7
  %v2388 = vsub.s32 %v2385, %v2387
  %v2389 = vrot.slane %v2382, %v2388
  %2391 = vst [vmem:[%s22] sm:$0xf] %v2389
  %s2392 = scalar_lea.vmem %s6, 2
  %v2393 = vld [vmem:[%s2392] sm:$0x3]
  %v2395 = vlaneseq
  %v2396 = vshrl.u32 %v2395, 7
  %v2397 = vsub.s32 0, %v2396
  %v2398 = vrot.slane %v2393, %v2397
  %v2399 = vlaneseq
  %v2400 = vshrl.u32 %v2399, 7
  %v2401 = vsub.s32 1, %v2400
  %v2402 = vrot.slane %v2393, %v2401
  %v2405 = vmul.f32 %v1543, %v2398
  %v2406 = vmul.f32 %v1545, %v2402
  %s2407 = scalar_lea.vmem %s7, 2
  %v2408 = vld [vmem:[%s2407] sm:$0x3]
  %v2410 = vlaneseq
  %v2411 = vshrl.u32 %v2410, 7
  %v2412 = vsub.s32 0, %v2411
  %v2413 = vrot.slane %v2408, %v2412
  %v2414 = vlaneseq
  %v2415 = vshrl.u32 %v2414, 7
  %v2416 = vsub.s32 1, %v2415
  %v2417 = vrot.slane %v2408, %v2416
  %v2420 = vadd.f32 %v2405, %v2413
  %v2421 = vadd.f32 %v2406, %v2417
  %v2422 = vmax.f32 %v2420, 0.0
  %v2423 = vmax.f32 %v2421, 0.0
  %v2424 = vpack.c.bf16 %v2422, %v2422
  %v2425 = vpack.c.bf16 %v2423, %v2423
  %s2426 = scalar_lea.vmem %s8, 256
  %v2427 = vld [vmem:[%s2426] sm:$0xff]
  %v2428 = vld [vmem:[%s2426 + $0x8] sm:$0xff]
  %v2429 = vld [vmem:[%s2426 + $0x10] sm:$0xff]
  %v2430 = vld [vmem:[%s2426 + $0x18] sm:$0xff]
  %v2431 = vld [vmem:[%s2426 + $0x20] sm:$0xff]
  %v2432 = vld [vmem:[%s2426 + $0x28] sm:$0xff]
  %v2433 = vld [vmem:[%s2426 + $0x30] sm:$0xff]
  %v2434 = vld [vmem:[%s2426 + $0x38] sm:$0xff]
  %v2435 = vld [vmem:[%s2426 + $0x40] sm:$0xff]
  %v2436 = vld [vmem:[%s2426 + $0x48] sm:$0xff]
  %v2437 = vld [vmem:[%s2426 + $0x50] sm:$0xff]
  %v2438 = vld [vmem:[%s2426 + $0x58] sm:$0xff]
  %v2439 = vld [vmem:[%s2426 + $0x60] sm:$0xff]
  %v2440 = vld [vmem:[%s2426 + $0x68] sm:$0xff]
  %v2441 = vld [vmem:[%s2426 + $0x70] sm:$0xff]
  %v2442 = vld [vmem:[%s2426 + $0x78] sm:$0xff]
  %v2443 = vld [vmem:[%s2426 + $0x80] sm:$0xff]
  %v2444 = vld [vmem:[%s2426 + $0x88] sm:$0xff]
  %v2445 = vld [vmem:[%s2426 + $0x90] sm:$0xff]
  %v2446 = vld [vmem:[%s2426 + $0x98] sm:$0xff]
  %v2447 = vld [vmem:[%s2426 + $0xa0] sm:$0xff]
  %v2448 = vld [vmem:[%s2426 + $0xa8] sm:$0xff]
  %v2449 = vld [vmem:[%s2426 + $0xb0] sm:$0xff]
  %v2450 = vld [vmem:[%s2426 + $0xb8] sm:$0xff]
  %v2451 = vld [vmem:[%s2426 + $0xc0] sm:$0xff]
  %v2452 = vld [vmem:[%s2426 + $0xc8] sm:$0xff]
  %v2453 = vld [vmem:[%s2426 + $0xd0] sm:$0xff]
  %v2454 = vld [vmem:[%s2426 + $0xd8] sm:$0xff]
  %v2455 = vld [vmem:[%s2426 + $0xe0] sm:$0xff]
  %v2456 = vld [vmem:[%s2426 + $0xe8] sm:$0xff]
  %v2457 = vld [vmem:[%s2426 + $0xf0] sm:$0xff]
  %v2458 = vld [vmem:[%s2426 + $0xf8] sm:$0xff]
  %s2459 = scalar_lea.vmem %s9, 2
  %v2460 = vld [vmem:[%s2459] sm:$0x3]
  %v2462 = vlaneseq
  %v2463 = vshrl.u32 %v2462, 7
  %v2464 = vsub.s32 0, %v2463
  %v2465 = vrot.slane %v2460, %v2464
  %v2466 = vlaneseq
  %v2467 = vshrl.u32 %v2466, 7
  %v2468 = vsub.s32 1, %v2467
  %v2469 = vrot.slane %v2460, %v2468
  %v2504 = vunpack.c.l.b16 %v2427
  %v2505 = vunpack.c.h.b16 %v2427
  %v2506 = vunpack.c.l.b16 %v2428
  %v2507 = vunpack.c.h.b16 %v2428
  %v2508 = vunpack.c.l.b16 %v2429
  %v2509 = vunpack.c.h.b16 %v2429
  %v2510 = vunpack.c.l.b16 %v2430
  %v2511 = vunpack.c.h.b16 %v2430
  %v2512 = vunpack.c.l.b16 %v2431
  %v2513 = vunpack.c.h.b16 %v2431
  %v2514 = vunpack.c.l.b16 %v2432
  %v2515 = vunpack.c.h.b16 %v2432
  %v2516 = vunpack.c.l.b16 %v2433
  %v2517 = vunpack.c.h.b16 %v2433
  %v2518 = vunpack.c.l.b16 %v2434
  %v2519 = vunpack.c.h.b16 %v2434
  %v2520 = vunpack.c.l.b16 %v2435
  %v2521 = vunpack.c.h.b16 %v2435
  %v2522 = vunpack.c.l.b16 %v2436
  %v2523 = vunpack.c.h.b16 %v2436
  %v2524 = vunpack.c.l.b16 %v2437
  %v2525 = vunpack.c.h.b16 %v2437
  %v2526 = vunpack.c.l.b16 %v2438
  %v2527 = vunpack.c.h.b16 %v2438
  %v2528 = vunpack.c.l.b16 %v2439
  %v2529 = vunpack.c.h.b16 %v2439
  %v2530 = vunpack.c.l.b16 %v2440
  %v2531 = vunpack.c.h.b16 %v2440
  %v2532 = vunpack.c.l.b16 %v2441
  %v2533 = vunpack.c.h.b16 %v2441
  %v2534 = vunpack.c.l.b16 %v2442
  %v2535 = vunpack.c.h.b16 %v2442
  %v2536 = vunpack.c.l.b16 %v2443
  %v2537 = vunpack.c.h.b16 %v2443
  %v2538 = vunpack.c.l.b16 %v2444
  %v2539 = vunpack.c.h.b16 %v2444
  %v2540 = vunpack.c.l.b16 %v2445
  %v2541 = vunpack.c.h.b16 %v2445
  %v2542 = vunpack.c.l.b16 %v2446
  %v2543 = vunpack.c.h.b16 %v2446
  %v2544 = vunpack.c.l.b16 %v2447
  %v2545 = vunpack.c.h.b16 %v2447
  %v2546 = vunpack.c.l.b16 %v2448
  %v2547 = vunpack.c.h.b16 %v2448
  %v2548 = vunpack.c.l.b16 %v2449
  %v2549 = vunpack.c.h.b16 %v2449
  %v2550 = vunpack.c.l.b16 %v2450
  %v2551 = vunpack.c.h.b16 %v2450
  %v2552 = vunpack.c.l.b16 %v2451
  %v2553 = vunpack.c.h.b16 %v2451
  %v2554 = vunpack.c.l.b16 %v2452
  %v2555 = vunpack.c.h.b16 %v2452
  %v2556 = vunpack.c.l.b16 %v2453
  %v2557 = vunpack.c.h.b16 %v2453
  %v2558 = vunpack.c.l.b16 %v2454
  %v2559 = vunpack.c.h.b16 %v2454
  %v2560 = vunpack.c.l.b16 %v2455
  %v2561 = vunpack.c.h.b16 %v2455
  %v2562 = vunpack.c.l.b16 %v2456
  %v2563 = vunpack.c.h.b16 %v2456
  %v2564 = vunpack.c.l.b16 %v2457
  %v2565 = vunpack.c.h.b16 %v2457
  %v2566 = vunpack.c.l.b16 %v2458
  %v2567 = vunpack.c.h.b16 %v2458
  %v2568 = vpack.c.b16 %v2506, %v2504
  %v2569 = vpack.c.b16 %v2507, %v2505
  %v2570 = vpack.c.b16 %v2510, %v2508
  %v2571 = vpack.c.b16 %v2511, %v2509
  %v2572 = vpack.c.b16 %v2514, %v2512
  %v2573 = vpack.c.b16 %v2515, %v2513
  %v2574 = vpack.c.b16 %v2518, %v2516
  %v2575 = vpack.c.b16 %v2519, %v2517
  %v2576 = vpack.c.b16 %v2522, %v2520
  %v2577 = vpack.c.b16 %v2523, %v2521
  %v2578 = vpack.c.b16 %v2526, %v2524
  %v2579 = vpack.c.b16 %v2527, %v2525
  %v2580 = vpack.c.b16 %v2530, %v2528
  %v2581 = vpack.c.b16 %v2531, %v2529
  %v2582 = vpack.c.b16 %v2534, %v2532
  %v2583 = vpack.c.b16 %v2535, %v2533
  %v2584 = vpack.c.b16 %v2538, %v2536
  %v2585 = vpack.c.b16 %v2539, %v2537
  %v2586 = vpack.c.b16 %v2542, %v2540
  %v2587 = vpack.c.b16 %v2543, %v2541
  %v2588 = vpack.c.b16 %v2546, %v2544
  %v2589 = vpack.c.b16 %v2547, %v2545
  %v2590 = vpack.c.b16 %v2550, %v2548
  %v2591 = vpack.c.b16 %v2551, %v2549
  %v2592 = vpack.c.b16 %v2554, %v2552
  %v2593 = vpack.c.b16 %v2555, %v2553
  %v2594 = vpack.c.b16 %v2558, %v2556
  %v2595 = vpack.c.b16 %v2559, %v2557
  %v2596 = vpack.c.b16 %v2562, %v2560
  %v2597 = vpack.c.b16 %v2563, %v2561
  %v2598 = vpack.c.b16 %v2566, %v2564
  %v2599 = vpack.c.b16 %v2567, %v2565
  %2632 = vmatprep.subr.bf16.mxu0 %v2569
  %2633 = vmatpush1.bf16.msra.mxu0 %v2568
  %2634 = vmatprep.subr.bf16.mxu0 %v2571
  %2635 = vmatpush1.bf16.msra.mxu0 %v2570
  %2636 = vmatprep.subr.bf16.mxu0 %v2573
  %2637 = vmatpush1.bf16.msra.mxu0 %v2572
  %2638 = vmatprep.subr.bf16.mxu0 %v2575
  %2639 = vmatpush1.bf16.msra.mxu0 %v2574
  %2640 = vmatprep.subr.bf16.mxu0 %v2577
  %2641 = vmatpush1.bf16.msra.mxu0 %v2576
  %2642 = vmatprep.subr.bf16.mxu0 %v2579
  %2643 = vmatpush1.bf16.msra.mxu0 %v2578
  %2644 = vmatprep.subr.bf16.mxu0 %v2581
  %2645 = vmatpush1.bf16.msra.mxu0 %v2580
  %2646 = vmatprep.subr.bf16.mxu0 %v2583
  %2647 = vmatpush1.bf16.msra.mxu0 %v2582
  %2648 = vmatprep.subr.bf16.mxu0 %v2585
  %2649 = vmatpush1.bf16.msra.mxu0 %v2584
  %2650 = vmatprep.subr.bf16.mxu0 %v2587
  %2651 = vmatpush1.bf16.msra.mxu0 %v2586
  %2652 = vmatprep.subr.bf16.mxu0 %v2589
  %2653 = vmatpush1.bf16.msra.mxu0 %v2588
  %2654 = vmatprep.subr.bf16.mxu0 %v2591
  %2655 = vmatpush1.bf16.msra.mxu0 %v2590
  %2656 = vmatprep.subr.bf16.mxu0 %v2593
  %2657 = vmatpush1.bf16.msra.mxu0 %v2592
  %2658 = vmatprep.subr.bf16.mxu0 %v2595
  %2659 = vmatpush1.bf16.msra.mxu0 %v2594
  %2660 = vmatprep.subr.bf16.mxu0 %v2597
  %2661 = vmatpush1.bf16.msra.mxu0 %v2596
  %2662 = vmatprep.subr.bf16.mxu0 %v2599
  %2663 = vmatpush1.bf16.msra.mxu0 %v2598
  %2664 = vmatprep.mubr.bf16.mxu0 %v2425
  %2665 = vmatmul.mubr.bf16.gmra.mrb[0].mxu0 %v2424
  %v2666 = vpop.f32.mrb[0].mxu0
  %v2667 = vadd.f32 %v2465, %v2666
  %v2668 = vpop.f32.mrb[0].mxu0
  %v2669 = vadd.f32 %v2469, %v2668
  %v2670 = vpop.f32.mrb[0].mxu0
  %v2671 = vpop.f32.mrb[0].mxu0
  %2672 = vdwg.mxu0
  %s2673 = scalar_lea.vmem %s10, 2
  %v2674 = vld [vmem:[%s2673] sm:$0x3]
  %v2676 = vlaneseq
  %v2677 = vshrl.u32 %v2676, 7
  %v2678 = vsub.s32 0, %v2677
  %v2679 = vrot.slane %v2674, %v2678
  %v2680 = vlaneseq
  %v2681 = vshrl.u32 %v2680, 7
  %v2682 = vsub.s32 1, %v2681
  %v2683 = vrot.slane %v2674, %v2682
  %v2686 = vmul.f32 %v2667, %v2679
  %v2687 = vmul.f32 %v2669, %v2683
  %s2688 = scalar_lea.vmem %s11, 2
  %v2689 = vld [vmem:[%s2688] sm:$0x3]
  %v2691 = vlaneseq
  %v2692 = vshrl.u32 %v2691, 7
  %v2693 = vsub.s32 0, %v2692
  %v2694 = vrot.slane %v2689, %v2693
  %v2695 = vlaneseq
  %v2696 = vshrl.u32 %v2695, 7
  %v2697 = vsub.s32 1, %v2696
  %v2698 = vrot.slane %v2689, %v2697
  %v2701 = vadd.f32 %v2686, %v2694
  %v2702 = vadd.f32 %v2687, %v2698
  %v2703 = vmax.f32 %v2701, 0.0
  %v2704 = vmax.f32 %v2702, 0.0
  %v2705 = vpack.c.bf16 %v2703, %v2703
  %v2706 = vpack.c.bf16 %v2704, %v2704
  %s2707 = scalar_lea.vmem %s12, 256
  %v2708 = vld [vmem:[%s2707] sm:$0xff]
  %v2709 = vld [vmem:[%s2707 + $0x8] sm:$0xff]
  %v2710 = vld [vmem:[%s2707 + $0x10] sm:$0xff]
  %v2711 = vld [vmem:[%s2707 + $0x18] sm:$0xff]
  %v2712 = vld [vmem:[%s2707 + $0x20] sm:$0xff]
  %v2713 = vld [vmem:[%s2707 + $0x28] sm:$0xff]
  %v2714 = vld [vmem:[%s2707 + $0x30] sm:$0xff]
  %v2715 = vld [vmem:[%s2707 + $0x38] sm:$0xff]
  %v2716 = vld [vmem:[%s2707 + $0x40] sm:$0xff]
  %v2717 = vld [vmem:[%s2707 + $0x48] sm:$0xff]
  %v2718 = vld [vmem:[%s2707 + $0x50] sm:$0xff]
  %v2719 = vld [vmem:[%s2707 + $0x58] sm:$0xff]
  %v2720 = vld [vmem:[%s2707 + $0x60] sm:$0xff]
  %v2721 = vld [vmem:[%s2707 + $0x68] sm:$0xff]
  %v2722 = vld [vmem:[%s2707 + $0x70] sm:$0xff]
  %v2723 = vld [vmem:[%s2707 + $0x78] sm:$0xff]
  %v2724 = vld [vmem:[%s2707 + $0x80] sm:$0xff]
  %v2725 = vld [vmem:[%s2707 + $0x88] sm:$0xff]
  %v2726 = vld [vmem:[%s2707 + $0x90] sm:$0xff]
  %v2727 = vld [vmem:[%s2707 + $0x98] sm:$0xff]
  %v2728 = vld [vmem:[%s2707 + $0xa0] sm:$0xff]
  %v2729 = vld [vmem:[%s2707 + $0xa8] sm:$0xff]
  %v2730 = vld [vmem:[%s2707 + $0xb0] sm:$0xff]
  %v2731 = vld [vmem:[%s2707 + $0xb8] sm:$0xff]
  %v2732 = vld [vmem:[%s2707 + $0xc0] sm:$0xff]
  %v2733 = vld [vmem:[%s2707 + $0xc8] sm:$0xff]
  %v2734 = vld [vmem:[%s2707 + $0xd0] sm:$0xff]
  %v2735 = vld [vmem:[%s2707 + $0xd8] sm:$0xff]
  %v2736 = vld [vmem:[%s2707 + $0xe0] sm:$0xff]
  %v2737 = vld [vmem:[%s2707 + $0xe8] sm:$0xff]
  %v2738 = vld [vmem:[%s2707 + $0xf0] sm:$0xff]
  %v2739 = vld [vmem:[%s2707 + $0xf8] sm:$0xff]
  %s2740 = scalar_lea.vmem %s13, 2
  %v2741 = vld [vmem:[%s2740] sm:$0x3]
  %v2743 = vlaneseq
  %v2744 = vshrl.u32 %v2743, 7
  %v2745 = vsub.s32 0, %v2744
  %v2746 = vrot.slane %v2741, %v2745
  %v2747 = vlaneseq
  %v2748 = vshrl.u32 %v2747, 7
  %v2749 = vsub.s32 1, %v2748
  %v2750 = vrot.slane %v2741, %v2749
  %v2785 = vunpack.c.l.b16 %v2708
  %v2786 = vunpack.c.h.b16 %v2708
  %v2787 = vunpack.c.l.b16 %v2709
  %v2788 = vunpack.c.h.b16 %v2709
  %v2789 = vunpack.c.l.b16 %v2710
  %v2790 = vunpack.c.h.b16 %v2710
  %v2791 = vunpack.c.l.b16 %v2711
  %v2792 = vunpack.c.h.b16 %v2711
  %v2793 = vunpack.c.l.b16 %v2712
  %v2794 = vunpack.c.h.b16 %v2712
  %v2795 = vunpack.c.l.b16 %v2713
  %v2796 = vunpack.c.h.b16 %v2713
  %v2797 = vunpack.c.l.b16 %v2714
  %v2798 = vunpack.c.h.b16 %v2714
  %v2799 = vunpack.c.l.b16 %v2715
  %v2800 = vunpack.c.h.b16 %v2715
  %v2801 = vunpack.c.l.b16 %v2716
  %v2802 = vunpack.c.h.b16 %v2716
  %v2803 = vunpack.c.l.b16 %v2717
  %v2804 = vunpack.c.h.b16 %v2717
  %v2805 = vunpack.c.l.b16 %v2718
  %v2806 = vunpack.c.h.b16 %v2718
  %v2807 = vunpack.c.l.b16 %v2719
  %v2808 = vunpack.c.h.b16 %v2719
  %v2809 = vunpack.c.l.b16 %v2720
  %v2810 = vunpack.c.h.b16 %v2720
  %v2811 = vunpack.c.l.b16 %v2721
  %v2812 = vunpack.c.h.b16 %v2721
  %v2813 = vunpack.c.l.b16 %v2722
  %v2814 = vunpack.c.h.b16 %v2722
  %v2815 = vunpack.c.l.b16 %v2723
  %v2816 = vunpack.c.h.b16 %v2723
  %v2817 = vunpack.c.l.b16 %v2724
  %v2818 = vunpack.c.h.b16 %v2724
  %v2819 = vunpack.c.l.b16 %v2725
  %v2820 = vunpack.c.h.b16 %v2725
  %v2821 = vunpack.c.l.b16 %v2726
  %v2822 = vunpack.c.h.b16 %v2726
  %v2823 = vunpack.c.l.b16 %v2727
  %v2824 = vunpack.c.h.b16 %v2727
  %v2825 = vunpack.c.l.b16 %v2728
  %v2826 = vunpack.c.h.b16 %v2728
  %v2827 = vunpack.c.l.b16 %v2729
  %v2828 = vunpack.c.h.b16 %v2729
  %v2829 = vunpack.c.l.b16 %v2730
  %v2830 = vunpack.c.h.b16 %v2730
  %v2831 = vunpack.c.l.b16 %v2731
  %v2832 = vunpack.c.h.b16 %v2731
  %v2833 = vunpack.c.l.b16 %v2732
  %v2834 = vunpack.c.h.b16 %v2732
  %v2835 = vunpack.c.l.b16 %v2733
  %v2836 = vunpack.c.h.b16 %v2733
  %v2837 = vunpack.c.l.b16 %v2734
  %v2838 = vunpack.c.h.b16 %v2734
  %v2839 = vunpack.c.l.b16 %v2735
  %v2840 = vunpack.c.h.b16 %v2735
  %v2841 = vunpack.c.l.b16 %v2736
  %v2842 = vunpack.c.h.b16 %v2736
  %v2843 = vunpack.c.l.b16 %v2737
  %v2844 = vunpack.c.h.b16 %v2737
  %v2845 = vunpack.c.l.b16 %v2738
  %v2846 = vunpack.c.h.b16 %v2738
  %v2847 = vunpack.c.l.b16 %v2739
  %v2848 = vunpack.c.h.b16 %v2739
  %v2849 = vpack.c.b16 %v2787, %v2785
  %v2850 = vpack.c.b16 %v2788, %v2786
  %v2851 = vpack.c.b16 %v2791, %v2789
  %v2852 = vpack.c.b16 %v2792, %v2790
  %v2853 = vpack.c.b16 %v2795, %v2793
  %v2854 = vpack.c.b16 %v2796, %v2794
  %v2855 = vpack.c.b16 %v2799, %v2797
  %v2856 = vpack.c.b16 %v2800, %v2798
  %v2857 = vpack.c.b16 %v2803, %v2801
  %v2858 = vpack.c.b16 %v2804, %v2802
  %v2859 = vpack.c.b16 %v2807, %v2805
  %v2860 = vpack.c.b16 %v2808, %v2806
  %v2861 = vpack.c.b16 %v2811, %v2809
  %v2862 = vpack.c.b16 %v2812, %v2810
  %v2863 = vpack.c.b16 %v2815, %v2813
  %v2864 = vpack.c.b16 %v2816, %v2814
  %v2865 = vpack.c.b16 %v2819, %v2817
  %v2866 = vpack.c.b16 %v2820, %v2818
  %v2867 = vpack.c.b16 %v2823, %v2821
  %v2868 = vpack.c.b16 %v2824, %v2822
  %v2869 = vpack.c.b16 %v2827, %v2825
  %v2870 = vpack.c.b16 %v2828, %v2826
  %v2871 = vpack.c.b16 %v2831, %v2829
  %v2872 = vpack.c.b16 %v2832, %v2830
  %v2873 = vpack.c.b16 %v2835, %v2833
  %v2874 = vpack.c.b16 %v2836, %v2834
  %v2875 = vpack.c.b16 %v2839, %v2837
  %v2876 = vpack.c.b16 %v2840, %v2838
  %v2877 = vpack.c.b16 %v2843, %v2841
  %v2878 = vpack.c.b16 %v2844, %v2842
  %v2879 = vpack.c.b16 %v2847, %v2845
  %v2880 = vpack.c.b16 %v2848, %v2846
  %2913 = vmatprep.subr.bf16.mxu0 %v2850
  %2914 = vmatpush1.bf16.msra.mxu0 %v2849
  %2915 = vmatprep.subr.bf16.mxu0 %v2852
  %2916 = vmatpush1.bf16.msra.mxu0 %v2851
  %2917 = vmatprep.subr.bf16.mxu0 %v2854
  %2918 = vmatpush1.bf16.msra.mxu0 %v2853
  %2919 = vmatprep.subr.bf16.mxu0 %v2856
  %2920 = vmatpush1.bf16.msra.mxu0 %v2855
  %2921 = vmatprep.subr.bf16.mxu0 %v2858
  %2922 = vmatpush1.bf16.msra.mxu0 %v2857
  %2923 = vmatprep.subr.bf16.mxu0 %v2860
  %2924 = vmatpush1.bf16.msra.mxu0 %v2859
  %2925 = vmatprep.subr.bf16.mxu0 %v2862
  %2926 = vmatpush1.bf16.msra.mxu0 %v2861
  %2927 = vmatprep.subr.bf16.mxu0 %v2864
  %2928 = vmatpush1.bf16.msra.mxu0 %v2863
  %2929 = vmatprep.subr.bf16.mxu0 %v2866
  %2930 = vmatpush1.bf16.msra.mxu0 %v2865
  %2931 = vmatprep.subr.bf16.mxu0 %v2868
  %2932 = vmatpush1.bf16.msra.mxu0 %v2867
  %2933 = vmatprep.subr.bf16.mxu0 %v2870
  %2934 = vmatpush1.bf16.msra.mxu0 %v2869
  %2935 = vmatprep.subr.bf16.mxu0 %v2872
  %2936 = vmatpush1.bf16.msra.mxu0 %v2871
  %2937 = vmatprep.subr.bf16.mxu0 %v2874
  %2938 = vmatpush1.bf16.msra.mxu0 %v2873
  %2939 = vmatprep.subr.bf16.mxu0 %v2876
  %2940 = vmatpush1.bf16.msra.mxu0 %v2875
  %2941 = vmatprep.subr.bf16.mxu0 %v2878
  %2942 = vmatpush1.bf16.msra.mxu0 %v2877
  %2943 = vmatprep.subr.bf16.mxu0 %v2880
  %2944 = vmatpush1.bf16.msra.mxu0 %v2879
  %2945 = vmatprep.mubr.bf16.mxu0 %v2706
  %2946 = vmatmul.mubr.bf16.gmra.mrb[0].mxu0 %v2705
  %v2947 = vpop.f32.mrb[0].mxu0
  %v2948 = vadd.f32 %v2746, %v2947
  %v2949 = vpop.f32.mrb[0].mxu0
  %v2950 = vadd.f32 %v2750, %v2949
  %v2951 = vpop.f32.mrb[0].mxu0
  %v2952 = vpop.f32.mrb[0].mxu0
  %2953 = vdwg.mxu0
  %s2954 = scalar_lea.vmem %s14, 2
  %v2955 = vld [vmem:[%s2954] sm:$0x3]
  %v2957 = vlaneseq
  %v2958 = vshrl.u32 %v2957, 7
  %v2959 = vsub.s32 0, %v2958
  %v2960 = vrot.slane %v2955, %v2959
  %v2961 = vlaneseq
  %v2962 = vshrl.u32 %v2961, 7
  %v2963 = vsub.s32 1, %v2962
  %v2964 = vrot.slane %v2955, %v2963
  %v2967 = vmul.f32 %v2948, %v2960
  %v2968 = vmul.f32 %v2950, %v2964
  %s2969 = scalar_lea.vmem %s15, 2
  %v2970 = vld [vmem:[%s2969] sm:$0x3]
  %v2972 = vlaneseq
  %v2973 = vshrl.u32 %v2972, 7
  %v2974 = vsub.s32 0, %v2973
  %v2975 = vrot.slane %v2970, %v2974
  %v2976 = vlaneseq
  %v2977 = vshrl.u32 %v2976, 7
  %v2978 = vsub.s32 1, %v2977
  %v2979 = vrot.slane %v2970, %v2978
  %v2982 = vadd.f32 %v2967, %v2975
  %v2983 = vadd.f32 %v2968, %v2979
  %v2984 = vmax.f32 %v2982, 0.0
  %v2985 = vmax.f32 %v2983, 0.0
  %v2986 = vpack.c.bf16 %v2984, %v2984
  %v2987 = vpack.c.bf16 %v2985, %v2985
  %v2988 = vld [vmem:[%s18] sm:$0xf]
  %v2989 = vld [vmem:[%s18 + $0x4] sm:$0xf]
  %v2990 = vld [vmem:[%s18 + $0x8] sm:$0xf]
  %v2991 = vld [vmem:[%s18 + $0xc] sm:$0xf]
  %v2992 = vld [vmem:[%s18 + $0x10] sm:$0xf]
  %v2993 = vld [vmem:[%s18 + $0x14] sm:$0xf]
  %v2994 = vld [vmem:[%s18 + $0x18] sm:$0xf]
  %v2995 = vld [vmem:[%s18 + $0x1c] sm:$0xf]
  %v2996 = vld [vmem:[%s18 + $0x20] sm:$0xf]
  %v2997 = vld [vmem:[%s18 + $0x24] sm:$0xf]
  %v2998 = vld [vmem:[%s18 + $0x28] sm:$0xf]
  %v2999 = vld [vmem:[%s18 + $0x2c] sm:$0xf]
  %v3000 = vld [vmem:[%s18 + $0x30] sm:$0xf]
  %v3001 = vld [vmem:[%s18 + $0x34] sm:$0xf]
  %v3002 = vld [vmem:[%s18 + $0x38] sm:$0xf]
  %v3003 = vld [vmem:[%s18 + $0x3c] sm:$0xf]
  %v3004 = vld [vmem:[%s18 + $0x40] sm:$0xf]
  %v3005 = vld [vmem:[%s18 + $0x44] sm:$0xf]
  %v3006 = vld [vmem:[%s18 + $0x48] sm:$0xf]
  %v3007 = vld [vmem:[%s18 + $0x4c] sm:$0xf]
  %v3008 = vld [vmem:[%s18 + $0x50] sm:$0xf]
  %v3009 = vld [vmem:[%s18 + $0x54] sm:$0xf]
  %v3010 = vld [vmem:[%s18 + $0x58] sm:$0xf]
  %v3011 = vld [vmem:[%s18 + $0x5c] sm:$0xf]
  %v3012 = vld [vmem:[%s18 + $0x60] sm:$0xf]
  %v3013 = vld [vmem:[%s18 + $0x64] sm:$0xf]
  %v3014 = vld [vmem:[%s18 + $0x68] sm:$0xf]
  %v3015 = vld [vmem:[%s18 + $0x6c] sm:$0xf]
  %v3016 = vld [vmem:[%s18 + $0x70] sm:$0xf]
  %v3017 = vld [vmem:[%s18 + $0x74] sm:$0xf]
  %v3018 = vld [vmem:[%s18 + $0x78] sm:$0xf]
  %v3019 = vld [vmem:[%s18 + $0x7c] sm:$0xf]
  %v3020 = vld [vmem:[%s19] sm:$0x1]
  %v3022 = vlaneseq
  %v3023 = vshrl.u32 %v3022, 7
  %v3024 = vsub.s32 0, %v3023
  %v3025 = vrot.slane %v3020, %v3024
  %v3059 = vunpack.c.l.b16 %v2988
  %v3060 = vunpack.c.l.b16 %v2989
  %v3061 = vunpack.c.l.b16 %v2990
  %v3062 = vunpack.c.l.b16 %v2991
  %v3063 = vunpack.c.l.b16 %v2992
  %v3064 = vunpack.c.l.b16 %v2993
  %v3065 = vunpack.c.l.b16 %v2994
  %v3066 = vunpack.c.l.b16 %v2995
  %v3067 = vunpack.c.l.b16 %v2996
  %v3068 = vunpack.c.l.b16 %v2997
  %v3069 = vunpack.c.l.b16 %v2998
  %v3070 = vunpack.c.l.b16 %v2999
  %v3071 = vunpack.c.l.b16 %v3000
  %v3072 = vunpack.c.l.b16 %v3001
  %v3073 = vunpack.c.l.b16 %v3002
  %v3074 = vunpack.c.l.b16 %v3003
  %v3075 = vunpack.c.l.b16 %v3004
  %v3076 = vunpack.c.l.b16 %v3005
  %v3077 = vunpack.c.l.b16 %v3006
  %v3078 = vunpack.c.l.b16 %v3007
  %v3079 = vunpack.c.l.b16 %v3008
  %v3080 = vunpack.c.l.b16 %v3009
  %v3081 = vunpack.c.l.b16 %v3010
  %v3082 = vunpack.c.l.b16 %v3011
  %v3083 = vunpack.c.l.b16 %v3012
  %v3084 = vunpack.c.l.b16 %v3013
  %v3085 = vunpack.c.l.b16 %v3014
  %v3086 = vunpack.c.l.b16 %v3015
  %v3087 = vunpack.c.l.b16 %v3016
  %v3088 = vunpack.c.l.b16 %v3017
  %v3089 = vunpack.c.l.b16 %v3018
  %v3090 = vunpack.c.l.b16 %v3019
  %v3091 = vpack.c.b16 %v3060, %v3059
  %v3092 = vpack.c.b16 %v3062, %v3061
  %v3093 = vpack.c.b16 %v3064, %v3063
  %v3094 = vpack.c.b16 %v3066, %v3065
  %v3095 = vpack.c.b16 %v3068, %v3067
  %v3096 = vpack.c.b16 %v3070, %v3069
  %v3097 = vpack.c.b16 %v3072, %v3071
  %v3098 = vpack.c.b16 %v3074, %v3073
  %v3099 = vpack.c.b16 %v3076, %v3075
  %v3100 = vpack.c.b16 %v3078, %v3077
  %v3101 = vpack.c.b16 %v3080, %v3079
  %v3102 = vpack.c.b16 %v3082, %v3081
  %v3103 = vpack.c.b16 %v3084, %v3083
  %v3104 = vpack.c.b16 %v3086, %v3085
  %v3105 = vpack.c.b16 %v3088, %v3087
  %v3106 = vpack.c.b16 %v3090, %v3089
  %3123 = vmatprep.subr.bf16.mxu0 0
  %3124 = vmatpush1.bf16.msra.mxu0 %v3091
  %3125 = vmatprep.subr.bf16.mxu0 0
  %3126 = vmatpush1.bf16.msra.mxu0 %v3092
  %3127 = vmatprep.subr.bf16.mxu0 0
  %3128 = vmatpush1.bf16.msra.mxu0 %v3093
  %3129 = vmatprep.subr.bf16.mxu0 0
  %3130 = vmatpush1.bf16.msra.mxu0 %v3094
  %3131 = vmatprep.subr.bf16.mxu0 0
  %3132 = vmatpush1.bf16.msra.mxu0 %v3095
  %3133 = vmatprep.subr.bf16.mxu0 0
  %3134 = vmatpush1.bf16.msra.mxu0 %v3096
  %3135 = vmatprep.subr.bf16.mxu0 0
  %3136 = vmatpush1.bf16.msra.mxu0 %v3097
  %3137 = vmatprep.subr.bf16.mxu0 0
  %3138 = vmatpush1.bf16.msra.mxu0 %v3098
  %3139 = vmatprep.subr.bf16.mxu0 0
  %3140 = vmatpush1.bf16.msra.mxu0 %v3099
  %3141 = vmatprep.subr.bf16.mxu0 0
  %3142 = vmatpush1.bf16.msra.mxu0 %v3100
  %3143 = vmatprep.subr.bf16.mxu0 0
  %3144 = vmatpush1.bf16.msra.mxu0 %v3101
  %3145 = vmatprep.subr.bf16.mxu0 0
  %3146 = vmatpush1.bf16.msra.mxu0 %v3102
  %3147 = vmatprep.subr.bf16.mxu0 0
  %3148 = vmatpush1.bf16.msra.mxu0 %v3103
  %3149 = vmatprep.subr.bf16.mxu0 0
  %3150 = vmatpush1.bf16.msra.mxu0 %v3104
  %3151 = vmatprep.subr.bf16.mxu0 0
  %3152 = vmatpush1.bf16.msra.mxu0 %v3105
  %3153 = vmatprep.subr.bf16.mxu0 0
  %3154 = vmatpush1.bf16.msra.mxu0 %v3106
  %3155 = vmatprep.mubr.bf16.mxu0 %v2987
  %3156 = vmatmul.mubr.bf16.gmra.mrb[0].mxu0 %v2986
  %v3157 = vpop.f32.mrb[0].mxu0
  %v3158 = vadd.f32 %v3025, %v3157
  %v3159 = vpop.f32.mrb[0].mxu0
  %v3160 = vpop.f32.mrb[0].mxu0
  %v3161 = vpop.f32.mrb[0].mxu0
  %3162 = vdwg.mxu0
  %3163 = vst [vmem:[%s22 + $0x4] sm:$0x3] %v3158
  %s3164 = scalar_lea.vmem %s6, 4
  %v3165 = vld [vmem:[%s3164] sm:$0x3]
  %v3167 = vlaneseq
  %v3168 = vshrl.u32 %v3167, 7
  %v3169 = vsub.s32 0, %v3168
  %v3170 = vrot.slane %v3165, %v3169
  %v3171 = vlaneseq
  %v3172 = vshrl.u32 %v3171, 7
  %v3173 = vsub.s32 1, %v3172
  %v3174 = vrot.slane %v3165, %v3173
  %v3177 = vmul.f32 %v1543, %v3170
  %v3178 = vmul.f32 %v1545, %v3174
  %s3179 = scalar_lea.vmem %s7, 4
  %v3180 = vld [vmem:[%s3179] sm:$0x3]
  %v3182 = vlaneseq
  %v3183 = vshrl.u32 %v3182, 7
  %v3184 = vsub.s32 0, %v3183
  %v3185 = vrot.slane %v3180, %v3184
  %v3186 = vlaneseq
  %v3187 = vshrl.u32 %v3186, 7
  %v3188 = vsub.s32 1, %v3187
  %v3189 = vrot.slane %v3180, %v3188
  %v3192 = vadd.f32 %v3177, %v3185
  %v3193 = vadd.f32 %v3178, %v3189
  %v3194 = vmax.f32 %v3192, 0.0
  %v3195 = vmax.f32 %v3193, 0.0
  %v3196 = vpack.c.bf16 %v3194, %v3194
  %v3197 = vpack.c.bf16 %v3195, %v3195
  %s3198 = scalar_lea.vmem %s8, 512
  %v3199 = vld [vmem:[%s3198] sm:$0xff]
  %v3200 = vld [vmem:[%s3198 + $0x8] sm:$0xff]
  %v3201 = vld [vmem:[%s3198 + $0x10] sm:$0xff]
  %v3202 = vld [vmem:[%s3198 + $0x18] sm:$0xff]
  %v3203 = vld [vmem:[%s3198 + $0x20] sm:$0xff]
  %v3204 = vld [vmem:[%s3198 + $0x28] sm:$0xff]
  %v3205 = vld [vmem:[%s3198 + $0x30] sm:$0xff]
  %v3206 = vld [vmem:[%s3198 + $0x38] sm:$0xff]
  %v3207 = vld [vmem:[%s3198 + $0x40] sm:$0xff]
  %v3208 = vld [vmem:[%s3198 + $0x48] sm:$0xff]
  %v3209 = vld [vmem:[%s3198 + $0x50] sm:$0xff]
  %v3210 = vld [vmem:[%s3198 + $0x58] sm:$0xff]
  %v3211 = vld [vmem:[%s3198 + $0x60] sm:$0xff]
  %v3212 = vld [vmem:[%s3198 + $0x68] sm:$0xff]
  %v3213 = vld [vmem:[%s3198 + $0x70] sm:$0xff]
  %v3214 = vld [vmem:[%s3198 + $0x78] sm:$0xff]
  %v3215 = vld [vmem:[%s3198 + $0x80] sm:$0xff]
  %v3216 = vld [vmem:[%s3198 + $0x88] sm:$0xff]
  %v3217 = vld [vmem:[%s3198 + $0x90] sm:$0xff]
  %v3218 = vld [vmem:[%s3198 + $0x98] sm:$0xff]
  %v3219 = vld [vmem:[%s3198 + $0xa0] sm:$0xff]
  %v3220 = vld [vmem:[%s3198 + $0xa8] sm:$0xff]
  %v3221 = vld [vmem:[%s3198 + $0xb0] sm:$0xff]
  %v3222 = vld [vmem:[%s3198 + $0xb8] sm:$0xff]
  %v3223 = vld [vmem:[%s3198 + $0xc0] sm:$0xff]
  %v3224 = vld [vmem:[%s3198 + $0xc8] sm:$0xff]
  %v3225 = vld [vmem:[%s3198 + $0xd0] sm:$0xff]
  %v3226 = vld [vmem:[%s3198 + $0xd8] sm:$0xff]
  %v3227 = vld [vmem:[%s3198 + $0xe0] sm:$0xff]
  %v3228 = vld [vmem:[%s3198 + $0xe8] sm:$0xff]
  %v3229 = vld [vmem:[%s3198 + $0xf0] sm:$0xff]
  %v3230 = vld [vmem:[%s3198 + $0xf8] sm:$0xff]
  %s3231 = scalar_lea.vmem %s9, 4
  %v3232 = vld [vmem:[%s3231] sm:$0x3]
  %v3234 = vlaneseq
  %v3235 = vshrl.u32 %v3234, 7
  %v3236 = vsub.s32 0, %v3235
  %v3237 = vrot.slane %v3232, %v3236
  %v3238 = vlaneseq
  %v3239 = vshrl.u32 %v3238, 7
  %v3240 = vsub.s32 1, %v3239
  %v3241 = vrot.slane %v3232, %v3240
  %v3276 = vunpack.c.l.b16 %v3199
  %v3277 = vunpack.c.h.b16 %v3199
  %v3278 = vunpack.c.l.b16 %v3200
  %v3279 = vunpack.c.h.b16 %v3200
  %v3280 = vunpack.c.l.b16 %v3201
  %v3281 = vunpack.c.h.b16 %v3201
  %v3282 = vunpack.c.l.b16 %v3202
  %v3283 = vunpack.c.h.b16 %v3202
  %v3284 = vunpack.c.l.b16 %v3203
  %v3285 = vunpack.c.h.b16 %v3203
  %v3286 = vunpack.c.l.b16 %v3204
  %v3287 = vunpack.c.h.b16 %v3204
  %v3288 = vunpack.c.l.b16 %v3205
  %v3289 = vunpack.c.h.b16 %v3205
  %v3290 = vunpack.c.l.b16 %v3206
  %v3291 = vunpack.c.h.b16 %v3206
  %v3292 = vunpack.c.l.b16 %v3207
  %v3293 = vunpack.c.h.b16 %v3207
  %v3294 = vunpack.c.l.b16 %v3208
  %v3295 = vunpack.c.h.b16 %v3208
  %v3296 = vunpack.c.l.b16 %v3209
  %v3297 = vunpack.c.h.b16 %v3209
  %v3298 = vunpack.c.l.b16 %v3210
  %v3299 = vunpack.c.h.b16 %v3210
  %v3300 = vunpack.c.l.b16 %v3211
  %v3301 = vunpack.c.h.b16 %v3211
  %v3302 = vunpack.c.l.b16 %v3212
  %v3303 = vunpack.c.h.b16 %v3212
  %v3304 = vunpack.c.l.b16 %v3213
  %v3305 = vunpack.c.h.b16 %v3213
  %v3306 = vunpack.c.l.b16 %v3214
  %v3307 = vunpack.c.h.b16 %v3214
  %v3308 = vunpack.c.l.b16 %v3215
  %v3309 = vunpack.c.h.b16 %v3215
  %v3310 = vunpack.c.l.b16 %v3216
  %v3311 = vunpack.c.h.b16 %v3216
  %v3312 = vunpack.c.l.b16 %v3217
  %v3313 = vunpack.c.h.b16 %v3217
  %v3314 = vunpack.c.l.b16 %v3218
  %v3315 = vunpack.c.h.b16 %v3218
  %v3316 = vunpack.c.l.b16 %v3219
  %v3317 = vunpack.c.h.b16 %v3219
  %v3318 = vunpack.c.l.b16 %v3220
  %v3319 = vunpack.c.h.b16 %v3220
  %v3320 = vunpack.c.l.b16 %v3221
  %v3321 = vunpack.c.h.b16 %v3221
  %v3322 = vunpack.c.l.b16 %v3222
  %v3323 = vunpack.c.h.b16 %v3222
  %v3324 = vunpack.c.l.b16 %v3223
  %v3325 = vunpack.c.h.b16 %v3223
  %v3326 = vunpack.c.l.b16 %v3224
  %v3327 = vunpack.c.h.b16 %v3224
  %v3328 = vunpack.c.l.b16 %v3225
  %v3329 = vunpack.c.h.b16 %v3225
  %v3330 = vunpack.c.l.b16 %v3226
  %v3331 = vunpack.c.h.b16 %v3226
  %v3332 = vunpack.c.l.b16 %v3227
  %v3333 = vunpack.c.h.b16 %v3227
  %v3334 = vunpack.c.l.b16 %v3228
  %v3335 = vunpack.c.h.b16 %v3228
  %v3336 = vunpack.c.l.b16 %v3229
  %v3337 = vunpack.c.h.b16 %v3229
  %v3338 = vunpack.c.l.b16 %v3230
  %v3339 = vunpack.c.h.b16 %v3230
  %v3340 = vpack.c.b16 %v3278, %v3276
  %v3341 = vpack.c.b16 %v3279, %v3277
  %v3342 = vpack.c.b16 %v3282, %v3280
  %v3343 = vpack.c.b16 %v3283, %v3281
  %v3344 = vpack.c.b16 %v3286, %v3284
  %v3345 = vpack.c.b16 %v3287, %v3285
  %v3346 = vpack.c.b16 %v3290, %v3288
  %v3347 = vpack.c.b16 %v3291, %v3289
  %v3348 = vpack.c.b16 %v3294, %v3292
  %v3349 = vpack.c.b16 %v3295, %v3293
  %v3350 = vpack.c.b16 %v3298, %v3296
  %v3351 = vpack.c.b16 %v3299, %v3297
  %v3352 = vpack.c.b16 %v3302, %v3300
  %v3353 = vpack.c.b16 %v3303, %v3301
  %v3354 = vpack.c.b16 %v3306, %v3304
  %v3355 = vpack.c.b16 %v3307, %v3305
  %v3356 = vpack.c.b16 %v3310, %v3308
  %v3357 = vpack.c.b16 %v3311, %v3309
  %v3358 = vpack.c.b16 %v3314, %v3312
  %v3359 = vpack.c.b16 %v3315, %v3313
  %v3360 = vpack.c.b16 %v3318, %v3316
  %v3361 = vpack.c.b16 %v3319, %v3317
  %v3362 = vpack.c.b16 %v3322, %v3320
  %v3363 = vpack.c.b16 %v3323, %v3321
  %v3364 = vpack.c.b16 %v3326, %v3324
  %v3365 = vpack.c.b16 %v3327, %v3325
  %v3366 = vpack.c.b16 %v3330, %v3328
  %v3367 = vpack.c.b16 %v3331, %v3329
  %v3368 = vpack.c.b16 %v3334, %v3332
  %v3369 = vpack.c.b16 %v3335, %v3333
  %v3370 = vpack.c.b16 %v3338, %v3336
  %v3371 = vpack.c.b16 %v3339, %v3337
  %3404 = vmatprep.subr.bf16.mxu0 %v3341
  %3405 = vmatpush1.bf16.msra.mxu0 %v3340
  %3406 = vmatprep.subr.bf16.mxu0 %v3343
  %3407 = vmatpush1.bf16.msra.mxu0 %v3342
  %3408 = vmatprep.subr.bf16.mxu0 %v3345
  %3409 = vmatpush1.bf16.msra.mxu0 %v3344
  %3410 = vmatprep.subr.bf16.mxu0 %v3347
  %3411 = vmatpush1.bf16.msra.mxu0 %v3346
  %3412 = vmatprep.subr.bf16.mxu0 %v3349
  %3413 = vmatpush1.bf16.msra.mxu0 %v3348
  %3414 = vmatprep.subr.bf16.mxu0 %v3351
  %3415 = vmatpush1.bf16.msra.mxu0 %v3350
  %3416 = vmatprep.subr.bf16.mxu0 %v3353
  %3417 = vmatpush1.bf16.msra.mxu0 %v3352
  %3418 = vmatprep.subr.bf16.mxu0 %v3355
  %3419 = vmatpush1.bf16.msra.mxu0 %v3354
  %3420 = vmatprep.subr.bf16.mxu0 %v3357
  %3421 = vmatpush1.bf16.msra.mxu0 %v3356
  %3422 = vmatprep.subr.bf16.mxu0 %v3359
  %3423 = vmatpush1.bf16.msra.mxu0 %v3358
  %3424 = vmatprep.subr.bf16.mxu0 %v3361
  %3425 = vmatpush1.bf16.msra.mxu0 %v3360
  %3426 = vmatprep.subr.bf16.mxu0 %v3363
  %3427 = vmatpush1.bf16.msra.mxu0 %v3362
  %3428 = vmatprep.subr.bf16.mxu0 %v3365
  %3429 = vmatpush1.bf16.msra.mxu0 %v3364
  %3430 = vmatprep.subr.bf16.mxu0 %v3367
  %3431 = vmatpush1.bf16.msra.mxu0 %v3366
  %3432 = vmatprep.subr.bf16.mxu0 %v3369
  %3433 = vmatpush1.bf16.msra.mxu0 %v3368
  %3434 = vmatprep.subr.bf16.mxu0 %v3371
  %3435 = vmatpush1.bf16.msra.mxu0 %v3370
  %3436 = vmatprep.mubr.bf16.mxu0 %v3197
  %3437 = vmatmul.mubr.bf16.gmra.mrb[0].mxu0 %v3196
  %v3438 = vpop.f32.mrb[0].mxu0
  %v3439 = vadd.f32 %v3237, %v3438
  %v3440 = vpop.f32.mrb[0].mxu0
  %v3441 = vadd.f32 %v3241, %v3440
  %v3442 = vpop.f32.mrb[0].mxu0
  %v3443 = vpop.f32.mrb[0].mxu0
  %3444 = vdwg.mxu0
  %s3445 = scalar_lea.vmem %s10, 4
  %v3446 = vld [vmem:[%s3445] sm:$0x3]
  %v3448 = vlaneseq
  %v3449 = vshrl.u32 %v3448, 7
  %v3450 = vsub.s32 0, %v3449
  %v3451 = vrot.slane %v3446, %v3450
  %v3452 = vlaneseq
  %v3453 = vshrl.u32 %v3452, 7
  %v3454 = vsub.s32 1, %v3453
  %v3455 = vrot.slane %v3446, %v3454
  %v3458 = vmul.f32 %v3439, %v3451
  %v3459 = vmul.f32 %v3441, %v3455
  %s3460 = scalar_lea.vmem %s11, 4
  %v3461 = vld [vmem:[%s3460] sm:$0x3]
  %v3463 = vlaneseq
  %v3464 = vshrl.u32 %v3463, 7
  %v3465 = vsub.s32 0, %v3464
  %v3466 = vrot.slane %v3461, %v3465
  %v3467 = vlaneseq
  %v3468 = vshrl.u32 %v3467, 7
  %v3469 = vsub.s32 1, %v3468
  %v3470 = vrot.slane %v3461, %v3469
  %v3473 = vadd.f32 %v3458, %v3466
  %v3474 = vadd.f32 %v3459, %v3470
  %v3475 = vmax.f32 %v3473, 0.0
  %v3476 = vmax.f32 %v3474, 0.0
  %v3477 = vpack.c.bf16 %v3475, %v3475
  %v3478 = vpack.c.bf16 %v3476, %v3476
  %s3479 = scalar_lea.vmem %s12, 512
  %v3480 = vld [vmem:[%s3479] sm:$0xff]
  %v3481 = vld [vmem:[%s3479 + $0x8] sm:$0xff]
  %v3482 = vld [vmem:[%s3479 + $0x10] sm:$0xff]
  %v3483 = vld [vmem:[%s3479 + $0x18] sm:$0xff]
  %v3484 = vld [vmem:[%s3479 + $0x20] sm:$0xff]
  %v3485 = vld [vmem:[%s3479 + $0x28] sm:$0xff]
  %v3486 = vld [vmem:[%s3479 + $0x30] sm:$0xff]
  %v3487 = vld [vmem:[%s3479 + $0x38] sm:$0xff]
  %v3488 = vld [vmem:[%s3479 + $0x40] sm:$0xff]
  %v3489 = vld [vmem:[%s3479 + $0x48] sm:$0xff]
  %v3490 = vld [vmem:[%s3479 + $0x50] sm:$0xff]
  %v3491 = vld [vmem:[%s3479 + $0x58] sm:$0xff]
  %v3492 = vld [vmem:[%s3479 + $0x60] sm:$0xff]
  %v3493 = vld [vmem:[%s3479 + $0x68] sm:$0xff]
  %v3494 = vld [vmem:[%s3479 + $0x70] sm:$0xff]
  %v3495 = vld [vmem:[%s3479 + $0x78] sm:$0xff]
  %v3496 = vld [vmem:[%s3479 + $0x80] sm:$0xff]
  %v3497 = vld [vmem:[%s3479 + $0x88] sm:$0xff]
  %v3498 = vld [vmem:[%s3479 + $0x90] sm:$0xff]
  %v3499 = vld [vmem:[%s3479 + $0x98] sm:$0xff]
  %v3500 = vld [vmem:[%s3479 + $0xa0] sm:$0xff]
  %v3501 = vld [vmem:[%s3479 + $0xa8] sm:$0xff]
  %v3502 = vld [vmem:[%s3479 + $0xb0] sm:$0xff]
  %v3503 = vld [vmem:[%s3479 + $0xb8] sm:$0xff]
  %v3504 = vld [vmem:[%s3479 + $0xc0] sm:$0xff]
  %v3505 = vld [vmem:[%s3479 + $0xc8] sm:$0xff]
  %v3506 = vld [vmem:[%s3479 + $0xd0] sm:$0xff]
  %v3507 = vld [vmem:[%s3479 + $0xd8] sm:$0xff]
  %v3508 = vld [vmem:[%s3479 + $0xe0] sm:$0xff]
  %v3509 = vld [vmem:[%s3479 + $0xe8] sm:$0xff]
  %v3510 = vld [vmem:[%s3479 + $0xf0] sm:$0xff]
  %v3511 = vld [vmem:[%s3479 + $0xf8] sm:$0xff]
  %s3512 = scalar_lea.vmem %s13, 4
  %v3513 = vld [vmem:[%s3512] sm:$0x3]
  %v3515 = vlaneseq
  %v3516 = vshrl.u32 %v3515, 7
  %v3517 = vsub.s32 0, %v3516
  %v3518 = vrot.slane %v3513, %v3517
  %v3519 = vlaneseq
  %v3520 = vshrl.u32 %v3519, 7
  %v3521 = vsub.s32 1, %v3520
  %v3522 = vrot.slane %v3513, %v3521
  %v3557 = vunpack.c.l.b16 %v3480
  %v3558 = vunpack.c.h.b16 %v3480
  %v3559 = vunpack.c.l.b16 %v3481
  %v3560 = vunpack.c.h.b16 %v3481
  %v3561 = vunpack.c.l.b16 %v3482
  %v3562 = vunpack.c.h.b16 %v3482
  %v3563 = vunpack.c.l.b16 %v3483
  %v3564 = vunpack.c.h.b16 %v3483
  %v3565 = vunpack.c.l.b16 %v3484
  %v3566 = vunpack.c.h.b16 %v3484
  %v3567 = vunpack.c.l.b16 %v3485
  %v3568 = vunpack.c.h.b16 %v3485
  %v3569 = vunpack.c.l.b16 %v3486
  %v3570 = vunpack.c.h.b16 %v3486
  %v3571 = vunpack.c.l.b16 %v3487
  %v3572 = vunpack.c.h.b16 %v3487
  %v3573 = vunpack.c.l.b16 %v3488
  %v3574 = vunpack.c.h.b16 %v3488
  %v3575 = vunpack.c.l.b16 %v3489
  %v3576 = vunpack.c.h.b16 %v3489
  %v3577 = vunpack.c.l.b16 %v3490
  %v3578 = vunpack.c.h.b16 %v3490
  %v3579 = vunpack.c.l.b16 %v3491
  %v3580 = vunpack.c.h.b16 %v3491
  %v3581 = vunpack.c.l.b16 %v3492
  %v3582 = vunpack.c.h.b16 %v3492
  %v3583 = vunpack.c.l.b16 %v3493
  %v3584 = vunpack.c.h.b16 %v3493
  %v3585 = vunpack.c.l.b16 %v3494
  %v3586 = vunpack.c.h.b16 %v3494
  %v3587 = vunpack.c.l.b16 %v3495
  %v3588 = vunpack.c.h.b16 %v3495
  %v3589 = vunpack.c.l.b16 %v3496
  %v3590 = vunpack.c.h.b16 %v3496
  %v3591 = vunpack.c.l.b16 %v3497
  %v3592 = vunpack.c.h.b16 %v3497
  %v3593 = vunpack.c.l.b16 %v3498
  %v3594 = vunpack.c.h.b16 %v3498
  %v3595 = vunpack.c.l.b16 %v3499
  %v3596 = vunpack.c.h.b16 %v3499
  %v3597 = vunpack.c.l.b16 %v3500
  %v3598 = vunpack.c.h.b16 %v3500
  %v3599 = vunpack.c.l.b16 %v3501
  %v3600 = vunpack.c.h.b16 %v3501
  %v3601 = vunpack.c.l.b16 %v3502
  %v3602 = vunpack.c.h.b16 %v3502
  %v3603 = vunpack.c.l.b16 %v3503
  %v3604 = vunpack.c.h.b16 %v3503
  %v3605 = vunpack.c.l.b16 %v3504
  %v3606 = vunpack.c.h.b16 %v3504
  %v3607 = vunpack.c.l.b16 %v3505
  %v3608 = vunpack.c.h.b16 %v3505
  %v3609 = vunpack.c.l.b16 %v3506
  %v3610 = vunpack.c.h.b16 %v3506
  %v3611 = vunpack.c.l.b16 %v3507
  %v3612 = vunpack.c.h.b16 %v3507
  %v3613 = vunpack.c.l.b16 %v3508
  %v3614 = vunpack.c.h.b16 %v3508
  %v3615 = vunpack.c.l.b16 %v3509
  %v3616 = vunpack.c.h.b16 %v3509
  %v3617 = vunpack.c.l.b16 %v3510
  %v3618 = vunpack.c.h.b16 %v3510
  %v3619 = vunpack.c.l.b16 %v3511
  %v3620 = vunpack.c.h.b16 %v3511
  %v3621 = vpack.c.b16 %v3559, %v3557
  %v3622 = vpack.c.b16 %v3560, %v3558
  %v3623 = vpack.c.b16 %v3563, %v3561
  %v3624 = vpack.c.b16 %v3564, %v3562
  %v3625 = vpack.c.b16 %v3567, %v3565
  %v3626 = vpack.c.b16 %v3568, %v3566
  %v3627 = vpack.c.b16 %v3571, %v3569
  %v3628 = vpack.c.b16 %v3572, %v3570
  %v3629 = vpack.c.b16 %v3575, %v3573
  %v3630 = vpack.c.b16 %v3576, %v3574
  %v3631 = vpack.c.b16 %v3579, %v3577
  %v3632 = vpack.c.b16 %v3580, %v3578
  %v3633 = vpack.c.b16 %v3583, %v3581
  %v3634 = vpack.c.b16 %v3584, %v3582
  %v3635 = vpack.c.b16 %v3587, %v3585
  %v3636 = vpack.c.b16 %v3588, %v3586
  %v3637 = vpack.c.b16 %v3591, %v3589
  %v3638 = vpack.c.b16 %v3592, %v3590
  %v3639 = vpack.c.b16 %v3595, %v3593
  %v3640 = vpack.c.b16 %v3596, %v3594
  %v3641 = vpack.c.b16 %v3599, %v3597
  %v3642 = vpack.c.b16 %v3600, %v3598
  %v3643 = vpack.c.b16 %v3603, %v3601
  %v3644 = vpack.c.b16 %v3604, %v3602
  %v3645 = vpack.c.b16 %v3607, %v3605
  %v3646 = vpack.c.b16 %v3608, %v3606
  %v3647 = vpack.c.b16 %v3611, %v3609
  %v3648 = vpack.c.b16 %v3612, %v3610
  %v3649 = vpack.c.b16 %v3615, %v3613
  %v3650 = vpack.c.b16 %v3616, %v3614
  %v3651 = vpack.c.b16 %v3619, %v3617
  %v3652 = vpack.c.b16 %v3620, %v3618
  %3685 = vmatprep.subr.bf16.mxu0 %v3622
  %3686 = vmatpush1.bf16.msra.mxu0 %v3621
  %3687 = vmatprep.subr.bf16.mxu0 %v3624
  %3688 = vmatpush1.bf16.msra.mxu0 %v3623
  %3689 = vmatprep.subr.bf16.mxu0 %v3626
  %3690 = vmatpush1.bf16.msra.mxu0 %v3625
  %3691 = vmatprep.subr.bf16.mxu0 %v3628
  %3692 = vmatpush1.bf16.msra.mxu0 %v3627
  %3693 = vmatprep.subr.bf16.mxu0 %v3630
  %3694 = vmatpush1.bf16.msra.mxu0 %v3629
  %3695 = vmatprep.subr.bf16.mxu0 %v3632
  %3696 = vmatpush1.bf16.msra.mxu0 %v3631
  %3697 = vmatprep.subr.bf16.mxu0 %v3634
  %3698 = vmatpush1.bf16.msra.mxu0 %v3633
  %3699 = vmatprep.subr.bf16.mxu0 %v3636
  %3700 = vmatpush1.bf16.msra.mxu0 %v3635
  %3701 = vmatprep.subr.bf16.mxu0 %v3638
  %3702 = vmatpush1.bf16.msra.mxu0 %v3637
  %3703 = vmatprep.subr.bf16.mxu0 %v3640
  %3704 = vmatpush1.bf16.msra.mxu0 %v3639
  %3705 = vmatprep.subr.bf16.mxu0 %v3642
  %3706 = vmatpush1.bf16.msra.mxu0 %v3641
  %3707 = vmatprep.subr.bf16.mxu0 %v3644
  %3708 = vmatpush1.bf16.msra.mxu0 %v3643
  %3709 = vmatprep.subr.bf16.mxu0 %v3646
  %3710 = vmatpush1.bf16.msra.mxu0 %v3645
  %3711 = vmatprep.subr.bf16.mxu0 %v3648
  %3712 = vmatpush1.bf16.msra.mxu0 %v3647
  %3713 = vmatprep.subr.bf16.mxu0 %v3650
  %3714 = vmatpush1.bf16.msra.mxu0 %v3649
  %3715 = vmatprep.subr.bf16.mxu0 %v3652
  %3716 = vmatpush1.bf16.msra.mxu0 %v3651
  %3717 = vmatprep.mubr.bf16.mxu0 %v3478
  %3718 = vmatmul.mubr.bf16.gmra.mrb[0].mxu0 %v3477
  %v3719 = vpop.f32.mrb[0].mxu0
  %v3720 = vadd.f32 %v3518, %v3719
  %v3721 = vpop.f32.mrb[0].mxu0
  %v3722 = vadd.f32 %v3522, %v3721
  %v3723 = vpop.f32.mrb[0].mxu0
  %v3724 = vpop.f32.mrb[0].mxu0
  %3725 = vdwg.mxu0
  %s3726 = scalar_lea.vmem %s14, 4
  %v3727 = vld [vmem:[%s3726] sm:$0x3]
  %v3729 = vlaneseq
  %v3730 = vshrl.u32 %v3729, 7
  %v3731 = vsub.s32 0, %v3730
  %v3732 = vrot.slane %v3727, %v3731
  %v3733 = vlaneseq
  %v3734 = vshrl.u32 %v3733, 7
  %v3735 = vsub.s32 1, %v3734
  %v3736 = vrot.slane %v3727, %v3735
  %v3739 = vmul.f32 %v3720, %v3732
  %v3740 = vmul.f32 %v3722, %v3736
  %s3741 = scalar_lea.vmem %s15, 4
  %v3742 = vld [vmem:[%s3741] sm:$0x3]
  %v3744 = vlaneseq
  %v3745 = vshrl.u32 %v3744, 7
  %v3746 = vsub.s32 0, %v3745
  %v3747 = vrot.slane %v3742, %v3746
  %v3748 = vlaneseq
  %v3749 = vshrl.u32 %v3748, 7
  %v3750 = vsub.s32 1, %v3749
  %v3751 = vrot.slane %v3742, %v3750
  %v3754 = vadd.f32 %v3739, %v3747
  %v3755 = vadd.f32 %v3740, %v3751
  %v3756 = vmax.f32 %v3754, 0.0
  %v3757 = vmax.f32 %v3755, 0.0
  %v3758 = vpack.c.bf16 %v3756, %v3756
  %v3759 = vpack.c.bf16 %v3757, %v3757
  %v3760 = vld [vmem:[%s20] sm:$0xf]
  %v3761 = vld [vmem:[%s20 + $0x4] sm:$0xf]
  %v3762 = vld [vmem:[%s20 + $0x8] sm:$0xf]
  %v3763 = vld [vmem:[%s20 + $0xc] sm:$0xf]
  %v3764 = vld [vmem:[%s20 + $0x10] sm:$0xf]
  %v3765 = vld [vmem:[%s20 + $0x14] sm:$0xf]
  %v3766 = vld [vmem:[%s20 + $0x18] sm:$0xf]
  %v3767 = vld [vmem:[%s20 + $0x1c] sm:$0xf]
  %v3768 = vld [vmem:[%s20 + $0x20] sm:$0xf]
  %v3769 = vld [vmem:[%s20 + $0x24] sm:$0xf]
  %v3770 = vld [vmem:[%s20 + $0x28] sm:$0xf]
  %v3771 = vld [vmem:[%s20 + $0x2c] sm:$0xf]
  %v3772 = vld [vmem:[%s20 + $0x30] sm:$0xf]
  %v3773 = vld [vmem:[%s20 + $0x34] sm:$0xf]
  %v3774 = vld [vmem:[%s20 + $0x38] sm:$0xf]
  %v3775 = vld [vmem:[%s20 + $0x3c] sm:$0xf]
  %v3776 = vld [vmem:[%s20 + $0x40] sm:$0xf]
  %v3777 = vld [vmem:[%s20 + $0x44] sm:$0xf]
  %v3778 = vld [vmem:[%s20 + $0x48] sm:$0xf]
  %v3779 = vld [vmem:[%s20 + $0x4c] sm:$0xf]
  %v3780 = vld [vmem:[%s20 + $0x50] sm:$0xf]
  %v3781 = vld [vmem:[%s20 + $0x54] sm:$0xf]
  %v3782 = vld [vmem:[%s20 + $0x58] sm:$0xf]
  %v3783 = vld [vmem:[%s20 + $0x5c] sm:$0xf]
  %v3784 = vld [vmem:[%s20 + $0x60] sm:$0xf]
  %v3785 = vld [vmem:[%s20 + $0x64] sm:$0xf]
  %v3786 = vld [vmem:[%s20 + $0x68] sm:$0xf]
  %v3787 = vld [vmem:[%s20 + $0x6c] sm:$0xf]
  %v3788 = vld [vmem:[%s20 + $0x70] sm:$0xf]
  %v3789 = vld [vmem:[%s20 + $0x74] sm:$0xf]
  %v3790 = vld [vmem:[%s20 + $0x78] sm:$0xf]
  %v3791 = vld [vmem:[%s20 + $0x7c] sm:$0xf]
  %v3792 = vld [vmem:[%s21] sm:$0x1]
  %v3794 = vlaneseq
  %v3795 = vshrl.u32 %v3794, 7
  %v3796 = vsub.s32 0, %v3795
  %v3797 = vrot.slane %v3792, %v3796
  %v3831 = vunpack.c.l.b16 %v3760
  %v3832 = vunpack.c.l.b16 %v3761
  %v3833 = vunpack.c.l.b16 %v3762
  %v3834 = vunpack.c.l.b16 %v3763
  %v3835 = vunpack.c.l.b16 %v3764
  %v3836 = vunpack.c.l.b16 %v3765
  %v3837 = vunpack.c.l.b16 %v3766
  %v3838 = vunpack.c.l.b16 %v3767
  %v3839 = vunpack.c.l.b16 %v3768
  %v3840 = vunpack.c.l.b16 %v3769
  %v3841 = vunpack.c.l.b16 %v3770
  %v3842 = vunpack.c.l.b16 %v3771
  %v3843 = vunpack.c.l.b16 %v3772
  %v3844 = vunpack.c.l.b16 %v3773
  %v3845 = vunpack.c.l.b16 %v3774
  %v3846 = vunpack.c.l.b16 %v3775
  %v3847 = vunpack.c.l.b16 %v3776
  %v3848 = vunpack.c.l.b16 %v3777
  %v3849 = vunpack.c.l.b16 %v3778
  %v3850 = vunpack.c.l.b16 %v3779
  %v3851 = vunpack.c.l.b16 %v3780
  %v3852 = vunpack.c.l.b16 %v3781
  %v3853 = vunpack.c.l.b16 %v3782
  %v3854 = vunpack.c.l.b16 %v3783
  %v3855 = vunpack.c.l.b16 %v3784
  %v3856 = vunpack.c.l.b16 %v3785
  %v3857 = vunpack.c.l.b16 %v3786
  %v3858 = vunpack.c.l.b16 %v3787
  %v3859 = vunpack.c.l.b16 %v3788
  %v3860 = vunpack.c.l.b16 %v3789
  %v3861 = vunpack.c.l.b16 %v3790
  %v3862 = vunpack.c.l.b16 %v3791
  %v3863 = vpack.c.b16 %v3832, %v3831
  %v3864 = vpack.c.b16 %v3834, %v3833
  %v3865 = vpack.c.b16 %v3836, %v3835
  %v3866 = vpack.c.b16 %v3838, %v3837
  %v3867 = vpack.c.b16 %v3840, %v3839
  %v3868 = vpack.c.b16 %v3842, %v3841
  %v3869 = vpack.c.b16 %v3844, %v3843
  %v3870 = vpack.c.b16 %v3846, %v3845
  %v3871 = vpack.c.b16 %v3848, %v3847
  %v3872 = vpack.c.b16 %v3850, %v3849
  %v3873 = vpack.c.b16 %v3852, %v3851
  %v3874 = vpack.c.b16 %v3854, %v3853
  %v3875 = vpack.c.b16 %v3856, %v3855
  %v3876 = vpack.c.b16 %v3858, %v3857
  %v3877 = vpack.c.b16 %v3860, %v3859
  %v3878 = vpack.c.b16 %v3862, %v3861
  %3895 = vmatprep.subr.bf16.mxu0 0
  %3896 = vmatpush1.bf16.msra.mxu0 %v3863
  %3897 = vmatprep.subr.bf16.mxu0 0
  %3898 = vmatpush1.bf16.msra.mxu0 %v3864
  %3899 = vmatprep.subr.bf16.mxu0 0
  %3900 = vmatpush1.bf16.msra.mxu0 %v3865
  %3901 = vmatprep.subr.bf16.mxu0 0
  %3902 = vmatpush1.bf16.msra.mxu0 %v3866
  %3903 = vmatprep.subr.bf16.mxu0 0
  %3904 = vmatpush1.bf16.msra.mxu0 %v3867
  %3905 = vmatprep.subr.bf16.mxu0 0
  %3906 = vmatpush1.bf16.msra.mxu0 %v3868
  %3907 = vmatprep.subr.bf16.mxu0 0
  %3908 = vmatpush1.bf16.msra.mxu0 %v3869
  %3909 = vmatprep.subr.bf16.mxu0 0
  %3910 = vmatpush1.bf16.msra.mxu0 %v3870
  %3911 = vmatprep.subr.bf16.mxu0 0
  %3912 = vmatpush1.bf16.msra.mxu0 %v3871
  %3913 = vmatprep.subr.bf16.mxu0 0
  %3914 = vmatpush1.bf16.msra.mxu0 %v3872
  %3915 = vmatprep.subr.bf16.mxu0 0
  %3916 = vmatpush1.bf16.msra.mxu0 %v3873
  %3917 = vmatprep.subr.bf16.mxu0 0
  %3918 = vmatpush1.bf16.msra.mxu0 %v3874
  %3919 = vmatprep.subr.bf16.mxu0 0
  %3920 = vmatpush1.bf16.msra.mxu0 %v3875
  %3921 = vmatprep.subr.bf16.mxu0 0
  %3922 = vmatpush1.bf16.msra.mxu0 %v3876
  %3923 = vmatprep.subr.bf16.mxu0 0
  %3924 = vmatpush1.bf16.msra.mxu0 %v3877
  %3925 = vmatprep.subr.bf16.mxu0 0
  %3926 = vmatpush1.bf16.msra.mxu0 %v3878
  %3927 = vmatprep.mubr.bf16.mxu0 %v3759
  %3928 = vmatmul.mubr.bf16.gmra.mrb[0].mxu0 %v3758
  %v3929 = vpop.f32.mrb[0].mxu0
  %v3930 = vadd.f32 %v3797, %v3929
  %v3931 = vpop.f32.mrb[0].mxu0
  %v3932 = vpop.f32.mrb[0].mxu0
  %v3933 = vpop.f32.mrb[0].mxu0
  %3934 = vdwg.mxu0
  %3935 = vst [vmem:[%s22 + $0x6] sm:$0x3] %v3930
  // Predicated region
  $region90: #{bengali_forward.1} parent=0 // pred_check
    _
  $region91: #{bengali_forward.1} parent=0 // pred_check_branch
    %3937 = sbr.rel (0) target = $region93
  $region92: #{bengali_forward.1} parent=0 // pred_region
    _
  $region93: #{bengali_forward.1} parent=0 // pred_fallthru
    _
  // Predicated region
  $region94: #{bengali_forward.1} parent=0 // pred_check
    _
  $region95: #{bengali_forward.1} parent=0 // pred_check_branch
    %3939 = sbr.rel (0) target = $region97
  $region96: #{bengali_forward.1} parent=0 // pred_region
    _
  $region97: #{bengali_forward.1} parent=0 // pred_fallthru
    _

</llo_original>
